<compile_context>
chip_gen: v7x
topology: tpu7x:2x2x1
jax: 0.10.0
libtpu: 0.0.40
codegen_flags: <defaults>
</compile_context>

<pallas_src>
import jax
import jax.numpy as jnp
from jax.experimental import pallas as pl
from jax.experimental.pallas import tpu as pltpu

_VMEM = pl.BlockSpec(memory_space=pltpu.MemorySpace.VMEM)
_INT_MIN = -2147483648
_MASK31 = 0x7FFFFFFF


# --------------------------------------------------------------------------
# Order-statistic helpers (exact, sort-free, threshold-compare radix walk)
# --------------------------------------------------------------------------
def _signed_key(x):
    """f32 -> int32 key that is monotone under *signed* integer comparison."""
    b = pltpu.bitcast(x, jnp.int32)
    return jnp.where(b < 0, b ^ jnp.int32(_MASK31), b)


def _key_to_f32(s):
    """Inverse of _signed_key for a (1, 1) int32 key."""
    bits = jnp.where(s >= 0, s, s ^ jnp.int32(_MASK31))
    return pltpu.bitcast(bits, jnp.float32)


# --------------------------------------------------------------------------
# Kernel A: robust 1%/99% normalization stats + trimmed-MAE data term
# --------------------------------------------------------------------------
def _data_loss_kernel(p_ref, t_ref, m_ref, loss_ref, scal_ref):
    p = p_ref[...]
    t = t_ref[...]
    valid = m_ref[...] != 0

    # ---- ranks computed in-kernel (no extra XLA pass over the mask) -------
    nv = jnp.reshape(jnp.sum(valid.astype(jnp.int32)), (1, 1))
    nv_f = nv.astype(jnp.float32)

    def _floordiv(c):
        # exact floor(nv / c) for nv < 2^24: f32 multiply + integer fix-up.
        q = (nv_f * (1.0 / c)).astype(jnp.int32)
        q = q + jnp.where((q + 1) * c <= nv, 1, 0)
        q = q - jnp.where(q * c > nv, 1, 0)
        return q

    q100 = _floordiv(100)
    q5 = _floordiv(5)
    r_lo = q100                                           # int(0.01 * n)
    r_hi = nv - q100 - jnp.where(q100 * 100 < nv, 1, 0)   # int(0.99 * n)
    k_keep = nv - q5 - jnp.where(q5 * 5 < nv, 1, 0)       # int(0.8  * n)

    # ---- biased keys, computed once at load --------------------------------
    skp = _signed_key(p)
    skt = _signed_key(t)

    imin = jnp.full((1, 1), _INT_MIN, jnp.int32)
    one = jnp.ones((1, 1), jnp.int32)

    def _count_below(keys, thresh):
        hit = valid & (keys < thresh)
        return jnp.reshape(jnp.sum(hit.astype(jnp.int32)), (1, 1))

    # Fused 4-way selection: greedy MSB-down threshold walk.  The final prefix
    # equals the signed key of the rank-r smallest valid element.
    def _stats_body(_, carry):
        bit, tpl, tph, ttl, tth = carry
        cpl, cph, ctl, cth = tpl ^ bit, tph ^ bit, ttl ^ bit, tth ^ bit
        tpl = jnp.where(_count_below(skp, cpl) <= r_lo, cpl, tpl)
        tph = jnp.where(_count_below(skp, cph) <= r_hi, cph, tph)
        ttl = jnp.where(_count_below(skt, ctl) <= r_lo, ctl, ttl)
        tth = jnp.where(_count_below(skt, cth) <= r_hi, cth, tth)
        return (jax.lax.shift_right_logical(bit, one), tpl, tph, ttl, tth)

    _, kpl, kph, ktl, kth = jax.lax.fori_loop(
        0, 32, _stats_body, (imin, imin, imin, imin, imin))
    pmin, pmax = _key_to_f32(kpl), _key_to_f32(kph)
    tmin, tmax = _key_to_f32(ktl), _key_to_f32(kth)

    # ---- normalized residuals (hoisted scalar reciprocals) ------------------
    inv_p = 1.0 / (pmax - pmin + 1e-8)
    inv_t = 1.0 / (tmax - tmin + 1e-8)
    pn = jnp.clip((p - pmin) * inv_p, 0.0, 1.0)
    tn = jnp.clip((t - tmin) * inv_t, 0.0, 1.0)
    res = jnp.abs(pn - tn)

    # ---- trim threshold: res >= 0 so raw IEEE bits are already monotone ----
    r_keep = k_keep - 1
    bit30 = jnp.full((1, 1), 1 << 30, jnp.int32)

    def _tau_body(_, carry):
        bit, tk = carry
        rbits = pltpu.bitcast(res, jnp.int32)
        cand = tk ^ bit
        tk = jnp.where(_count_below(rbits, cand) <= r_keep, cand, tk)
        return (jax.lax.shift_right_logical(bit, one), tk)

    _, tau_key = jax.lax.fori_loop(
        0, 31, _tau_body, (bit30, jnp.zeros((1, 1), jnp.int32)))
    tau = pltpu.bitcast(tau_key, jnp.float32)

    # trimmed sum of the k smallest residuals (tie handling at the boundary)
    below = valid & (res < tau)
    cnt_lt = jnp.reshape(jnp.sum(below.astype(jnp.float32)), (1, 1))
    sum_lt = jnp.reshape(jnp.sum(jnp.where(below, res, 0.0)), (1, 1))
    k_f = k_keep.astype(jnp.float32)
    trimmed = sum_lt + jnp.maximum(k_f - cnt_lt, 0.0) * tau

    ok = (nv > 0) & (k_keep > 0)
    denom = 2.0 * jnp.maximum(nv, 1).astype(jnp.float32)
    loss_ref[...] = jnp.where(ok, trimmed / denom, 0.0)

    # pack the normalization scalars + has-valid flag for the grad kernel
    lane = jax.lax.broadcasted_iota(jnp.int32, (1, 8), 1)
    hv = (nv > 0).astype(jnp.float32)
    scal_ref[...] = (jnp.where(lane == 0, pmin, 0.0)
                     + jnp.where(lane == 1, pmax, 0.0)
                     + jnp.where(lane == 2, tmin, 0.0)
                     + jnp.where(lane == 3, tmax, 0.0)
                     + jnp.where(lane == 4, hv, 0.0))


# --------------------------------------------------------------------------
# Kernel B: multi-scale gradient regularizer, gridded (parallel) over batch.
# True per-scale decimation via exact 0/1 selection matmuls on the idle MXU.
# --------------------------------------------------------------------------
def _make_grad_kernel(H, W, scales):
    def kernel(scal_ref, p_ref, t_ref, m_ref, out_ref):
        pmin = scal_ref[:, 0:1]
        pmax = scal_ref[:, 1:2]
        tmin = scal_ref[:, 2:3]
        tmax = scal_ref[:, 3:4]
        hv = scal_ref[:, 4:5] > 0.5          # no-valid-pixel fallback gate

        p = p_ref[...].reshape(H, W)
        t = t_ref[...].reshape(H, W)
        m = (m_ref[...].reshape(H, W) != 0).astype(jnp.float32)

        inv_p = 1.0 / (pmax - pmin + 1e-8)
        inv_t = 1.0 / (tmax - tmin + 1e-8)
        pn = jnp.where(hv, jnp.clip((p - pmin) * inv_p, 0.0, 1.0), p)
        tn = jnp.where(hv, jnp.clip((t - tmin) * inv_t, 0.0, 1.0), t)
        d = m * (pn - tn)

        lane = jax.lax.broadcasted_iota(jnp.int32, (1, 1, 2 * scales), 2)
        acc = jnp.zeros((1, 1, 2 * scales), jnp.float32)

        d_s, m_s = d, m
        Hs, Ws = H, W
        for s in range(scales):
            if Ws > 1:
                dx = d_s[:, 1:] - d_s[:, :-1]
                mx = m_s[:, 1:] * m_s[:, :-1]
                gx = jnp.sum(jnp.abs(dx) * mx)
            else:
                gx = jnp.zeros((), jnp.float32)
            if Hs > 1:
                dy = d_s[1:, :] - d_s[:-1, :]
                my = m_s[1:, :] * m_s[:-1, :]
                gy = jnp.sum(jnp.abs(dy) * my)
            else:
                gy = jnp.zeros((), jnp.float32)

            img_loss = jnp.reshape(gx + gy, (1, 1, 1))
            m_count = jnp.reshape(jnp.sum(m_s), (1, 1, 1))
            acc = (acc
                   + jnp.where(lane == s, img_loss, 0.0)
                   + jnp.where(lane == scales + s, m_count, 0.0))

            if s + 1 < scales:
                Hn, Wn = (Hs + 1) // 2, (Ws + 1) // 2
                # 0/1 selection matrices: keep every other row/column (exact).
                cj = jax.lax.broadcasted_iota(jnp.int32, (Ws, Wn), 0)
                ck = jax.lax.broadcasted_iota(jnp.int32, (Ws, Wn), 1)
                csel = (cj == 2 * ck).astype(jnp.float32)
                rk = jax.lax.broadcasted_iota(jnp.int32, (Hn, Hs), 0)
                ri = jax.lax.broadcasted_iota(jnp.int32, (Hn, Hs), 1)
                rsel = (ri == 2 * rk).astype(jnp.float32)
                d_s = jnp.dot(rsel,
                              jnp.dot(d_s, csel,
                                      preferred_element_type=jnp.float32),
                              preferred_element_type=jnp.float32)
                m_s = jnp.dot(rsel,
                              jnp.dot(m_s, csel,
                                      preferred_element_type=jnp.float32),
                              preferred_element_type=jnp.float32)
                Hs, Ws = Hn, Wn

        out_ref[...] = acc
    return kernel


# --------------------------------------------------------------------------
# Generation-aware VMEM limits
# --------------------------------------------------------------------------
def _vmem_limits(n_px_data, n_px_grad):
    cap = 64 * 1024 * 1024
    try:
        info = pltpu.get_tpu_info()
        cap = int(getattr(info, "vmem_capacity_bytes", cap) or cap)
    except Exception:
        pass
    ceiling = cap - 8 * 1024 * 1024
    data_limit = int(min(ceiling, max(32 << 20, n_px_data * 32 + (4 << 20))))
    grad_limit = int(min(ceiling, max(16 << 20, n_px_grad * 48 + (4 << 20))))
    return data_limit, grad_limit


# --------------------------------------------------------------------------
# Full TrimmedProcrustesLoss forward (alpha=0.5, scales=4, batch-based)
# --------------------------------------------------------------------------
def trimmed_procrustes_loss(prediction, target, mask, alpha=0.5, scales=4):
    prediction = prediction.astype(jnp.float32)
    target = target.astype(jnp.float32)
    B, H, W = prediction.shape
    m_i8 = (mask != 0).astype(jnp.int8)

    data_limit, grad_limit = _vmem_limits(B * H * W, H * W)

    # ---- data term: robust stats + trimmed MAE in one sort-free kernel ----
    data_loss, scal8 = pl.pallas_call(
        _data_loss_kernel,
        out_shape=(jax.ShapeDtypeStruct((1, 1), jnp.float32),
                   jax.ShapeDtypeStruct((1, 8), jnp.float32)),
        in_specs=[_VMEM, _VMEM, _VMEM],
        out_specs=(_VMEM, _VMEM),
        compiler_params=pltpu.CompilerParams(vmem_limit_bytes=data_limit),
    )(prediction, target, m_i8)

    # ---- multi-scale gradient regularizer: one fused, pipelined kernel ----
    nout = 2 * scales
    grad_out = pl.pallas_call(
        _make_grad_kernel(H, W, scales),
        grid=(B,),
        out_shape=jax.ShapeDtypeStruct((B, 1, nout), jnp.float32),
        in_specs=[pl.BlockSpec((1, 8), lambda b: (0, 0)),
                  pl.BlockSpec((1, H, W), lambda b: (b, 0, 0)),
                  pl.BlockSpec((1, H, W), lambda b: (b, 0, 0)),
                  pl.BlockSpec((1, H, W), lambda b: (b, 0, 0))],
        out_specs=pl.BlockSpec((1, 1, nout), lambda b: (b, 0, 0)),
        compiler_params=pltpu.CompilerParams(
            dimension_semantics=("parallel",),
            vmem_limit_bytes=grad_limit),
    )(scal8, prediction, target, m_i8)

    # Tiny per-scale batch-based reduction over (B, 2*scales) scalars (XLA).
    per_img = grad_out[:, 0, :]
    loss_bs = per_img[:, :scales]          # per-image, per-scale image_loss
    m_bs = per_img[:, scales:]             # per-image, per-scale valid count M
    validb = m_bs > 0.0
    num = jnp.sum(jnp.where(validb, loss_bs, 0.0), axis=0)
    den = jnp.sum(jnp.where(validb, m_bs, 0.0), axis=0)
    reg = jnp.sum(jnp.where(den > 0.0, num / jnp.maximum(den, 1e-30), 0.0))

    total = data_loss[0, 0]
    if alpha > 0:
        total = total + alpha * reg
    return total


if __name__ == "__main__":
    key = jax.random.PRNGKey(0)
    kp, kt, km = jax.random.split(key, 3)
    B, H, W = 2, 16, 16
    prediction = jax.random.normal(kp, (B, H, W), dtype=jnp.float32)
    target = jax.random.normal(kt, (B, H, W), dtype=jnp.float32)
    mask = jax.random.uniform(km, (B, H, W)) > 0.25   # bool mask, mostly valid

    loss_fn = jax.jit(trimmed_procrustes_loss)
    loss = loss_fn(prediction, target, mask)
    jax.block_until_ready(loss)
    print("KERNEL_OK")
</pallas_src>

<mosaic_0001>
module attributes {stable_mosaic.version = 11 : i64} {
  func.func @_data_loss_kernel(%arg0: memref<2x16x16xf32, #tpu.memory_space<vmem>>, %arg1: memref<2x16x16xf32, #tpu.memory_space<vmem>>, %arg2: memref<2x16x16xi8, #tpu.memory_space<vmem>>, %arg3: memref<1x1xf32, #tpu.memory_space<vmem>>, %arg4: memref<1x8xf32, #tpu.memory_space<vmem>>) attributes {dimension_semantics = [], scalar_prefetch = 0 : i64, scratch_operands = 0 : i64, tpu.core_type = #tpu.core_type<tc>} {
    %c0 = arith.constant 0 : index
    %c0_0 = arith.constant 0 : index
    %c0_1 = arith.constant 0 : index
    %0 = vector.load %arg0[%c0, %c0_0, %c0_1] : memref<2x16x16xf32, #tpu.memory_space<vmem>>, vector<2x16x16xf32>
    %c0_2 = arith.constant 0 : index
    %c0_3 = arith.constant 0 : index
    %c0_4 = arith.constant 0 : index
    %1 = vector.load %arg1[%c0_2, %c0_3, %c0_4] : memref<2x16x16xf32, #tpu.memory_space<vmem>>, vector<2x16x16xf32>
    %c0_5 = arith.constant 0 : index
    %c0_6 = arith.constant 0 : index
    %c0_7 = arith.constant 0 : index
    %2 = vector.load %arg2[%c0_5, %c0_6, %c0_7] : memref<2x16x16xi8, #tpu.memory_space<vmem>>, vector<2x16x16xi8>
    %c0_i8 = arith.constant 0 : i8
    %3 = vector.broadcast %c0_i8 : i8 to vector<2x16x16xi8>
    %4 = arith.cmpi ne, %2, %3 : vector<2x16x16xi8>
    %5 = arith.extui %4 : vector<2x16x16xi1> to vector<2x16x16xi32>
    %6 = vector.shape_cast %5 : vector<2x16x16xi32> to vector<1x2x16x16xi32>
    %cst = arith.constant dense<0> : vector<1xi32>
    %7 = vector.multi_reduction <add>, %6, %cst [1, 2, 3] : vector<1x2x16x16xi32> to vector<1xi32>
    %8 = vector.shape_cast %7 : vector<1xi32> to vector<1x1x1x1xi32>
    %9 = vector.extract %8[0, 0, 0, 0] : i32 from vector<1x1x1x1xi32>
    %10 = vector.broadcast %9 : i32 to vector<1x1xi32>
    %11 = arith.sitofp %10 : vector<1x1xi32> to vector<1x1xf32>
    %cst_8 = arith.constant 0.00999999977 : f32
    %12 = vector.broadcast %cst_8 : f32 to vector<1x1xf32>
    %13 = arith.mulf %11, %12 : vector<1x1xf32>
    %14 = arith.fptosi %13 : vector<1x1xf32> to vector<1x1xi32>
    %c1_i32 = arith.constant 1 : i32
    %15 = vector.broadcast %c1_i32 : i32 to vector<1x1xi32>
    %16 = arith.addi %14, %15 : vector<1x1xi32>
    %c100_i32 = arith.constant 100 : i32
    %17 = vector.broadcast %c100_i32 : i32 to vector<1x1xi32>
    %18 = arith.muli %16, %17 : vector<1x1xi32>
    %19 = arith.cmpi sle, %18, %10 : vector<1x1xi32>
    %c1_i32_9 = arith.constant 1 : i32
    %c0_i32 = arith.constant 0 : i32
    %20 = vector.broadcast %c1_i32_9 : i32 to vector<1x1xi32>
    %21 = vector.broadcast %c0_i32 : i32 to vector<1x1xi32>
    %22 = arith.select %19, %20, %21 : vector<1x1xi1>, vector<1x1xi32>
    %23 = arith.addi %14, %22 : vector<1x1xi32>
    %c100_i32_10 = arith.constant 100 : i32
    %24 = vector.broadcast %c100_i32_10 : i32 to vector<1x1xi32>
    %25 = arith.muli %23, %24 : vector<1x1xi32>
    %26 = arith.cmpi sgt, %25, %10 : vector<1x1xi32>
    %c1_i32_11 = arith.constant 1 : i32
    %c0_i32_12 = arith.constant 0 : i32
    %27 = vector.broadcast %c1_i32_11 : i32 to vector<1x1xi32>
    %28 = vector.broadcast %c0_i32_12 : i32 to vector<1x1xi32>
    %29 = arith.select %26, %27, %28 : vector<1x1xi1>, vector<1x1xi32>
    %30 = arith.subi %23, %29 : vector<1x1xi32>
    %cst_13 = arith.constant 2.000000e-01 : f32
    %31 = vector.broadcast %cst_13 : f32 to vector<1x1xf32>
    %32 = arith.mulf %11, %31 : vector<1x1xf32>
    %33 = arith.fptosi %32 : vector<1x1xf32> to vector<1x1xi32>
    %c1_i32_14 = arith.constant 1 : i32
    %34 = vector.broadcast %c1_i32_14 : i32 to vector<1x1xi32>
    %35 = arith.addi %33, %34 : vector<1x1xi32>
    %c5_i32 = arith.constant 5 : i32
    %36 = vector.broadcast %c5_i32 : i32 to vector<1x1xi32>
    %37 = arith.muli %35, %36 : vector<1x1xi32>
    %38 = arith.cmpi sle, %37, %10 : vector<1x1xi32>
    %c1_i32_15 = arith.constant 1 : i32
    %c0_i32_16 = arith.constant 0 : i32
    %39 = vector.broadcast %c1_i32_15 : i32 to vector<1x1xi32>
    %40 = vector.broadcast %c0_i32_16 : i32 to vector<1x1xi32>
    %41 = arith.select %38, %39, %40 : vector<1x1xi1>, vector<1x1xi32>
    %42 = arith.addi %33, %41 : vector<1x1xi32>
    %c5_i32_17 = arith.constant 5 : i32
    %43 = vector.broadcast %c5_i32_17 : i32 to vector<1x1xi32>
    %44 = arith.muli %42, %43 : vector<1x1xi32>
    %45 = arith.cmpi sgt, %44, %10 : vector<1x1xi32>
    %c1_i32_18 = arith.constant 1 : i32
    %c0_i32_19 = arith.constant 0 : i32
    %46 = vector.broadcast %c1_i32_18 : i32 to vector<1x1xi32>
    %47 = vector.broadcast %c0_i32_19 : i32 to vector<1x1xi32>
    %48 = arith.select %45, %46, %47 : vector<1x1xi1>, vector<1x1xi32>
    %49 = arith.subi %42, %48 : vector<1x1xi32>
    %50 = arith.subi %10, %30 : vector<1x1xi32>
    %c100_i32_20 = arith.constant 100 : i32
    %51 = vector.broadcast %c100_i32_20 : i32 to vector<1x1xi32>
    %52 = arith.muli %30, %51 : vector<1x1xi32>
    %53 = arith.cmpi slt, %52, %10 : vector<1x1xi32>
    %c1_i32_21 = arith.constant 1 : i32
    %c0_i32_22 = arith.constant 0 : i32
    %54 = vector.broadcast %c1_i32_21 : i32 to vector<1x1xi32>
    %55 = vector.broadcast %c0_i32_22 : i32 to vector<1x1xi32>
    %56 = arith.select %53, %54, %55 : vector<1x1xi1>, vector<1x1xi32>
    %57 = arith.subi %50, %56 : vector<1x1xi32>
    %58 = arith.subi %10, %49 : vector<1x1xi32>
    %c5_i32_23 = arith.constant 5 : i32
    %59 = vector.broadcast %c5_i32_23 : i32 to vector<1x1xi32>
    %60 = arith.muli %49, %59 : vector<1x1xi32>
    %61 = arith.cmpi slt, %60, %10 : vector<1x1xi32>
    %c1_i32_24 = arith.constant 1 : i32
    %c0_i32_25 = arith.constant 0 : i32
    %62 = vector.broadcast %c1_i32_24 : i32 to vector<1x1xi32>
    %63 = vector.broadcast %c0_i32_25 : i32 to vector<1x1xi32>
    %64 = arith.select %61, %62, %63 : vector<1x1xi1>, vector<1x1xi32>
    %65 = arith.subi %58, %64 : vector<1x1xi32>
    %66 = tpu.bitcast %0 : vector<2x16x16xf32> -> vector<2x16x16xi32>
    %c0_i32_26 = arith.constant 0 : i32
    %67 = vector.broadcast %c0_i32_26 : i32 to vector<2x16x16xi32>
    %68 = arith.cmpi slt, %66, %67 : vector<2x16x16xi32>
    %c2147483647_i32 = arith.constant 2147483647 : i32
    %69 = vector.broadcast %c2147483647_i32 : i32 to vector<2x16x16xi32>
    %70 = arith.xori %66, %69 : vector<2x16x16xi32>
    %71 = arith.select %68, %70, %66 : vector<2x16x16xi1>, vector<2x16x16xi32>
    %72 = tpu.bitcast %1 : vector<2x16x16xf32> -> vector<2x16x16xi32>
    %c0_i32_27 = arith.constant 0 : i32
    %73 = vector.broadcast %c0_i32_27 : i32 to vector<2x16x16xi32>
    %74 = arith.cmpi slt, %72, %73 : vector<2x16x16xi32>
    %c2147483647_i32_28 = arith.constant 2147483647 : i32
    %75 = vector.broadcast %c2147483647_i32_28 : i32 to vector<2x16x16xi32>
    %76 = arith.xori %72, %75 : vector<2x16x16xi32>
    %77 = arith.select %74, %76, %72 : vector<2x16x16xi1>, vector<2x16x16xi32>
    %c-2147483648_i32 = arith.constant -2147483648 : i32
    %78 = vector.broadcast %c-2147483648_i32 : i32 to vector<1x1xi32>
    %c1_i32_29 = arith.constant 1 : i32
    %79 = vector.broadcast %c1_i32_29 : i32 to vector<1x1xi32>
    %c0_i32_30 = arith.constant 0 : i32
    %c32_i32 = arith.constant 32 : i32
    %80 = arith.addi %c0_i32_30, %c32_i32 : i32
    %c1_i32_31 = arith.constant 1 : i32
    %81:5 = scf.for %arg5 = %c0_i32_30 to %80 step %c1_i32_31 iter_args(%arg6 = %78, %arg7 = %78, %arg8 = %78, %arg9 = %78, %arg10 = %78) -> (vector<1x1xi32>, vector<1x1xi32>, vector<1x1xi32>, vector<1x1xi32>, vector<1x1xi32>)  : i32 {
      %223 = arith.xori %arg7, %arg6 : vector<1x1xi32>
      %224 = arith.xori %arg8, %arg6 : vector<1x1xi32>
      %225 = arith.xori %arg9, %arg6 : vector<1x1xi32>
      %226 = arith.xori %arg10, %arg6 : vector<1x1xi32>
      %227 = vector.shape_cast %223 : vector<1x1xi32> to vector<1x1x1xi32>
      %228 = vector.broadcast %227 : vector<1x1x1xi32> to vector<2x16x16xi32>
      %229 = arith.cmpi slt, %71, %228 : vector<2x16x16xi32>
      %230 = arith.andi %4, %229 : vector<2x16x16xi1>
      %231 = arith.extui %230 : vector<2x16x16xi1> to vector<2x16x16xi32>
      %232 = vector.shape_cast %231 : vector<2x16x16xi32> to vector<1x2x16x16xi32>
      %cst_73 = arith.constant dense<0> : vector<1xi32>
      %233 = vector.multi_reduction <add>, %232, %cst_73 [1, 2, 3] : vector<1x2x16x16xi32> to vector<1xi32>
      %234 = vector.shape_cast %233 : vector<1xi32> to vector<1x1x1x1xi32>
      %235 = vector.extract %234[0, 0, 0, 0] : i32 from vector<1x1x1x1xi32>
      %236 = vector.broadcast %235 : i32 to vector<1x1xi32>
      %237 = arith.cmpi sle, %236, %30 : vector<1x1xi32>
      %238 = arith.select %237, %223, %arg7 : vector<1x1xi1>, vector<1x1xi32>
      %239 = vector.shape_cast %224 : vector<1x1xi32> to vector<1x1x1xi32>
      %240 = vector.broadcast %239 : vector<1x1x1xi32> to vector<2x16x16xi32>
      %241 = arith.cmpi slt, %71, %240 : vector<2x16x16xi32>
      %242 = arith.andi %4, %241 : vector<2x16x16xi1>
      %243 = arith.extui %242 : vector<2x16x16xi1> to vector<2x16x16xi32>
      %244 = vector.shape_cast %243 : vector<2x16x16xi32> to vector<1x2x16x16xi32>
      %cst_74 = arith.constant dense<0> : vector<1xi32>
      %245 = vector.multi_reduction <add>, %244, %cst_74 [1, 2, 3] : vector<1x2x16x16xi32> to vector<1xi32>
      %246 = vector.shape_cast %245 : vector<1xi32> to vector<1x1x1x1xi32>
      %247 = vector.extract %246[0, 0, 0, 0] : i32 from vector<1x1x1x1xi32>
      %248 = vector.broadcast %247 : i32 to vector<1x1xi32>
      %249 = arith.cmpi sle, %248, %57 : vector<1x1xi32>
      %250 = arith.select %249, %224, %arg8 : vector<1x1xi1>, vector<1x1xi32>
      %251 = vector.shape_cast %225 : vector<1x1xi32> to vector<1x1x1xi32>
      %252 = vector.broadcast %251 : vector<1x1x1xi32> to vector<2x16x16xi32>
      %253 = arith.cmpi slt, %77, %252 : vector<2x16x16xi32>
      %254 = arith.andi %4, %253 : vector<2x16x16xi1>
      %255 = arith.extui %254 : vector<2x16x16xi1> to vector<2x16x16xi32>
      %256 = vector.shape_cast %255 : vector<2x16x16xi32> to vector<1x2x16x16xi32>
      %cst_75 = arith.constant dense<0> : vector<1xi32>
      %257 = vector.multi_reduction <add>, %256, %cst_75 [1, 2, 3] : vector<1x2x16x16xi32> to vector<1xi32>
      %258 = vector.shape_cast %257 : vector<1xi32> to vector<1x1x1x1xi32>
      %259 = vector.extract %258[0, 0, 0, 0] : i32 from vector<1x1x1x1xi32>
      %260 = vector.broadcast %259 : i32 to vector<1x1xi32>
      %261 = arith.cmpi sle, %260, %30 : vector<1x1xi32>
      %262 = arith.select %261, %225, %arg9 : vector<1x1xi1>, vector<1x1xi32>
      %263 = vector.shape_cast %226 : vector<1x1xi32> to vector<1x1x1xi32>
      %264 = vector.broadcast %263 : vector<1x1x1xi32> to vector<2x16x16xi32>
      %265 = arith.cmpi slt, %77, %264 : vector<2x16x16xi32>
      %266 = arith.andi %4, %265 : vector<2x16x16xi1>
      %267 = arith.extui %266 : vector<2x16x16xi1> to vector<2x16x16xi32>
      %268 = vector.shape_cast %267 : vector<2x16x16xi32> to vector<1x2x16x16xi32>
      %cst_76 = arith.constant dense<0> : vector<1xi32>
      %269 = vector.multi_reduction <add>, %268, %cst_76 [1, 2, 3] : vector<1x2x16x16xi32> to vector<1xi32>
      %270 = vector.shape_cast %269 : vector<1xi32> to vector<1x1x1x1xi32>
      %271 = vector.extract %270[0, 0, 0, 0] : i32 from vector<1x1x1x1xi32>
      %272 = vector.broadcast %271 : i32 to vector<1x1xi32>
      %273 = arith.cmpi sle, %272, %57 : vector<1x1xi32>
      %274 = arith.select %273, %226, %arg10 : vector<1x1xi1>, vector<1x1xi32>
      %275 = arith.shrui %arg6, %79 : vector<1x1xi32>
      scf.yield %275, %238, %250, %262, %274 : vector<1x1xi32>, vector<1x1xi32>, vector<1x1xi32>, vector<1x1xi32>, vector<1x1xi32>
    }
    %c0_i32_32 = arith.constant 0 : i32
    %82 = vector.broadcast %c0_i32_32 : i32 to vector<1x1xi32>
    %83 = arith.cmpi sge, %81#1, %82 : vector<1x1xi32>
    %c2147483647_i32_33 = arith.constant 2147483647 : i32
    %84 = vector.broadcast %c2147483647_i32_33 : i32 to vector<1x1xi32>
    %85 = arith.xori %81#1, %84 : vector<1x1xi32>
    %86 = arith.select %83, %81#1, %85 : vector<1x1xi1>, vector<1x1xi32>
    %87 = tpu.bitcast %86 : vector<1x1xi32> -> vector<1x1xf32>
    %c0_i32_34 = arith.constant 0 : i32
    %88 = vector.broadcast %c0_i32_34 : i32 to vector<1x1xi32>
    %89 = arith.cmpi sge, %81#2, %88 : vector<1x1xi32>
    %c2147483647_i32_35 = arith.constant 2147483647 : i32
    %90 = vector.broadcast %c2147483647_i32_35 : i32 to vector<1x1xi32>
    %91 = arith.xori %81#2, %90 : vector<1x1xi32>
    %92 = arith.select %89, %81#2, %91 : vector<1x1xi1>, vector<1x1xi32>
    %93 = tpu.bitcast %92 : vector<1x1xi32> -> vector<1x1xf32>
    %c0_i32_36 = arith.constant 0 : i32
    %94 = vector.broadcast %c0_i32_36 : i32 to vector<1x1xi32>
    %95 = arith.cmpi sge, %81#3, %94 : vector<1x1xi32>
    %c2147483647_i32_37 = arith.constant 2147483647 : i32
    %96 = vector.broadcast %c2147483647_i32_37 : i32 to vector<1x1xi32>
    %97 = arith.xori %81#3, %96 : vector<1x1xi32>
    %98 = arith.select %95, %81#3, %97 : vector<1x1xi1>, vector<1x1xi32>
    %99 = tpu.bitcast %98 : vector<1x1xi32> -> vector<1x1xf32>
    %c0_i32_38 = arith.constant 0 : i32
    %100 = vector.broadcast %c0_i32_38 : i32 to vector<1x1xi32>
    %101 = arith.cmpi sge, %81#4, %100 : vector<1x1xi32>
    %c2147483647_i32_39 = arith.constant 2147483647 : i32
    %102 = vector.broadcast %c2147483647_i32_39 : i32 to vector<1x1xi32>
    %103 = arith.xori %81#4, %102 : vector<1x1xi32>
    %104 = arith.select %101, %81#4, %103 : vector<1x1xi1>, vector<1x1xi32>
    %105 = tpu.bitcast %104 : vector<1x1xi32> -> vector<1x1xf32>
    %106 = arith.subf %93, %87 : vector<1x1xf32>
    %cst_40 = arith.constant 9.99999993E-9 : f32
    %107 = vector.broadcast %cst_40 : f32 to vector<1x1xf32>
    %108 = arith.addf %106, %107 : vector<1x1xf32>
    %cst_41 = arith.constant 1.000000e+00 : f32
    %109 = vector.broadcast %cst_41 : f32 to vector<1x1xf32>
    %110 = arith.divf %109, %108 : vector<1x1xf32>
    %111 = arith.subf %105, %99 : vector<1x1xf32>
    %cst_42 = arith.constant 9.99999993E-9 : f32
    %112 = vector.broadcast %cst_42 : f32 to vector<1x1xf32>
    %113 = arith.addf %111, %112 : vector<1x1xf32>
    %cst_43 = arith.constant 1.000000e+00 : f32
    %114 = vector.broadcast %cst_43 : f32 to vector<1x1xf32>
    %115 = arith.divf %114, %113 : vector<1x1xf32>
    %116 = vector.shape_cast %87 : vector<1x1xf32> to vector<1x1x1xf32>
    %117 = vector.broadcast %116 : vector<1x1x1xf32> to vector<2x16x16xf32>
    %118 = arith.subf %0, %117 : vector<2x16x16xf32>
    %119 = vector.shape_cast %110 : vector<1x1xf32> to vector<1x1x1xf32>
    %120 = vector.broadcast %119 : vector<1x1x1xf32> to vector<2x16x16xf32>
    %121 = arith.mulf %118, %120 : vector<2x16x16xf32>
    %cst_44 = arith.constant 0.000000e+00 : f32
    %cst_45 = arith.constant 1.000000e+00 : f32
    %122 = vector.broadcast %cst_44 : f32 to vector<2x16x16xf32>
    %123 = arith.maximumf %122, %121 : vector<2x16x16xf32>
    %124 = vector.broadcast %cst_45 : f32 to vector<2x16x16xf32>
    %125 = arith.minimumf %124, %123 : vector<2x16x16xf32>
    %126 = vector.shape_cast %99 : vector<1x1xf32> to vector<1x1x1xf32>
    %127 = vector.broadcast %126 : vector<1x1x1xf32> to vector<2x16x16xf32>
    %128 = arith.subf %1, %127 : vector<2x16x16xf32>
    %129 = vector.shape_cast %115 : vector<1x1xf32> to vector<1x1x1xf32>
    %130 = vector.broadcast %129 : vector<1x1x1xf32> to vector<2x16x16xf32>
    %131 = arith.mulf %128, %130 : vector<2x16x16xf32>
    %cst_46 = arith.constant 0.000000e+00 : f32
    %cst_47 = arith.constant 1.000000e+00 : f32
    %132 = vector.broadcast %cst_46 : f32 to vector<2x16x16xf32>
    %133 = arith.maximumf %132, %131 : vector<2x16x16xf32>
    %134 = vector.broadcast %cst_47 : f32 to vector<2x16x16xf32>
    %135 = arith.minimumf %134, %133 : vector<2x16x16xf32>
    %136 = arith.subf %125, %135 : vector<2x16x16xf32>
    %137 = math.absf %136 : vector<2x16x16xf32>
    %c1_i32_48 = arith.constant 1 : i32
    %138 = vector.broadcast %c1_i32_48 : i32 to vector<1x1xi32>
    %139 = arith.subi %65, %138 : vector<1x1xi32>
    %c1073741824_i32 = arith.constant 1073741824 : i32
    %140 = vector.broadcast %c1073741824_i32 : i32 to vector<1x1xi32>
    %c0_i32_49 = arith.constant 0 : i32
    %141 = vector.broadcast %c0_i32_49 : i32 to vector<1x1xi32>
    %c0_i32_50 = arith.constant 0 : i32
    %c31_i32 = arith.constant 31 : i32
    %142 = arith.addi %c0_i32_50, %c31_i32 : i32
    %c1_i32_51 = arith.constant 1 : i32
    %143:2 = scf.for %arg5 = %c0_i32_50 to %142 step %c1_i32_51 iter_args(%arg6 = %140, %arg7 = %141) -> (vector<1x1xi32>, vector<1x1xi32>)  : i32 {
      %223 = tpu.bitcast %137 : vector<2x16x16xf32> -> vector<2x16x16xi32>
      %224 = arith.xori %arg7, %arg6 : vector<1x1xi32>
      %225 = vector.shape_cast %224 : vector<1x1xi32> to vector<1x1x1xi32>
      %226 = vector.broadcast %225 : vector<1x1x1xi32> to vector<2x16x16xi32>
      %227 = arith.cmpi slt, %223, %226 : vector<2x16x16xi32>
      %228 = arith.andi %4, %227 : vector<2x16x16xi1>
      %229 = arith.extui %228 : vector<2x16x16xi1> to vector<2x16x16xi32>
      %230 = vector.shape_cast %229 : vector<2x16x16xi32> to vector<1x2x16x16xi32>
      %cst_73 = arith.constant dense<0> : vector<1xi32>
      %231 = vector.multi_reduction <add>, %230, %cst_73 [1, 2, 3] : vector<1x2x16x16xi32> to vector<1xi32>
      %232 = vector.shape_cast %231 : vector<1xi32> to vector<1x1x1x1xi32>
      %233 = vector.extract %232[0, 0, 0, 0] : i32 from vector<1x1x1x1xi32>
      %234 = vector.broadcast %233 : i32 to vector<1x1xi32>
      %235 = arith.cmpi sle, %234, %139 : vector<1x1xi32>
      %236 = arith.select %235, %224, %arg7 : vector<1x1xi1>, vector<1x1xi32>
      %237 = arith.shrui %arg6, %79 : vector<1x1xi32>
      scf.yield %237, %236 : vector<1x1xi32>, vector<1x1xi32>
    }
    %144 = tpu.bitcast %143#1 : vector<1x1xi32> -> vector<1x1xf32>
    %145 = vector.shape_cast %144 : vector<1x1xf32> to vector<1x1x1xf32>
    %146 = vector.broadcast %145 : vector<1x1x1xf32> to vector<2x16x16xf32>
    %147 = arith.cmpf olt, %137, %146 : vector<2x16x16xf32>
    %148 = arith.andi %4, %147 : vector<2x16x16xi1>
    %149 = arith.extui %148 : vector<2x16x16xi1> to vector<2x16x16xi32>
    %150 = arith.sitofp %149 : vector<2x16x16xi32> to vector<2x16x16xf32>
    %151 = vector.shape_cast %150 : vector<2x16x16xf32> to vector<1x2x16x16xf32>
    %cst_52 = arith.constant dense<0.000000e+00> : vector<1xf32>
    %152 = vector.multi_reduction <add>, %151, %cst_52 [1, 2, 3] : vector<1x2x16x16xf32> to vector<1xf32>
    %153 = vector.shape_cast %152 : vector<1xf32> to vector<1x1x1x1xf32>
    %154 = vector.extract %153[0, 0, 0, 0] : f32 from vector<1x1x1x1xf32>
    %155 = vector.broadcast %154 : f32 to vector<1x1xf32>
    %cst_53 = arith.constant 0.000000e+00 : f32
    %156 = vector.broadcast %cst_53 : f32 to vector<2x16x16xf32>
    %157 = arith.select %148, %137, %156 : vector<2x16x16xi1>, vector<2x16x16xf32>
    %158 = vector.shape_cast %157 : vector<2x16x16xf32> to vector<1x2x16x16xf32>
    %cst_54 = arith.constant dense<0.000000e+00> : vector<1xf32>
    %159 = vector.multi_reduction <add>, %158, %cst_54 [1, 2, 3] : vector<1x2x16x16xf32> to vector<1xf32>
    %160 = vector.shape_cast %159 : vector<1xf32> to vector<1x1x1x1xf32>
    %161 = vector.extract %160[0, 0, 0, 0] : f32 from vector<1x1x1x1xf32>
    %162 = vector.broadcast %161 : f32 to vector<1x1xf32>
    %163 = arith.sitofp %65 : vector<1x1xi32> to vector<1x1xf32>
    %164 = arith.subf %163, %155 : vector<1x1xf32>
    %cst_55 = arith.constant 0.000000e+00 : f32
    %165 = vector.broadcast %cst_55 : f32 to vector<1x1xf32>
    %166 = arith.maximumf %164, %165 : vector<1x1xf32>
    %167 = arith.mulf %166, %144 : vector<1x1xf32>
    %168 = arith.addf %162, %167 : vector<1x1xf32>
    %c0_i32_56 = arith.constant 0 : i32
    %169 = vector.broadcast %c0_i32_56 : i32 to vector<1x1xi32>
    %170 = arith.cmpi sgt, %10, %169 : vector<1x1xi32>
    %c0_i32_57 = arith.constant 0 : i32
    %171 = vector.broadcast %c0_i32_57 : i32 to vector<1x1xi32>
    %172 = arith.cmpi sgt, %65, %171 : vector<1x1xi32>
    %173 = arith.andi %170, %172 : vector<1x1xi1>
    %c1_i32_58 = arith.constant 1 : i32
    %174 = vector.broadcast %c1_i32_58 : i32 to vector<1x1xi32>
    %175 = arith.maxsi %10, %174 : vector<1x1xi32>
    %176 = arith.sitofp %175 : vector<1x1xi32> to vector<1x1xf32>
    %cst_59 = arith.constant 2.000000e+00 : f32
    %177 = vector.broadcast %cst_59 : f32 to vector<1x1xf32>
    %178 = arith.mulf %177, %176 : vector<1x1xf32>
    %179 = arith.divf %168, %178 : vector<1x1xf32>
    %cst_60 = arith.constant 0.000000e+00 : f32
    %180 = vector.broadcast %cst_60 : f32 to vector<1x1xf32>
    %181 = arith.select %173, %179, %180 : vector<1x1xi1>, vector<1x1xf32>
    %c0_61 = arith.constant 0 : index
    %c0_62 = arith.constant 0 : index
    %182 = vector.load %arg3[%c0_61, %c0_62] : memref<1x1xf32, #tpu.memory_space<vmem>>, vector<1x1xf32>
    tpu.vector_store %arg3[%c0_61, %c0_62], %181 {strides = array<i32>} : memref<1x1xf32, #tpu.memory_space<vmem>>, vector<1x1xf32>,
    %183 = tpu.iota {dimensions = array<i32: 1>} : vector<1x8xi32>
    %c0_i32_63 = arith.constant 0 : i32
    %184 = vector.broadcast %c0_i32_63 : i32 to vector<1x1xi32>
    %185 = arith.cmpi sgt, %10, %184 : vector<1x1xi32>
    %186 = arith.extui %185 : vector<1x1xi1> to vector<1x1xi32>
    %187 = arith.sitofp %186 : vector<1x1xi32> to vector<1x1xf32>
    %c0_i32_64 = arith.constant 0 : i32
    %188 = vector.broadcast %c0_i32_64 : i32 to vector<1x8xi32>
    %189 = arith.cmpi eq, %183, %188 : vector<1x8xi32>
    %cst_65 = arith.constant 0.000000e+00 : f32
    %190 = vector.shape_cast %87 : vector<1x1xf32> to vector<1x1xf32>
    %191 = vector.broadcast %190 : vector<1x1xf32> to vector<1x8xf32>
    %192 = vector.broadcast %cst_65 : f32 to vector<1x8xf32>
    %193 = arith.select %189, %191, %192 : vector<1x8xi1>, vector<1x8xf32>
    %c1_i32_66 = arith.constant 1 : i32
    %194 = vector.broadcast %c1_i32_66 : i32 to vector<1x8xi32>
    %195 = arith.cmpi eq, %183, %194 : vector<1x8xi32>
    %cst_67 = arith.constant 0.000000e+00 : f32
    %196 = vector.shape_cast %93 : vector<1x1xf32> to vector<1x1xf32>
    %197 = vector.broadcast %196 : vector<1x1xf32> to vector<1x8xf32>
    %198 = vector.broadcast %cst_67 : f32 to vector<1x8xf32>
    %199 = arith.select %195, %197, %198 : vector<1x8xi1>, vector<1x8xf32>
    %200 = arith.addf %193, %199 : vector<1x8xf32>
    %c2_i32 = arith.constant 2 : i32
    %201 = vector.broadcast %c2_i32 : i32 to vector<1x8xi32>
    %202 = arith.cmpi eq, %183, %201 : vector<1x8xi32>
    %cst_68 = arith.constant 0.000000e+00 : f32
    %203 = vector.shape_cast %99 : vector<1x1xf32> to vector<1x1xf32>
    %204 = vector.broadcast %203 : vector<1x1xf32> to vector<1x8xf32>
    %205 = vector.broadcast %cst_68 : f32 to vector<1x8xf32>
    %206 = arith.select %202, %204, %205 : vector<1x8xi1>, vector<1x8xf32>
    %207 = arith.addf %200, %206 : vector<1x8xf32>
    %c3_i32 = arith.constant 3 : i32
    %208 = vector.broadcast %c3_i32 : i32 to vector<1x8xi32>
    %209 = arith.cmpi eq, %183, %208 : vector<1x8xi32>
    %cst_69 = arith.constant 0.000000e+00 : f32
    %210 = vector.shape_cast %105 : vector<1x1xf32> to vector<1x1xf32>
    %211 = vector.broadcast %210 : vector<1x1xf32> to vector<1x8xf32>
    %212 = vector.broadcast %cst_69 : f32 to vector<1x8xf32>
    %213 = arith.select %209, %211, %212 : vector<1x8xi1>, vector<1x8xf32>
    %214 = arith.addf %207, %213 : vector<1x8xf32>
    %c4_i32 = arith.constant 4 : i32
    %215 = vector.broadcast %c4_i32 : i32 to vector<1x8xi32>
    %216 = arith.cmpi eq, %183, %215 : vector<1x8xi32>
    %cst_70 = arith.constant 0.000000e+00 : f32
    %217 = vector.shape_cast %187 : vector<1x1xf32> to vector<1x1xf32>
    %218 = vector.broadcast %217 : vector<1x1xf32> to vector<1x8xf32>
    %219 = vector.broadcast %cst_70 : f32 to vector<1x8xf32>
    %220 = arith.select %216, %218, %219 : vector<1x8xi1>, vector<1x8xf32>
    %221 = arith.addf %214, %220 : vector<1x8xf32>
    %c0_71 = arith.constant 0 : index
    %c0_72 = arith.constant 0 : index
    %222 = vector.load %arg4[%c0_71, %c0_72] : memref<1x8xf32, #tpu.memory_space<vmem>>, vector<1x8xf32>
    tpu.vector_store %arg4[%c0_71, %c0_72], %221 {strides = array<i32>} : memref<1x8xf32, #tpu.memory_space<vmem>>, vector<1x8xf32>,
    return
  }
}

module attributes {stable_mosaic.version = 11 : i64} {
  func.func @kernel(%arg0: i32, %arg1: memref<1x8xf32, #tpu.memory_space<vmem>>, %arg2: memref<1x16x16xf32, #tpu.memory_space<vmem>>, %arg3: memref<1x16x16xf32, #tpu.memory_space<vmem>>, %arg4: memref<1x16x16xi8, #tpu.memory_space<vmem>>, %arg5: memref<1x1x8xf32, #tpu.memory_space<vmem>>) attributes {dimension_semantics = [#tpu.dimension_semantics<parallel>], iteration_bounds = array<i64: 2>, scalar_prefetch = 0 : i64, scratch_operands = 0 : i64, tpu.core_type = #tpu.core_type<tc>, window_params = [{pipeline_mode = #tpu.pipeline_mode<synchronous>, transform_indices = @transform_0, window_bounds = array<i64: 1, 8>}, {transform_indices = @transform_1, window_bounds = array<i64: 1, 16, 16>}, {transform_indices = @transform_2, window_bounds = array<i64: 1, 16, 16>}, {transform_indices = @transform_3, window_bounds = array<i64: 1, 16, 16>}, {transform_indices = @transform_4, window_bounds = array<i64: 1, 1, 8>}]} {
    %c0 = arith.constant 0 : index
    %c0_0 = arith.constant 0 : index
    %0 = vector.load %arg1[%c0, %c0_0] : memref<1x8xf32, #tpu.memory_space<vmem>>, vector<1x1xf32>
    %c0_1 = arith.constant 0 : index
    %c1 = arith.constant 1 : index
    %1 = vector.load %arg1[%c0_1, %c1] : memref<1x8xf32, #tpu.memory_space<vmem>>, vector<1x1xf32>
    %c0_2 = arith.constant 0 : index
    %c2 = arith.constant 2 : index
    %2 = vector.load %arg1[%c0_2, %c2] : memref<1x8xf32, #tpu.memory_space<vmem>>, vector<1x1xf32>
    %c0_3 = arith.constant 0 : index
    %c3 = arith.constant 3 : index
    %3 = vector.load %arg1[%c0_3, %c3] : memref<1x8xf32, #tpu.memory_space<vmem>>, vector<1x1xf32>
    %c0_4 = arith.constant 0 : index
    %c4 = arith.constant 4 : index
    %4 = vector.load %arg1[%c0_4, %c4] : memref<1x8xf32, #tpu.memory_space<vmem>>, vector<1x1xf32>
    %cst = arith.constant 5.000000e-01 : f32
    %5 = vector.broadcast %cst : f32 to vector<1x1xf32>
    %6 = arith.cmpf ogt, %4, %5 : vector<1x1xf32>
    %c0_5 = arith.constant 0 : index
    %c0_6 = arith.constant 0 : index
    %c0_7 = arith.constant 0 : index
    %7 = vector.load %arg2[%c0_5, %c0_6, %c0_7] : memref<1x16x16xf32, #tpu.memory_space<vmem>>, vector<1x16x16xf32>
    %8 = vector.shape_cast %7 : vector<1x16x16xf32> to vector<16x16xf32>
    %c0_8 = arith.constant 0 : index
    %c0_9 = arith.constant 0 : index
    %c0_10 = arith.constant 0 : index
    %9 = vector.load %arg3[%c0_8, %c0_9, %c0_10] : memref<1x16x16xf32, #tpu.memory_space<vmem>>, vector<1x16x16xf32>
    %10 = vector.shape_cast %9 : vector<1x16x16xf32> to vector<16x16xf32>
    %c0_11 = arith.constant 0 : index
    %c0_12 = arith.constant 0 : index
    %c0_13 = arith.constant 0 : index
    %11 = vector.load %arg4[%c0_11, %c0_12, %c0_13] : memref<1x16x16xi8, #tpu.memory_space<vmem>>, vector<1x16x16xi8>
    %12 = vector.shape_cast %11 : vector<1x16x16xi8> to vector<16x16xi8>
    %c0_i8 = arith.constant 0 : i8
    %13 = vector.broadcast %c0_i8 : i8 to vector<16x16xi8>
    %14 = arith.cmpi ne, %12, %13 : vector<16x16xi8>
    %15 = arith.extui %14 : vector<16x16xi1> to vector<16x16xi32>
    %16 = arith.sitofp %15 : vector<16x16xi32> to vector<16x16xf32>
    %17 = arith.subf %1, %0 : vector<1x1xf32>
    %cst_14 = arith.constant 9.99999993E-9 : f32
    %18 = vector.broadcast %cst_14 : f32 to vector<1x1xf32>
    %19 = arith.addf %17, %18 : vector<1x1xf32>
    %cst_15 = arith.constant 1.000000e+00 : f32
    %20 = vector.broadcast %cst_15 : f32 to vector<1x1xf32>
    %21 = arith.divf %20, %19 : vector<1x1xf32>
    %22 = arith.subf %3, %2 : vector<1x1xf32>
    %cst_16 = arith.constant 9.99999993E-9 : f32
    %23 = vector.broadcast %cst_16 : f32 to vector<1x1xf32>
    %24 = arith.addf %22, %23 : vector<1x1xf32>
    %cst_17 = arith.constant 1.000000e+00 : f32
    %25 = vector.broadcast %cst_17 : f32 to vector<1x1xf32>
    %26 = arith.divf %25, %24 : vector<1x1xf32>
    %27 = vector.broadcast %0 : vector<1x1xf32> to vector<16x16xf32>
    %28 = arith.subf %8, %27 : vector<16x16xf32>
    %29 = vector.broadcast %21 : vector<1x1xf32> to vector<16x16xf32>
    %30 = arith.mulf %28, %29 : vector<16x16xf32>
    %cst_18 = arith.constant 0.000000e+00 : f32
    %cst_19 = arith.constant 1.000000e+00 : f32
    %31 = vector.broadcast %cst_18 : f32 to vector<16x16xf32>
    %32 = arith.maximumf %31, %30 : vector<16x16xf32>
    %33 = vector.broadcast %cst_19 : f32 to vector<16x16xf32>
    %34 = arith.minimumf %33, %32 : vector<16x16xf32>
    %35 = vector.shape_cast %6 : vector<1x1xi1> to vector<1x1xi1>
    %36 = vector.broadcast %35 : vector<1x1xi1> to vector<16x16xi1>
    %37 = arith.select %36, %34, %8 : vector<16x16xi1>, vector<16x16xf32>
    %38 = vector.broadcast %2 : vector<1x1xf32> to vector<16x16xf32>
    %39 = arith.subf %10, %38 : vector<16x16xf32>
    %40 = vector.broadcast %26 : vector<1x1xf32> to vector<16x16xf32>
    %41 = arith.mulf %39, %40 : vector<16x16xf32>
    %cst_20 = arith.constant 0.000000e+00 : f32
    %cst_21 = arith.constant 1.000000e+00 : f32
    %42 = vector.broadcast %cst_20 : f32 to vector<16x16xf32>
    %43 = arith.maximumf %42, %41 : vector<16x16xf32>
    %44 = vector.broadcast %cst_21 : f32 to vector<16x16xf32>
    %45 = arith.minimumf %44, %43 : vector<16x16xf32>
    %46 = vector.shape_cast %6 : vector<1x1xi1> to vector<1x1xi1>
    %47 = vector.broadcast %46 : vector<1x1xi1> to vector<16x16xi1>
    %48 = arith.select %47, %45, %10 : vector<16x16xi1>, vector<16x16xf32>
    %49 = arith.subf %37, %48 : vector<16x16xf32>
    %50 = arith.mulf %16, %49 : vector<16x16xf32>
    %51 = tpu.iota {dimensions = array<i32: 2>} : vector<1x1x8xi32>
    %cst_22 = arith.constant 0.000000e+00 : f32
    %52 = vector.broadcast %cst_22 : f32 to vector<1x1x8xf32>
    %53 = vector.extract_strided_slice %50 {offsets = [0, 1], sizes = [16, 15], strides = [1, 1]} : vector<16x16xf32> to vector<16x15xf32>
    %54 = vector.extract_strided_slice %50 {offsets = [0, 0], sizes = [16, 15], strides = [1, 1]} : vector<16x16xf32> to vector<16x15xf32>
    %55 = arith.subf %53, %54 : vector<16x15xf32>
    %56 = vector.extract_strided_slice %16 {offsets = [0, 1], sizes = [16, 15], strides = [1, 1]} : vector<16x16xf32> to vector<16x15xf32>
    %57 = vector.extract_strided_slice %16 {offsets = [0, 0], sizes = [16, 15], strides = [1, 1]} : vector<16x16xf32> to vector<16x15xf32>
    %58 = arith.mulf %56, %57 : vector<16x15xf32>
    %59 = math.absf %55 : vector<16x15xf32>
    %60 = arith.mulf %59, %58 : vector<16x15xf32>
    %61 = vector.shape_cast %60 : vector<16x15xf32> to vector<1x16x15xf32>
    %cst_23 = arith.constant dense<0.000000e+00> : vector<1xf32>
    %62 = vector.multi_reduction <add>, %61, %cst_23 [1, 2] : vector<1x16x15xf32> to vector<1xf32>
    %63 = vector.shape_cast %62 : vector<1xf32> to vector<1x1x1xf32>
    %64 = vector.extract %63[0, 0, 0] : f32 from vector<1x1x1xf32>
    %65 = vector.extract_strided_slice %50 {offsets = [1, 0], sizes = [15, 16], strides = [1, 1]} : vector<16x16xf32> to vector<15x16xf32>
    %66 = vector.extract_strided_slice %50 {offsets = [0, 0], sizes = [15, 16], strides = [1, 1]} : vector<16x16xf32> to vector<15x16xf32>
    %67 = arith.subf %65, %66 : vector<15x16xf32>
    %68 = vector.extract_strided_slice %16 {offsets = [1, 0], sizes = [15, 16], strides = [1, 1]} : vector<16x16xf32> to vector<15x16xf32>
    %69 = vector.extract_strided_slice %16 {offsets = [0, 0], sizes = [15, 16], strides = [1, 1]} : vector<16x16xf32> to vector<15x16xf32>
    %70 = arith.mulf %68, %69 : vector<15x16xf32>
    %71 = math.absf %67 : vector<15x16xf32>
    %72 = arith.mulf %71, %70 : vector<15x16xf32>
    %73 = vector.shape_cast %72 : vector<15x16xf32> to vector<1x15x16xf32>
    %cst_24 = arith.constant dense<0.000000e+00> : vector<1xf32>
    %74 = vector.multi_reduction <add>, %73, %cst_24 [1, 2] : vector<1x15x16xf32> to vector<1xf32>
    %75 = vector.shape_cast %74 : vector<1xf32> to vector<1x1x1xf32>
    %76 = vector.extract %75[0, 0, 0] : f32 from vector<1x1x1xf32>
    %77 = arith.addf %64, %76 : f32
    %78 = vector.broadcast %77 : f32 to vector<1x1x1xf32>
    %79 = vector.shape_cast %16 : vector<16x16xf32> to vector<1x16x16xf32>
    %cst_25 = arith.constant dense<0.000000e+00> : vector<1xf32>
    %80 = vector.multi_reduction <add>, %79, %cst_25 [1, 2] : vector<1x16x16xf32> to vector<1xf32>
    %81 = vector.shape_cast %80 : vector<1xf32> to vector<1x1x1xf32>
    %82 = vector.extract %81[0, 0, 0] : f32 from vector<1x1x1xf32>
    %83 = vector.broadcast %82 : f32 to vector<1x1x1xf32>
    %c0_i32 = arith.constant 0 : i32
    %84 = vector.broadcast %c0_i32 : i32 to vector<1x1x8xi32>
    %85 = arith.cmpi eq, %51, %84 : vector<1x1x8xi32>
    %cst_26 = arith.constant 0.000000e+00 : f32
    %86 = vector.shape_cast %78 : vector<1x1x1xf32> to vector<1x1x1xf32>
    %87 = vector.broadcast %86 : vector<1x1x1xf32> to vector<1x1x8xf32>
    %88 = vector.broadcast %cst_26 : f32 to vector<1x1x8xf32>
    %89 = arith.select %85, %87, %88 : vector<1x1x8xi1>, vector<1x1x8xf32>
    %90 = arith.addf %52, %89 : vector<1x1x8xf32>
    %c4_i32 = arith.constant 4 : i32
    %91 = vector.broadcast %c4_i32 : i32 to vector<1x1x8xi32>
    %92 = arith.cmpi eq, %51, %91 : vector<1x1x8xi32>
    %cst_27 = arith.constant 0.000000e+00 : f32
    %93 = vector.shape_cast %83 : vector<1x1x1xf32> to vector<1x1x1xf32>
    %94 = vector.broadcast %93 : vector<1x1x1xf32> to vector<1x1x8xf32>
    %95 = vector.broadcast %cst_27 : f32 to vector<1x1x8xf32>
    %96 = arith.select %92, %94, %95 : vector<1x1x8xi1>, vector<1x1x8xf32>
    %97 = arith.addf %90, %96 : vector<1x1x8xf32>
    %98 = tpu.iota {dimensions = array<i32: 0>} : vector<16x8xi32>
    %99 = tpu.iota {dimensions = array<i32: 1>} : vector<16x8xi32>
    %c2_i32 = arith.constant 2 : i32
    %100 = vector.broadcast %c2_i32 : i32 to vector<16x8xi32>
    %101 = arith.muli %100, %99 : vector<16x8xi32>
    %102 = arith.cmpi eq, %98, %101 : vector<16x8xi32>
    %103 = arith.extui %102 : vector<16x8xi1> to vector<16x8xi32>
    %104 = arith.sitofp %103 : vector<16x8xi32> to vector<16x8xf32>
    %105 = tpu.iota {dimensions = array<i32: 0>} : vector<8x16xi32>
    %106 = tpu.iota {dimensions = array<i32: 1>} : vector<8x16xi32>
    %c2_i32_28 = arith.constant 2 : i32
    %107 = vector.broadcast %c2_i32_28 : i32 to vector<8x16xi32>
    %108 = arith.muli %107, %105 : vector<8x16xi32>
    %109 = arith.cmpi eq, %106, %108 : vector<8x16xi32>
    %110 = arith.extui %109 : vector<8x16xi1> to vector<8x16xi32>
    %111 = arith.sitofp %110 : vector<8x16xi32> to vector<8x16xf32>
    %cst_29 = arith.constant dense<0.000000e+00> : vector<16x8xf32>
    %112 = tpu.matmul %50, %104, %cst_29 {dimension_numbers = #tpu.dot_dimension_numbers<[1], [0], [0], [1], [0, 0, 1, 1], [], []>} : vector<16x16xf32>, vector<16x8xf32>, vector<16x8xf32> -> vector<16x8xf32>
    %cst_30 = arith.constant dense<0.000000e+00> : vector<8x8xf32>
    %113 = tpu.matmul %111, %112, %cst_30 {dimension_numbers = #tpu.dot_dimension_numbers<[1], [0], [0], [1], [0, 0, 1, 1], [], []>} : vector<8x16xf32>, vector<16x8xf32>, vector<8x8xf32> -> vector<8x8xf32>
    %cst_31 = arith.constant dense<0.000000e+00> : vector<16x8xf32>
    %114 = tpu.matmul %16, %104, %cst_31 {dimension_numbers = #tpu.dot_dimension_numbers<[1], [0], [0], [1], [0, 0, 1, 1], [], []>} : vector<16x16xf32>, vector<16x8xf32>, vector<16x8xf32> -> vector<16x8xf32>
    %cst_32 = arith.constant dense<0.000000e+00> : vector<8x8xf32>
    %115 = tpu.matmul %111, %114, %cst_32 {dimension_numbers = #tpu.dot_dimension_numbers<[1], [0], [0], [1], [0, 0, 1, 1], [], []>} : vector<8x16xf32>, vector<16x8xf32>, vector<8x8xf32> -> vector<8x8xf32>
    %116 = vector.extract_strided_slice %113 {offsets = [0, 1], sizes = [8, 7], strides = [1, 1]} : vector<8x8xf32> to vector<8x7xf32>
    %117 = vector.extract_strided_slice %113 {offsets = [0, 0], sizes = [8, 7], strides = [1, 1]} : vector<8x8xf32> to vector<8x7xf32>
    %118 = arith.subf %116, %117 : vector<8x7xf32>
    %119 = vector.extract_strided_slice %115 {offsets = [0, 1], sizes = [8, 7], strides = [1, 1]} : vector<8x8xf32> to vector<8x7xf32>
    %120 = vector.extract_strided_slice %115 {offsets = [0, 0], sizes = [8, 7], strides = [1, 1]} : vector<8x8xf32> to vector<8x7xf32>
    %121 = arith.mulf %119, %120 : vector<8x7xf32>
    %122 = math.absf %118 : vector<8x7xf32>
    %123 = arith.mulf %122, %121 : vector<8x7xf32>
    %124 = vector.shape_cast %123 : vector<8x7xf32> to vector<1x8x7xf32>
    %cst_33 = arith.constant dense<0.000000e+00> : vector<1xf32>
    %125 = vector.multi_reduction <add>, %124, %cst_33 [1, 2] : vector<1x8x7xf32> to vector<1xf32>
    %126 = vector.shape_cast %125 : vector<1xf32> to vector<1x1x1xf32>
    %127 = vector.extract %126[0, 0, 0] : f32 from vector<1x1x1xf32>
    %128 = vector.extract_strided_slice %113 {offsets = [1, 0], sizes = [7, 8], strides = [1, 1]} : vector<8x8xf32> to vector<7x8xf32>
    %129 = vector.extract_strided_slice %113 {offsets = [0, 0], sizes = [7, 8], strides = [1, 1]} : vector<8x8xf32> to vector<7x8xf32>
    %130 = arith.subf %128, %129 : vector<7x8xf32>
    %131 = vector.extract_strided_slice %115 {offsets = [1, 0], sizes = [7, 8], strides = [1, 1]} : vector<8x8xf32> to vector<7x8xf32>
    %132 = vector.extract_strided_slice %115 {offsets = [0, 0], sizes = [7, 8], strides = [1, 1]} : vector<8x8xf32> to vector<7x8xf32>
    %133 = arith.mulf %131, %132 : vector<7x8xf32>
    %134 = math.absf %130 : vector<7x8xf32>
    %135 = arith.mulf %134, %133 : vector<7x8xf32>
    %136 = vector.shape_cast %135 : vector<7x8xf32> to vector<1x7x8xf32>
    %cst_34 = arith.constant dense<0.000000e+00> : vector<1xf32>
    %137 = vector.multi_reduction <add>, %136, %cst_34 [1, 2] : vector<1x7x8xf32> to vector<1xf32>
    %138 = vector.shape_cast %137 : vector<1xf32> to vector<1x1x1xf32>
    %139 = vector.extract %138[0, 0, 0] : f32 from vector<1x1x1xf32>
    %140 = arith.addf %127, %139 : f32
    %141 = vector.broadcast %140 : f32 to vector<1x1x1xf32>
    %142 = vector.shape_cast %115 : vector<8x8xf32> to vector<1x8x8xf32>
    %cst_35 = arith.constant dense<0.000000e+00> : vector<1xf32>
    %143 = vector.multi_reduction <add>, %142, %cst_35 [1, 2] : vector<1x8x8xf32> to vector<1xf32>
    %144 = vector.shape_cast %143 : vector<1xf32> to vector<1x1x1xf32>
    %145 = vector.extract %144[0, 0, 0] : f32 from vector<1x1x1xf32>
    %146 = vector.broadcast %145 : f32 to vector<1x1x1xf32>
    %c1_i32 = arith.constant 1 : i32
    %147 = vector.broadcast %c1_i32 : i32 to vector<1x1x8xi32>
    %148 = arith.cmpi eq, %51, %147 : vector<1x1x8xi32>
    %cst_36 = arith.constant 0.000000e+00 : f32
    %149 = vector.shape_cast %141 : vector<1x1x1xf32> to vector<1x1x1xf32>
    %150 = vector.broadcast %149 : vector<1x1x1xf32> to vector<1x1x8xf32>
    %151 = vector.broadcast %cst_36 : f32 to vector<1x1x8xf32>
    %152 = arith.select %148, %150, %151 : vector<1x1x8xi1>, vector<1x1x8xf32>
    %153 = arith.addf %97, %152 : vector<1x1x8xf32>
    %c5_i32 = arith.constant 5 : i32
    %154 = vector.broadcast %c5_i32 : i32 to vector<1x1x8xi32>
    %155 = arith.cmpi eq, %51, %154 : vector<1x1x8xi32>
    %cst_37 = arith.constant 0.000000e+00 : f32
    %156 = vector.shape_cast %146 : vector<1x1x1xf32> to vector<1x1x1xf32>
    %157 = vector.broadcast %156 : vector<1x1x1xf32> to vector<1x1x8xf32>
    %158 = vector.broadcast %cst_37 : f32 to vector<1x1x8xf32>
    %159 = arith.select %155, %157, %158 : vector<1x1x8xi1>, vector<1x1x8xf32>
    %160 = arith.addf %153, %159 : vector<1x1x8xf32>
    %161 = tpu.iota {dimensions = array<i32: 0>} : vector<8x4xi32>
    %162 = tpu.iota {dimensions = array<i32: 1>} : vector<8x4xi32>
    %c2_i32_38 = arith.constant 2 : i32
    %163 = vector.broadcast %c2_i32_38 : i32 to vector<8x4xi32>
    %164 = arith.muli %163, %162 : vector<8x4xi32>
    %165 = arith.cmpi eq, %161, %164 : vector<8x4xi32>
    %166 = arith.extui %165 : vector<8x4xi1> to vector<8x4xi32>
    %167 = arith.sitofp %166 : vector<8x4xi32> to vector<8x4xf32>
    %168 = tpu.iota {dimensions = array<i32: 0>} : vector<4x8xi32>
    %169 = tpu.iota {dimensions = array<i32: 1>} : vector<4x8xi32>
    %c2_i32_39 = arith.constant 2 : i32
    %170 = vector.broadcast %c2_i32_39 : i32 to vector<4x8xi32>
    %171 = arith.muli %170, %168 : vector<4x8xi32>
    %172 = arith.cmpi eq, %169, %171 : vector<4x8xi32>
    %173 = arith.extui %172 : vector<4x8xi1> to vector<4x8xi32>
    %174 = arith.sitofp %173 : vector<4x8xi32> to vector<4x8xf32>
    %cst_40 = arith.constant dense<0.000000e+00> : vector<8x4xf32>
    %175 = tpu.matmul %113, %167, %cst_40 {dimension_numbers = #tpu.dot_dimension_numbers<[1], [0], [0], [1], [0, 0, 1, 1], [], []>} : vector<8x8xf32>, vector<8x4xf32>, vector<8x4xf32> -> vector<8x4xf32>
    %cst_41 = arith.constant dense<0.000000e+00> : vector<4x4xf32>
    %176 = tpu.matmul %174, %175, %cst_41 {dimension_numbers = #tpu.dot_dimension_numbers<[1], [0], [0], [1], [0, 0, 1, 1], [], []>} : vector<4x8xf32>, vector<8x4xf32>, vector<4x4xf32> -> vector<4x4xf32>
    %cst_42 = arith.constant dense<0.000000e+00> : vector<8x4xf32>
    %177 = tpu.matmul %115, %167, %cst_42 {dimension_numbers = #tpu.dot_dimension_numbers<[1], [0], [0], [1], [0, 0, 1, 1], [], []>} : vector<8x8xf32>, vector<8x4xf32>, vector<8x4xf32> -> vector<8x4xf32>
    %cst_43 = arith.constant dense<0.000000e+00> : vector<4x4xf32>
    %178 = tpu.matmul %174, %177, %cst_43 {dimension_numbers = #tpu.dot_dimension_numbers<[1], [0], [0], [1], [0, 0, 1, 1], [], []>} : vector<4x8xf32>, vector<8x4xf32>, vector<4x4xf32> -> vector<4x4xf32>
    %179 = vector.extract_strided_slice %176 {offsets = [0, 1], sizes = [4, 3], strides = [1, 1]} : vector<4x4xf32> to vector<4x3xf32>
    %180 = vector.extract_strided_slice %176 {offsets = [0, 0], sizes = [4, 3], strides = [1, 1]} : vector<4x4xf32> to vector<4x3xf32>
    %181 = arith.subf %179, %180 : vector<4x3xf32>
    %182 = vector.extract_strided_slice %178 {offsets = [0, 1], sizes = [4, 3], strides = [1, 1]} : vector<4x4xf32> to vector<4x3xf32>
    %183 = vector.extract_strided_slice %178 {offsets = [0, 0], sizes = [4, 3], strides = [1, 1]} : vector<4x4xf32> to vector<4x3xf32>
    %184 = arith.mulf %182, %183 : vector<4x3xf32>
    %185 = math.absf %181 : vector<4x3xf32>
    %186 = arith.mulf %185, %184 : vector<4x3xf32>
    %187 = vector.shape_cast %186 : vector<4x3xf32> to vector<1x4x3xf32>
    %cst_44 = arith.constant dense<0.000000e+00> : vector<1xf32>
    %188 = vector.multi_reduction <add>, %187, %cst_44 [1, 2] : vector<1x4x3xf32> to vector<1xf32>
    %189 = vector.shape_cast %188 : vector<1xf32> to vector<1x1x1xf32>
    %190 = vector.extract %189[0, 0, 0] : f32 from vector<1x1x1xf32>
    %191 = vector.extract_strided_slice %176 {offsets = [1, 0], sizes = [3, 4], strides = [1, 1]} : vector<4x4xf32> to vector<3x4xf32>
    %192 = vector.extract_strided_slice %176 {offsets = [0, 0], sizes = [3, 4], strides = [1, 1]} : vector<4x4xf32> to vector<3x4xf32>
    %193 = arith.subf %191, %192 : vector<3x4xf32>
    %194 = vector.extract_strided_slice %178 {offsets = [1, 0], sizes = [3, 4], strides = [1, 1]} : vector<4x4xf32> to vector<3x4xf32>
    %195 = vector.extract_strided_slice %178 {offsets = [0, 0], sizes = [3, 4], strides = [1, 1]} : vector<4x4xf32> to vector<3x4xf32>
    %196 = arith.mulf %194, %195 : vector<3x4xf32>
    %197 = math.absf %193 : vector<3x4xf32>
    %198 = arith.mulf %197, %196 : vector<3x4xf32>
    %199 = vector.shape_cast %198 : vector<3x4xf32> to vector<1x3x4xf32>
    %cst_45 = arith.constant dense<0.000000e+00> : vector<1xf32>
    %200 = vector.multi_reduction <add>, %199, %cst_45 [1, 2] : vector<1x3x4xf32> to vector<1xf32>
    %201 = vector.shape_cast %200 : vector<1xf32> to vector<1x1x1xf32>
    %202 = vector.extract %201[0, 0, 0] : f32 from vector<1x1x1xf32>
    %203 = arith.addf %190, %202 : f32
    %204 = vector.broadcast %203 : f32 to vector<1x1x1xf32>
    %205 = vector.shape_cast %178 : vector<4x4xf32> to vector<1x4x4xf32>
    %cst_46 = arith.constant dense<0.000000e+00> : vector<1xf32>
    %206 = vector.multi_reduction <add>, %205, %cst_46 [1, 2] : vector<1x4x4xf32> to vector<1xf32>
    %207 = vector.shape_cast %206 : vector<1xf32> to vector<1x1x1xf32>
    %208 = vector.extract %207[0, 0, 0] : f32 from vector<1x1x1xf32>
    %209 = vector.broadcast %208 : f32 to vector<1x1x1xf32>
    %c2_i32_47 = arith.constant 2 : i32
    %210 = vector.broadcast %c2_i32_47 : i32 to vector<1x1x8xi32>
    %211 = arith.cmpi eq, %51, %210 : vector<1x1x8xi32>
    %cst_48 = arith.constant 0.000000e+00 : f32
    %212 = vector.shape_cast %204 : vector<1x1x1xf32> to vector<1x1x1xf32>
    %213 = vector.broadcast %212 : vector<1x1x1xf32> to vector<1x1x8xf32>
    %214 = vector.broadcast %cst_48 : f32 to vector<1x1x8xf32>
    %215 = arith.select %211, %213, %214 : vector<1x1x8xi1>, vector<1x1x8xf32>
    %216 = arith.addf %160, %215 : vector<1x1x8xf32>
    %c6_i32 = arith.constant 6 : i32
    %217 = vector.broadcast %c6_i32 : i32 to vector<1x1x8xi32>
    %218 = arith.cmpi eq, %51, %217 : vector<1x1x8xi32>
    %cst_49 = arith.constant 0.000000e+00 : f32
    %219 = vector.shape_cast %209 : vector<1x1x1xf32> to vector<1x1x1xf32>
    %220 = vector.broadcast %219 : vector<1x1x1xf32> to vector<1x1x8xf32>
    %221 = vector.broadcast %cst_49 : f32 to vector<1x1x8xf32>
    %222 = arith.select %218, %220, %221 : vector<1x1x8xi1>, vector<1x1x8xf32>
    %223 = arith.addf %216, %222 : vector<1x1x8xf32>
    %224 = tpu.iota {dimensions = array<i32: 0>} : vector<4x2xi32>
    %225 = tpu.iota {dimensions = array<i32: 1>} : vector<4x2xi32>
    %c2_i32_50 = arith.constant 2 : i32
    %226 = vector.broadcast %c2_i32_50 : i32 to vector<4x2xi32>
    %227 = arith.muli %226, %225 : vector<4x2xi32>
    %228 = arith.cmpi eq, %224, %227 : vector<4x2xi32>
    %229 = arith.extui %228 : vector<4x2xi1> to vector<4x2xi32>
    %230 = arith.sitofp %229 : vector<4x2xi32> to vector<4x2xf32>
    %231 = tpu.iota {dimensions = array<i32: 0>} : vector<2x4xi32>
    %232 = tpu.iota {dimensions = array<i32: 1>} : vector<2x4xi32>
    %c2_i32_51 = arith.constant 2 : i32
    %233 = vector.broadcast %c2_i32_51 : i32 to vector<2x4xi32>
    %234 = arith.muli %233, %231 : vector<2x4xi32>
    %235 = arith.cmpi eq, %232, %234 : vector<2x4xi32>
    %236 = arith.extui %235 : vector<2x4xi1> to vector<2x4xi32>
    %237 = arith.sitofp %236 : vector<2x4xi32> to vector<2x4xf32>
    %cst_52 = arith.constant dense<0.000000e+00> : vector<4x2xf32>
    %238 = tpu.matmul %176, %230, %cst_52 {dimension_numbers = #tpu.dot_dimension_numbers<[1], [0], [0], [1], [0, 0, 1, 1], [], []>} : vector<4x4xf32>, vector<4x2xf32>, vector<4x2xf32> -> vector<4x2xf32>
    %cst_53 = arith.constant dense<0.000000e+00> : vector<2x2xf32>
    %239 = tpu.matmul %237, %238, %cst_53 {dimension_numbers = #tpu.dot_dimension_numbers<[1], [0], [0], [1], [0, 0, 1, 1], [], []>} : vector<2x4xf32>, vector<4x2xf32>, vector<2x2xf32> -> vector<2x2xf32>
    %cst_54 = arith.constant dense<0.000000e+00> : vector<4x2xf32>
    %240 = tpu.matmul %178, %230, %cst_54 {dimension_numbers = #tpu.dot_dimension_numbers<[1], [0], [0], [1], [0, 0, 1, 1], [], []>} : vector<4x4xf32>, vector<4x2xf32>, vector<4x2xf32> -> vector<4x2xf32>
    %cst_55 = arith.constant dense<0.000000e+00> : vector<2x2xf32>
    %241 = tpu.matmul %237, %240, %cst_55 {dimension_numbers = #tpu.dot_dimension_numbers<[1], [0], [0], [1], [0, 0, 1, 1], [], []>} : vector<2x4xf32>, vector<4x2xf32>, vector<2x2xf32> -> vector<2x2xf32>
    %242 = vector.extract_strided_slice %239 {offsets = [0, 1], sizes = [2, 1], strides = [1, 1]} : vector<2x2xf32> to vector<2x1xf32>
    %243 = vector.extract_strided_slice %239 {offsets = [0, 0], sizes = [2, 1], strides = [1, 1]} : vector<2x2xf32> to vector<2x1xf32>
    %244 = arith.subf %242, %243 : vector<2x1xf32>
    %245 = vector.extract_strided_slice %241 {offsets = [0, 1], sizes = [2, 1], strides = [1, 1]} : vector<2x2xf32> to vector<2x1xf32>
    %246 = vector.extract_strided_slice %241 {offsets = [0, 0], sizes = [2, 1], strides = [1, 1]} : vector<2x2xf32> to vector<2x1xf32>
    %247 = arith.mulf %245, %246 : vector<2x1xf32>
    %248 = math.absf %244 : vector<2x1xf32>
    %249 = arith.mulf %248, %247 : vector<2x1xf32>
    %250 = vector.shape_cast %249 : vector<2x1xf32> to vector<1x2x1xf32>
    %cst_56 = arith.constant dense<0.000000e+00> : vector<1xf32>
    %251 = vector.multi_reduction <add>, %250, %cst_56 [1, 2] : vector<1x2x1xf32> to vector<1xf32>
    %252 = vector.shape_cast %251 : vector<1xf32> to vector<1x1x1xf32>
    %253 = vector.extract %252[0, 0, 0] : f32 from vector<1x1x1xf32>
    %254 = vector.extract_strided_slice %239 {offsets = [1, 0], sizes = [1, 2], strides = [1, 1]} : vector<2x2xf32> to vector<1x2xf32>
    %255 = vector.extract_strided_slice %239 {offsets = [0, 0], sizes = [1, 2], strides = [1, 1]} : vector<2x2xf32> to vector<1x2xf32>
    %256 = arith.subf %254, %255 : vector<1x2xf32>
    %257 = vector.extract_strided_slice %241 {offsets = [1, 0], sizes = [1, 2], strides = [1, 1]} : vector<2x2xf32> to vector<1x2xf32>
    %258 = vector.extract_strided_slice %241 {offsets = [0, 0], sizes = [1, 2], strides = [1, 1]} : vector<2x2xf32> to vector<1x2xf32>
    %259 = arith.mulf %257, %258 : vector<1x2xf32>
    %260 = math.absf %256 : vector<1x2xf32>
    %261 = arith.mulf %260, %259 : vector<1x2xf32>
    %262 = vector.shape_cast %261 : vector<1x2xf32> to vector<1x1x2xf32>
    %cst_57 = arith.constant dense<0.000000e+00> : vector<1xf32>
    %263 = vector.multi_reduction <add>, %262, %cst_57 [1, 2] : vector<1x1x2xf32> to vector<1xf32>
    %264 = vector.shape_cast %263 : vector<1xf32> to vector<1x1x1xf32>
    %265 = vector.extract %264[0, 0, 0] : f32 from vector<1x1x1xf32>
    %266 = arith.addf %253, %265 : f32
    %267 = vector.broadcast %266 : f32 to vector<1x1x1xf32>
    %268 = vector.shape_cast %241 : vector<2x2xf32> to vector<1x2x2xf32>
    %cst_58 = arith.constant dense<0.000000e+00> : vector<1xf32>
    %269 = vector.multi_reduction <add>, %268, %cst_58 [1, 2] : vector<1x2x2xf32> to vector<1xf32>
    %270 = vector.shape_cast %269 : vector<1xf32> to vector<1x1x1xf32>
    %271 = vector.extract %270[0, 0, 0] : f32 from vector<1x1x1xf32>
    %272 = vector.broadcast %271 : f32 to vector<1x1x1xf32>
    %c3_i32 = arith.constant 3 : i32
    %273 = vector.broadcast %c3_i32 : i32 to vector<1x1x8xi32>
    %274 = arith.cmpi eq, %51, %273 : vector<1x1x8xi32>
    %cst_59 = arith.constant 0.000000e+00 : f32
    %275 = vector.shape_cast %267 : vector<1x1x1xf32> to vector<1x1x1xf32>
    %276 = vector.broadcast %275 : vector<1x1x1xf32> to vector<1x1x8xf32>
    %277 = vector.broadcast %cst_59 : f32 to vector<1x1x8xf32>
    %278 = arith.select %274, %276, %277 : vector<1x1x8xi1>, vector<1x1x8xf32>
    %279 = arith.addf %223, %278 : vector<1x1x8xf32>
    %c7_i32 = arith.constant 7 : i32
    %280 = vector.broadcast %c7_i32 : i32 to vector<1x1x8xi32>
    %281 = arith.cmpi eq, %51, %280 : vector<1x1x8xi32>
    %cst_60 = arith.constant 0.000000e+00 : f32
    %282 = vector.shape_cast %272 : vector<1x1x1xf32> to vector<1x1x1xf32>
    %283 = vector.broadcast %282 : vector<1x1x1xf32> to vector<1x1x8xf32>
    %284 = vector.broadcast %cst_60 : f32 to vector<1x1x8xf32>
    %285 = arith.select %281, %283, %284 : vector<1x1x8xi1>, vector<1x1x8xf32>
    %286 = arith.addf %279, %285 : vector<1x1x8xf32>
    %c0_61 = arith.constant 0 : index
    %c0_62 = arith.constant 0 : index
    %c0_63 = arith.constant 0 : index
    %287 = vector.load %arg5[%c0_61, %c0_62, %c0_63] : memref<1x1x8xf32, #tpu.memory_space<vmem>>, vector<1x1x8xf32>
    tpu.vector_store %arg5[%c0_61, %c0_62, %c0_63], %286 {strides = array<i32>} : memref<1x1x8xf32, #tpu.memory_space<vmem>>, vector<1x1x8xf32>,
    return
  }
  func.func @transform_0(%arg0: i32) -> (i32, i32) {
    %c0_i32 = arith.constant 0 : i32
    %c0_i32_0 = arith.constant 0 : i32
    %c0_i32_1 = arith.constant 0 : i32
    return %c0_i32, %c0_i32_0 : i32, i32
  }
  func.func @transform_1(%arg0: i32) -> (i32, i32, i32) {
    %c0_i32 = arith.constant 0 : i32
    %c0_i32_0 = arith.constant 0 : i32
    %c0_i32_1 = arith.constant 0 : i32
    return %arg0, %c0_i32, %c0_i32_0 : i32, i32, i32
  }
  func.func @transform_2(%arg0: i32) -> (i32, i32, i32) {
    %c0_i32 = arith.constant 0 : i32
    %c0_i32_0 = arith.constant 0 : i32
    %c0_i32_1 = arith.constant 0 : i32
    return %arg0, %c0_i32, %c0_i32_0 : i32, i32, i32
  }
  func.func @transform_3(%arg0: i32) -> (i32, i32, i32) {
    %c0_i32 = arith.constant 0 : i32
    %c0_i32_0 = arith.constant 0 : i32
    %c0_i32_1 = arith.constant 0 : i32
    return %arg0, %c0_i32, %c0_i32_0 : i32, i32, i32
  }
  func.func @transform_4(%arg0: i32) -> (i32, i32, i32) {
    %c0_i32 = arith.constant 0 : i32
    %c0_i32_0 = arith.constant 0 : i32
    %c0_i32_1 = arith.constant 0 : i32
    return %arg0, %c0_i32, %c0_i32_0 : i32, i32, i32
  }
}

</mosaic_0001>

<llo_original>
// kernel: trimmed_procrustes_loss.2
$region0: #{trimmed_procrustes_loss.2}
  #allocation0 [shape = 'u32[]', space=smem, size = 0x4, offset = 0x4, fixed_abs, tag = 'smem constant byte address 0x4 - core index']
  #allocation1 [shape = 'u32[144,128]{1,0:T(1,128)}', space=vmem, size = 0x12000, scoped, tag = 'internal scratch']
  %s0 = inlined_call_operand.hbm [shape: f32[2,16,16], index: 0, kind: input, shape index: {}]
  %s1 = inlined_call_operand.hbm [shape: f32[2,16,16], index: 1, kind: input, shape index: {}]
  %s2 = inlined_call_operand.vmem [shape: s8[2,16,16], index: 2, kind: input, shape index: {}]
  %s3 = inlined_call_operand.hbm [shape: f32[1,1], index: 3, kind: output, shape index: {0}]
  %s4 = inlined_call_operand.vmem [shape: f32[1,8], index: 4, kind: output, shape index: {1}]
  %5 = xla_tuple %s3, %s4
  %s6 = sld [smem:[#allocation0]]
  $region52: #{trimmed_procrustes_loss.2} parent=0
    _
  %s8 = ssub.s32 1, %s6
  %s9 = scalar_select 0, %s8, %s6
  $region1: #{trimmed_procrustes_loss.2} parent=0
    #allocation2 [shape = 'u8[16384]{0}', space=vmem, size = 0x4000, scoped, tag = 'input window, operand 0, single buffered']
    #allocation3 [shape = 's32[1]{0}', space=sflag, size = 0x4, scoped, tag = 'scoped memory for trimmed_procrustes_loss.2']
    #allocation4 [shape = 's32[1]{0}', space=sflag, size = 0x4, scoped, tag = 'scoped memory for trimmed_procrustes_loss.2']
    #allocation5 [shape = 'u8[16384]{0}', space=vmem, size = 0x4000, scoped, tag = 'input window, operand 1, single buffered']
    #allocation6 [shape = 's32[1]{0}', space=sflag, size = 0x4, scoped, tag = 'scoped memory for trimmed_procrustes_loss.2']
    #allocation7 [shape = 'u8[512]{0}', space=vmem, size = 0x400, scoped, tag = 'output window, operand 0, single buffered']
    %10 = vsyncpa [#allocation3], 0
    %11 = vsyncpa [#allocation6], 0
    %12 = vsyncpa [#allocation4], 0
    // Predicated region
    $region2: #{trimmed_procrustes_loss.2} parent=1 // pred_check
      _
    $region3: #{trimmed_procrustes_loss.2} parent=1 // pred_check_branch
      %14 = sbr.rel (0) target = $region5
    $region4: #{trimmed_procrustes_loss.2} parent=1 // pred_region
      %s16 = ssub.s32 512, 512
      %17 = vsyncadd [#allocation3], %s16
      %s18 = sshll.u32 [#allocation2], 4
      %s19 = int_to_ptr.vmem [resolvable:$true] %s18
      %24 = dma.hbm_to_vmem [thread:$0]  %s0, 512, %s19, [#allocation3], 128, 128, 8
    $region5: #{trimmed_procrustes_loss.2} parent=1 // pred_fallthru
      _
    // Predicated region
    $region6: #{trimmed_procrustes_loss.2} parent=1 // pred_check
      _
    $region7: #{trimmed_procrustes_loss.2} parent=1 // pred_check_branch
      %26 = sbr.rel (0) target = $region9
    $region8: #{trimmed_procrustes_loss.2} parent=1 // pred_region
      %s28 = ssub.s32 512, 512
      %29 = vsyncadd [#allocation6], %s28
      %s30 = sshll.u32 [#allocation5], 4
      %s31 = int_to_ptr.vmem [resolvable:$true] %s30
      %36 = dma.hbm_to_vmem [thread:$0]  %s1, 512, %s31, [#allocation6], 128, 128, 8
    $region9: #{trimmed_procrustes_loss.2} parent=1 // pred_fallthru
      _
    // Predicated region
    $region10: #{trimmed_procrustes_loss.2} parent=1 // pred_check
      _
    $region11: #{trimmed_procrustes_loss.2} parent=1 // pred_check_branch
      %38 = sbr.rel (0) target = $region13
    $region12: #{trimmed_procrustes_loss.2} parent=1 // pred_region
      _
    $region13: #{trimmed_procrustes_loss.2} parent=1 // pred_fallthru
      _
    // Predicated region
    $region14: #{trimmed_procrustes_loss.2} parent=1 // pred_check
      _
    $region15: #{trimmed_procrustes_loss.2} parent=1 // pred_check_branch
      %40 = sbr.rel (0) target = $region17
    $region16: #{trimmed_procrustes_loss.2} parent=1 // pred_region
      %41 = dma.done [#allocation3], 512
    $region17: #{trimmed_procrustes_loss.2} parent=1 // pred_fallthru
      _
    // Predicated region
    $region18: #{trimmed_procrustes_loss.2} parent=1 // pred_check
      _
    $region19: #{trimmed_procrustes_loss.2} parent=1 // pred_check_branch
      %43 = sbr.rel (0) target = $region21
    $region20: #{trimmed_procrustes_loss.2} parent=1 // pred_region
      %44 = dma.done [#allocation6], 512
    $region21: #{trimmed_procrustes_loss.2} parent=1 // pred_fallthru
      _
    %v47 = vld [vmem:[#allocation2] sm:$0xff]
    %v48 = vld [vmem:[#allocation2 + $0x8] sm:$0xff]
    %v49 = vld [vmem:[#allocation2 + $0x10] sm:$0xff]
    %v50 = vld [vmem:[#allocation2 + $0x18] sm:$0xff]
    %v51 = vld [vmem:[#allocation5] sm:$0xff]
    %v52 = vld [vmem:[#allocation5 + $0x8] sm:$0xff]
    %v53 = vld [vmem:[#allocation5 + $0x10] sm:$0xff]
    %v54 = vld [vmem:[#allocation5 + $0x18] sm:$0xff]
    %v55 = vld [vmem:[%s2] sm:$0x3]
    %v56 = vld [vmem:[%s2 + $0x2] sm:$0x3]
    %v57 = vld [vmem:[%s2 + $0x4] sm:$0x3]
    %v58 = vld [vmem:[%s2 + $0x6] sm:$0x3]
    %vm59 = vnez %v55
    %vm60 = vnez %v56
    %vm61 = vnez %v57
    %vm62 = vnez %v58
    %v63 = vsel %vm59, 16843009, 0
    %v64 = vsel %vm60, 16843009, 0
    %v65 = vsel %vm61, 16843009, 0
    %v66 = vsel %vm62, 16843009, 0
    %v67 = vunpack.c.0.s8 %v63
    %v68 = vunpack.c.0.s8 %v64
    %v69 = vunpack.c.0.s8 %v65
    %v70 = vunpack.c.0.s8 %v66
    %vm71 = vcmp.ne.s32.totalorder %v67, 0
    %vm72 = vcmp.ne.s32.totalorder %v68, 0
    %vm73 = vcmp.ne.s32.totalorder %v69, 0
    %vm74 = vcmp.ne.s32.totalorder %v70, 0
    %v75 = vsel %vm71, 1, 0
    %v76 = vsel %vm72, 1, 0
    %v77 = vsel %vm73, 1, 0
    %v78 = vsel %vm74, 1, 0
    %vm79 = vcmask 130048
    %v80 = vsel %vm79, %v75, 0
    %v81 = vsel %vm79, %v76, 0
    %v82 = vsel %vm79, %v77, 0
    %v83 = vsel %vm79, %v78, 0
    %v84 = vadd.s32 %v80, %v81
    %v85 = vadd.s32 %v82, %v83
    %v86 = vadd.s32 %v84, %v85
    %v87 = vand.u32 %v86, 65535
    %v88 = vshrl.u32 %v86, 16
    %v89 = vcvt.s32.f32 %v87
    %v90 = vcvt.s32.f32 %v88
    %91 = vadd.xlane.f32.xlu0 %v89
    %v92 = vpop.xlane.xlu0 %91
    %93 = vadd.xlane.f32.xlu0 %v90
    %v94 = vpop.xlane.xlu0 %93
    %v95 = vcvt.f32.s32 %v92
    %v96 = vcvt.f32.s32 %v94
    %v97 = vshll.u32 %v96, 16
    %v98 = vadd.s32 %v97, %v95
    %v99 = vrot.slane %v98, 4
    %v100 = vadd.s32 %v98, %v99
    %v101 = vrot.slane %v100, 2
    %v102 = vadd.s32 %v100, %v101
    %v103 = vrot.slane %v102, 1
    %v104 = vadd.s32 %v102, %v103
    %s105 = vtos %v104
    %v106 = vstv %s105
    %v107 = vcvt.s32.f32 %v106
    %v108 = vmul.f32 %v107, 0.01
    %v109 = vcvt.f32.s32.to.zero.pseudo %v108
    %v110 = vadd.s32 %v109, 1
    %v111 = vmul.u32 %v110, 100
    %vm112 = vcmp.le.s32.totalorder %v111, %v106
    %v113 = vsel %vm112, 1, 0
    %v114 = vadd.s32 %v109, %v113
    %v115 = vmul.u32 %v114, 100
    %vm116 = vcmp.gt.s32.totalorder %v115, %v106
    %v117 = vsel %vm116, 1, 0
    %v118 = vsub.s32 %v114, %v117
    %v119 = vmul.f32 %v107, 0.2
    %v120 = vcvt.f32.s32.to.zero.pseudo %v119
    %v121 = vadd.s32 %v120, 1
    %v122 = vmul.u32 %v121, 5
    %vm123 = vcmp.le.s32.totalorder %v122, %v106
    %v124 = vsel %vm123, 1, 0
    %v125 = vadd.s32 %v120, %v124
    %v126 = vmul.u32 %v125, 5
    %vm127 = vcmp.gt.s32.totalorder %v126, %v106
    %v128 = vsel %vm127, 1, 0
    %v129 = vsub.s32 %v125, %v128
    %v130 = vsub.s32 %v106, %v118
    %v131 = vmul.u32 %v118, 100
    %vm132 = vcmp.lt.s32.totalorder %v131, %v106
    %v133 = vsel %vm132, 1, 0
    %v134 = vsub.s32 %v130, %v133
    %v135 = vsub.s32 %v106, %v129
    %v136 = vmul.u32 %v129, 5
    %vm137 = vcmp.lt.s32.totalorder %v136, %v106
    %v138 = vsel %vm137, 1, 0
    %v139 = vsub.s32 %v135, %v138
    %vm144 = vcmp.lt.s32.totalorder %v47, 0
    %vm145 = vcmp.lt.s32.totalorder %v48, 0
    %vm146 = vcmp.lt.s32.totalorder %v49, 0
    %vm147 = vcmp.lt.s32.totalorder %v50, 0
    %v148 = vxor.u32 %v47, 2147483647
    %v149 = vxor.u32 %v48, 2147483647
    %v150 = vxor.u32 %v49, 2147483647
    %v151 = vxor.u32 %v50, 2147483647
    %v152 = vsel %vm144, %v148, %v47
    %v153 = vsel %vm145, %v149, %v48
    %v154 = vsel %vm146, %v150, %v49
    %v155 = vsel %vm147, %v151, %v50
    %vm160 = vcmp.lt.s32.totalorder %v51, 0
    %vm161 = vcmp.lt.s32.totalorder %v52, 0
    %vm162 = vcmp.lt.s32.totalorder %v53, 0
    %vm163 = vcmp.lt.s32.totalorder %v54, 0
    %v164 = vxor.u32 %v51, 2147483647
    %v165 = vxor.u32 %v52, 2147483647
    %v166 = vxor.u32 %v53, 2147483647
    %v167 = vxor.u32 %v54, 2147483647
    %v168 = vsel %vm160, %v164, %v51
    %v169 = vsel %vm161, %v165, %v52
    %v170 = vsel %vm162, %v166, %v53
    %v171 = vsel %vm163, %v167, %v54
    loop: start=0, step=1, limit=32
    $region22: #{trimmed_procrustes_loss.2} parent=1 // loop_pre_header
      _
    $region23: #{trimmed_procrustes_loss.2} parent=1 // loop_header
      %s173 = sphi 0, %s177
      %p174 = scmp.ge.s32.totalorder %s173, 32
      %v178 = vphi 2147483648, %v431
      %v179 = vphi 2147483648, %v247
      %v180 = vphi 2147483648, %v308
      %v181 = vphi 2147483648, %v369
      %v182 = vphi 2147483648, %v430
    $region24: #{trimmed_procrustes_loss.2} parent=1 // loop_header_branch
      %176 = sbr.rel (%p174) target = $region28
    $region25: #{trimmed_procrustes_loss.2} parent=1 // loop_body
      %v183 = vxor.u32 %v179, %v178
      %v184 = vxor.u32 %v180, %v178
      %v185 = vxor.u32 %v181, %v178
      %v186 = vxor.u32 %v182, %v178
      %vm187 = vcmp.lt.s32.totalorder %v152, %v183
      %vm188 = vcmp.lt.s32.totalorder %v153, %v183
      %vm189 = vcmp.lt.s32.totalorder %v154, %v183
      %vm190 = vcmp.lt.s32.totalorder %v155, %v183
      %vm191 = vmpackc.low %vm187, %vm187
      %vm192 = vmpackc.even %vm191, %vm191
      %vm193 = vmpackc.low %vm188, %vm188
      %vm194 = vmpackc.even %vm193, %vm193
      %vm195 = vmpackc.low %vm189, %vm189
      %vm196 = vmpackc.even %vm195, %vm195
      %vm197 = vmpackc.low %vm190, %vm190
      %vm198 = vmpackc.even %vm197, %vm197
      %vm199 = vmand %vm59, %vm192
      %vm200 = vmand %vm60, %vm194
      %vm201 = vmand %vm61, %vm196
      %vm202 = vmand %vm62, %vm198
      %v203 = vsel %vm199, 16843009, 0
      %v204 = vsel %vm200, 16843009, 0
      %v205 = vsel %vm201, 16843009, 0
      %v206 = vsel %vm202, 16843009, 0
      %v207 = vunpack.c.0.s8 %v203
      %v208 = vunpack.c.0.s8 %v204
      %v209 = vunpack.c.0.s8 %v205
      %v210 = vunpack.c.0.s8 %v206
      %vm211 = vcmp.ne.s32.totalorder %v207, 0
      %vm212 = vcmp.ne.s32.totalorder %v208, 0
      %vm213 = vcmp.ne.s32.totalorder %v209, 0
      %vm214 = vcmp.ne.s32.totalorder %v210, 0
      %v215 = vsel %vm211, 1, 0
      %v216 = vsel %vm212, 1, 0
      %v217 = vsel %vm213, 1, 0
      %v218 = vsel %vm214, 1, 0
      %v219 = vsel %vm79, %v215, 0
      %v220 = vsel %vm79, %v216, 0
      %v221 = vsel %vm79, %v217, 0
      %v222 = vsel %vm79, %v218, 0
      %v223 = vadd.s32 %v219, %v220
      %v224 = vadd.s32 %v221, %v222
      %v225 = vadd.s32 %v223, %v224
      %v226 = vand.u32 %v225, 65535
      %v227 = vshrl.u32 %v225, 16
      %v228 = vcvt.s32.f32 %v226
      %v229 = vcvt.s32.f32 %v227
      %230 = vadd.xlane.f32.xlu0 %v228
      %v231 = vpop.xlane.xlu0 %230
      %232 = vadd.xlane.f32.xlu0 %v229
      %v233 = vpop.xlane.xlu0 %232
      %v234 = vcvt.f32.s32 %v231
      %v235 = vcvt.f32.s32 %v233
      %v236 = vshll.u32 %v235, 16
      %v237 = vadd.s32 %v236, %v234
      %v238 = vrot.slane %v237, 4
      %v239 = vadd.s32 %v237, %v238
      %v240 = vrot.slane %v239, 2
      %v241 = vadd.s32 %v239, %v240
      %v242 = vrot.slane %v241, 1
      %v243 = vadd.s32 %v241, %v242
      %s244 = vtos %v243
      %v245 = vstv %s244
      %vm246 = vcmp.le.s32.totalorder %v245, %v118
      %v247 = vsel %vm246, %v183, %v179
      %vm248 = vcmp.lt.s32.totalorder %v152, %v184
      %vm249 = vcmp.lt.s32.totalorder %v153, %v184
      %vm250 = vcmp.lt.s32.totalorder %v154, %v184
      %vm251 = vcmp.lt.s32.totalorder %v155, %v184
      %vm252 = vmpackc.low %vm248, %vm248
      %vm253 = vmpackc.even %vm252, %vm252
      %vm254 = vmpackc.low %vm249, %vm249
      %vm255 = vmpackc.even %vm254, %vm254
      %vm256 = vmpackc.low %vm250, %vm250
      %vm257 = vmpackc.even %vm256, %vm256
      %vm258 = vmpackc.low %vm251, %vm251
      %vm259 = vmpackc.even %vm258, %vm258
      %vm260 = vmand %vm59, %vm253
      %vm261 = vmand %vm60, %vm255
      %vm262 = vmand %vm61, %vm257
      %vm263 = vmand %vm62, %vm259
      %v264 = vsel %vm260, 16843009, 0
      %v265 = vsel %vm261, 16843009, 0
      %v266 = vsel %vm262, 16843009, 0
      %v267 = vsel %vm263, 16843009, 0
      %v268 = vunpack.c.0.s8 %v264
      %v269 = vunpack.c.0.s8 %v265
      %v270 = vunpack.c.0.s8 %v266
      %v271 = vunpack.c.0.s8 %v267
      %vm272 = vcmp.ne.s32.totalorder %v268, 0
      %vm273 = vcmp.ne.s32.totalorder %v269, 0
      %vm274 = vcmp.ne.s32.totalorder %v270, 0
      %vm275 = vcmp.ne.s32.totalorder %v271, 0
      %v276 = vsel %vm272, 1, 0
      %v277 = vsel %vm273, 1, 0
      %v278 = vsel %vm274, 1, 0
      %v279 = vsel %vm275, 1, 0
      %v280 = vsel %vm79, %v276, 0
      %v281 = vsel %vm79, %v277, 0
      %v282 = vsel %vm79, %v278, 0
      %v283 = vsel %vm79, %v279, 0
      %v284 = vadd.s32 %v280, %v281
      %v285 = vadd.s32 %v282, %v283
      %v286 = vadd.s32 %v284, %v285
      %v287 = vand.u32 %v286, 65535
      %v288 = vshrl.u32 %v286, 16
      %v289 = vcvt.s32.f32 %v287
      %v290 = vcvt.s32.f32 %v288
      %291 = vadd.xlane.f32.xlu0 %v289
      %v292 = vpop.xlane.xlu0 %291
      %293 = vadd.xlane.f32.xlu0 %v290
      %v294 = vpop.xlane.xlu0 %293
      %v295 = vcvt.f32.s32 %v292
      %v296 = vcvt.f32.s32 %v294
      %v297 = vshll.u32 %v296, 16
      %v298 = vadd.s32 %v297, %v295
      %v299 = vrot.slane %v298, 4
      %v300 = vadd.s32 %v298, %v299
      %v301 = vrot.slane %v300, 2
      %v302 = vadd.s32 %v300, %v301
      %v303 = vrot.slane %v302, 1
      %v304 = vadd.s32 %v302, %v303
      %s305 = vtos %v304
      %v306 = vstv %s305
      %vm307 = vcmp.le.s32.totalorder %v306, %v134
      %v308 = vsel %vm307, %v184, %v180
      %vm309 = vcmp.lt.s32.totalorder %v168, %v185
      %vm310 = vcmp.lt.s32.totalorder %v169, %v185
      %vm311 = vcmp.lt.s32.totalorder %v170, %v185
      %vm312 = vcmp.lt.s32.totalorder %v171, %v185
      %vm313 = vmpackc.low %vm309, %vm309
      %vm314 = vmpackc.even %vm313, %vm313
      %vm315 = vmpackc.low %vm310, %vm310
      %vm316 = vmpackc.even %vm315, %vm315
      %vm317 = vmpackc.low %vm311, %vm311
      %vm318 = vmpackc.even %vm317, %vm317
      %vm319 = vmpackc.low %vm312, %vm312
      %vm320 = vmpackc.even %vm319, %vm319
      %vm321 = vmand %vm59, %vm314
      %vm322 = vmand %vm60, %vm316
      %vm323 = vmand %vm61, %vm318
      %vm324 = vmand %vm62, %vm320
      %v325 = vsel %vm321, 16843009, 0
      %v326 = vsel %vm322, 16843009, 0
      %v327 = vsel %vm323, 16843009, 0
      %v328 = vsel %vm324, 16843009, 0
      %v329 = vunpack.c.0.s8 %v325
      %v330 = vunpack.c.0.s8 %v326
      %v331 = vunpack.c.0.s8 %v327
      %v332 = vunpack.c.0.s8 %v328
      %vm333 = vcmp.ne.s32.totalorder %v329, 0
      %vm334 = vcmp.ne.s32.totalorder %v330, 0
      %vm335 = vcmp.ne.s32.totalorder %v331, 0
      %vm336 = vcmp.ne.s32.totalorder %v332, 0
      %v337 = vsel %vm333, 1, 0
      %v338 = vsel %vm334, 1, 0
      %v339 = vsel %vm335, 1, 0
      %v340 = vsel %vm336, 1, 0
      %v341 = vsel %vm79, %v337, 0
      %v342 = vsel %vm79, %v338, 0
      %v343 = vsel %vm79, %v339, 0
      %v344 = vsel %vm79, %v340, 0
      %v345 = vadd.s32 %v341, %v342
      %v346 = vadd.s32 %v343, %v344
      %v347 = vadd.s32 %v345, %v346
      %v348 = vand.u32 %v347, 65535
      %v349 = vshrl.u32 %v347, 16
      %v350 = vcvt.s32.f32 %v348
      %v351 = vcvt.s32.f32 %v349
      %352 = vadd.xlane.f32.xlu0 %v350
      %v353 = vpop.xlane.xlu0 %352
      %354 = vadd.xlane.f32.xlu0 %v351
      %v355 = vpop.xlane.xlu0 %354
      %v356 = vcvt.f32.s32 %v353
      %v357 = vcvt.f32.s32 %v355
      %v358 = vshll.u32 %v357, 16
      %v359 = vadd.s32 %v358, %v356
      %v360 = vrot.slane %v359, 4
      %v361 = vadd.s32 %v359, %v360
      %v362 = vrot.slane %v361, 2
      %v363 = vadd.s32 %v361, %v362
      %v364 = vrot.slane %v363, 1
      %v365 = vadd.s32 %v363, %v364
      %s366 = vtos %v365
      %v367 = vstv %s366
      %vm368 = vcmp.le.s32.totalorder %v367, %v118
      %v369 = vsel %vm368, %v185, %v181
      %vm370 = vcmp.lt.s32.totalorder %v168, %v186
      %vm371 = vcmp.lt.s32.totalorder %v169, %v186
      %vm372 = vcmp.lt.s32.totalorder %v170, %v186
      %vm373 = vcmp.lt.s32.totalorder %v171, %v186
      %vm374 = vmpackc.low %vm370, %vm370
      %vm375 = vmpackc.even %vm374, %vm374
      %vm376 = vmpackc.low %vm371, %vm371
      %vm377 = vmpackc.even %vm376, %vm376
      %vm378 = vmpackc.low %vm372, %vm372
      %vm379 = vmpackc.even %vm378, %vm378
      %vm380 = vmpackc.low %vm373, %vm373
      %vm381 = vmpackc.even %vm380, %vm380
      %vm382 = vmand %vm59, %vm375
      %vm383 = vmand %vm60, %vm377
      %vm384 = vmand %vm61, %vm379
      %vm385 = vmand %vm62, %vm381
      %v386 = vsel %vm382, 16843009, 0
      %v387 = vsel %vm383, 16843009, 0
      %v388 = vsel %vm384, 16843009, 0
      %v389 = vsel %vm385, 16843009, 0
      %v390 = vunpack.c.0.s8 %v386
      %v391 = vunpack.c.0.s8 %v387
      %v392 = vunpack.c.0.s8 %v388
      %v393 = vunpack.c.0.s8 %v389
      %vm394 = vcmp.ne.s32.totalorder %v390, 0
      %vm395 = vcmp.ne.s32.totalorder %v391, 0
      %vm396 = vcmp.ne.s32.totalorder %v392, 0
      %vm397 = vcmp.ne.s32.totalorder %v393, 0
      %v398 = vsel %vm394, 1, 0
      %v399 = vsel %vm395, 1, 0
      %v400 = vsel %vm396, 1, 0
      %v401 = vsel %vm397, 1, 0
      %v402 = vsel %vm79, %v398, 0
      %v403 = vsel %vm79, %v399, 0
      %v404 = vsel %vm79, %v400, 0
      %v405 = vsel %vm79, %v401, 0
      %v406 = vadd.s32 %v402, %v403
      %v407 = vadd.s32 %v404, %v405
      %v408 = vadd.s32 %v406, %v407
      %v409 = vand.u32 %v408, 65535
      %v410 = vshrl.u32 %v408, 16
      %v411 = vcvt.s32.f32 %v409
      %v412 = vcvt.s32.f32 %v410
      %413 = vadd.xlane.f32.xlu0 %v411
      %v414 = vpop.xlane.xlu0 %413
      %415 = vadd.xlane.f32.xlu0 %v412
      %v416 = vpop.xlane.xlu0 %415
      %v417 = vcvt.f32.s32 %v414
      %v418 = vcvt.f32.s32 %v416
      %v419 = vshll.u32 %v418, 16
      %v420 = vadd.s32 %v419, %v417
      %v421 = vrot.slane %v420, 4
      %v422 = vadd.s32 %v420, %v421
      %v423 = vrot.slane %v422, 2
      %v424 = vadd.s32 %v422, %v423
      %v425 = vrot.slane %v424, 1
      %v426 = vadd.s32 %v424, %v425
      %s427 = vtos %v426
      %v428 = vstv %s427
      %vm429 = vcmp.le.s32.totalorder %v428, %v134
      %v430 = vsel %vm429, %v186, %v182
      %v431 = vshrl.u32 %v178, 1
    $region26: #{trimmed_procrustes_loss.2} parent=1 // loop_footer
      %s177 = sadd.s32 1, %s173
    $region27: #{trimmed_procrustes_loss.2} parent=1 // loop_footer_branch
      %172 = sbr.rel target = $region23
    $region28: #{trimmed_procrustes_loss.2} parent=1 // loop_exit
      _
    %vm432 = vcmp.ge.s32.totalorder %v179, 0
    %v433 = vxor.u32 %v179, 2147483647
    %v434 = vsel %vm432, %v179, %v433
    %vm436 = vcmp.ge.s32.totalorder %v180, 0
    %v437 = vxor.u32 %v180, 2147483647
    %v438 = vsel %vm436, %v180, %v437
    %vm440 = vcmp.ge.s32.totalorder %v181, 0
    %v441 = vxor.u32 %v181, 2147483647
    %v442 = vsel %vm440, %v181, %v441
    %vm444 = vcmp.ge.s32.totalorder %v182, 0
    %v445 = vxor.u32 %v182, 2147483647
    %v446 = vsel %vm444, %v182, %v445
    %v448 = vsub.f32 %v438, %v434
    %v449 = vadd.f32 %v448, 1e-08
    %v450 = vrcp.pop %v449
    %v451 = vmul.f32 1.0, %v450
    %v452 = vsub.f32 %v446, %v442
    %v453 = vadd.f32 %v452, 1e-08
    %v454 = vrcp.pop %v453
    %v455 = vmul.f32 1.0, %v454
    %v456 = vsub.f32 %v47, %v434
    %v457 = vsub.f32 %v48, %v434
    %v458 = vsub.f32 %v49, %v434
    %v459 = vsub.f32 %v50, %v434
    %v460 = vmul.f32 %v456, %v451
    %v461 = vmul.f32 %v457, %v451
    %v462 = vmul.f32 %v458, %v451
    %v463 = vmul.f32 %v459, %v451
    %v464 = vmax.f32 %v460, 0.0
    %v465 = vmax.f32 %v461, 0.0
    %v466 = vmax.f32 %v462, 0.0
    %v467 = vmax.f32 %v463, 0.0
    %v468 = vmin.f32 %v464, 1.0
    %v469 = vmin.f32 %v465, 1.0
    %v470 = vmin.f32 %v466, 1.0
    %v471 = vmin.f32 %v467, 1.0
    %v472 = vsub.f32 %v51, %v442
    %v473 = vsub.f32 %v52, %v442
    %v474 = vsub.f32 %v53, %v442
    %v475 = vsub.f32 %v54, %v442
    %v476 = vmul.f32 %v472, %v455
    %v477 = vmul.f32 %v473, %v455
    %v478 = vmul.f32 %v474, %v455
    %v479 = vmul.f32 %v475, %v455
    %v480 = vmax.f32 %v476, 0.0
    %v481 = vmax.f32 %v477, 0.0
    %v482 = vmax.f32 %v478, 0.0
    %v483 = vmax.f32 %v479, 0.0
    %v484 = vmin.f32 %v480, 1.0
    %v485 = vmin.f32 %v481, 1.0
    %v486 = vmin.f32 %v482, 1.0
    %v487 = vmin.f32 %v483, 1.0
    %v488 = vsub.f32 %v468, %v484
    %v489 = vsub.f32 %v469, %v485
    %v490 = vsub.f32 %v470, %v486
    %v491 = vsub.f32 %v471, %v487
    %v492 = vand.u32 2147483647, %v488
    %v493 = vand.u32 2147483647, %v489
    %v494 = vand.u32 2147483647, %v490
    %v495 = vand.u32 2147483647, %v491
    %v496 = vsub.s32 %v139, 1
    loop: start=0, step=1, limit=31
    $region29: #{trimmed_procrustes_loss.2} parent=1 // loop_pre_header
      _
    $region30: #{trimmed_procrustes_loss.2} parent=1 // loop_header
      %s498 = sphi 0, %s502
      %p499 = scmp.ge.s32.totalorder %s498, 31
      %v503 = vphi 1073741824, %v571
      %v504 = vphi 0, %v570
    $region31: #{trimmed_procrustes_loss.2} parent=1 // loop_header_branch
      %501 = sbr.rel (%p499) target = $region35
    $region32: #{trimmed_procrustes_loss.2} parent=1 // loop_body
      %v509 = vxor.u32 %v504, %v503
      %vm510 = vcmp.lt.s32.totalorder %v492, %v509
      %vm511 = vcmp.lt.s32.totalorder %v493, %v509
      %vm512 = vcmp.lt.s32.totalorder %v494, %v509
      %vm513 = vcmp.lt.s32.totalorder %v495, %v509
      %vm514 = vmpackc.low %vm510, %vm510
      %vm515 = vmpackc.even %vm514, %vm514
      %vm516 = vmpackc.low %vm511, %vm511
      %vm517 = vmpackc.even %vm516, %vm516
      %vm518 = vmpackc.low %vm512, %vm512
      %vm519 = vmpackc.even %vm518, %vm518
      %vm520 = vmpackc.low %vm513, %vm513
      %vm521 = vmpackc.even %vm520, %vm520
      %vm522 = vmand %vm59, %vm515
      %vm523 = vmand %vm60, %vm517
      %vm524 = vmand %vm61, %vm519
      %vm525 = vmand %vm62, %vm521
      %v526 = vsel %vm522, 16843009, 0
      %v527 = vsel %vm523, 16843009, 0
      %v528 = vsel %vm524, 16843009, 0
      %v529 = vsel %vm525, 16843009, 0
      %v530 = vunpack.c.0.s8 %v526
      %v531 = vunpack.c.0.s8 %v527
      %v532 = vunpack.c.0.s8 %v528
      %v533 = vunpack.c.0.s8 %v529
      %vm534 = vcmp.ne.s32.totalorder %v530, 0
      %vm535 = vcmp.ne.s32.totalorder %v531, 0
      %vm536 = vcmp.ne.s32.totalorder %v532, 0
      %vm537 = vcmp.ne.s32.totalorder %v533, 0
      %v538 = vsel %vm534, 1, 0
      %v539 = vsel %vm535, 1, 0
      %v540 = vsel %vm536, 1, 0
      %v541 = vsel %vm537, 1, 0
      %v542 = vsel %vm79, %v538, 0
      %v543 = vsel %vm79, %v539, 0
      %v544 = vsel %vm79, %v540, 0
      %v545 = vsel %vm79, %v541, 0
      %v546 = vadd.s32 %v542, %v543
      %v547 = vadd.s32 %v544, %v545
      %v548 = vadd.s32 %v546, %v547
      %v549 = vand.u32 %v548, 65535
      %v550 = vshrl.u32 %v548, 16
      %v551 = vcvt.s32.f32 %v549
      %v552 = vcvt.s32.f32 %v550
      %553 = vadd.xlane.f32.xlu0 %v551
      %v554 = vpop.xlane.xlu0 %553
      %555 = vadd.xlane.f32.xlu0 %v552
      %v556 = vpop.xlane.xlu0 %555
      %v557 = vcvt.f32.s32 %v554
      %v558 = vcvt.f32.s32 %v556
      %v559 = vshll.u32 %v558, 16
      %v560 = vadd.s32 %v559, %v557
      %v561 = vrot.slane %v560, 4
      %v562 = vadd.s32 %v560, %v561
      %v563 = vrot.slane %v562, 2
      %v564 = vadd.s32 %v562, %v563
      %v565 = vrot.slane %v564, 1
      %v566 = vadd.s32 %v564, %v565
      %s567 = vtos %v566
      %v568 = vstv %s567
      %vm569 = vcmp.le.s32.totalorder %v568, %v496
      %v570 = vsel %vm569, %v509, %v504
      %v571 = vshrl.u32 %v503, 1
    $region33: #{trimmed_procrustes_loss.2} parent=1 // loop_footer
      %s502 = sadd.s32 1, %s498
    $region34: #{trimmed_procrustes_loss.2} parent=1 // loop_footer_branch
      %497 = sbr.rel target = $region30
    $region35: #{trimmed_procrustes_loss.2} parent=1 // loop_exit
      _
    %vm573 = vcmp.lt.f32.partialorder %v492, %v504
    %vm574 = vcmp.lt.f32.partialorder %v493, %v504
    %vm575 = vcmp.lt.f32.partialorder %v494, %v504
    %vm576 = vcmp.lt.f32.partialorder %v495, %v504
    %vm577 = vmpackc.low %vm573, %vm573
    %vm578 = vmpackc.even %vm577, %vm577
    %vm579 = vmpackc.low %vm574, %vm574
    %vm580 = vmpackc.even %vm579, %vm579
    %vm581 = vmpackc.low %vm575, %vm575
    %vm582 = vmpackc.even %vm581, %vm581
    %vm583 = vmpackc.low %vm576, %vm576
    %vm584 = vmpackc.even %vm583, %vm583
    %vm585 = vmand %vm59, %vm578
    %vm586 = vmand %vm60, %vm580
    %vm587 = vmand %vm61, %vm582
    %vm588 = vmand %vm62, %vm584
    %v589 = vsel %vm585, 16843009, 0
    %v590 = vsel %vm586, 16843009, 0
    %v591 = vsel %vm587, 16843009, 0
    %v592 = vsel %vm588, 16843009, 0
    %v593 = vunpack.c.0.s8 %v589
    %v594 = vunpack.c.0.s8 %v590
    %v595 = vunpack.c.0.s8 %v591
    %v596 = vunpack.c.0.s8 %v592
    %vm597 = vcmp.ne.s32.totalorder %v593, 0
    %vm598 = vcmp.ne.s32.totalorder %v594, 0
    %vm599 = vcmp.ne.s32.totalorder %v595, 0
    %vm600 = vcmp.ne.s32.totalorder %v596, 0
    %v601 = vsel %vm597, 1, 0
    %v602 = vsel %vm598, 1, 0
    %v603 = vsel %vm599, 1, 0
    %v604 = vsel %vm600, 1, 0
    %v605 = vcvt.s32.f32 %v601
    %v606 = vcvt.s32.f32 %v602
    %v607 = vcvt.s32.f32 %v603
    %v608 = vcvt.s32.f32 %v604
    %v609 = vsel %vm79, %v605, 0.0
    %v610 = vsel %vm79, %v606, 0.0
    %v611 = vadd.f32 %v609, %v610
    %v612 = vsel %vm79, %v607, 0.0
    %v613 = vadd.f32 %v611, %v612
    %v614 = vsel %vm79, %v608, 0.0
    %v615 = vadd.f32 %v613, %v614
    %616 = vadd.xlane.f32.xlu0 %v615
    %v617 = vpop.xlane.xlu0 %616
    %v618 = vrot.slane %v617, 4
    %v619 = vadd.f32 %v617, %v618
    %v620 = vrot.slane %v619, 2
    %v621 = vadd.f32 %v619, %v620
    %v622 = vrot.slane %v621, 1
    %v623 = vadd.f32 %v621, %v622
    %s624 = vtos %v623
    %v625 = vstv %s624
    %v626 = vsel %vm597, %v492, 0.0
    %v627 = vsel %vm598, %v493, 0.0
    %v628 = vsel %vm599, %v494, 0.0
    %v629 = vsel %vm600, %v495, 0.0
    %v630 = vsel %vm79, %v626, 0.0
    %v631 = vsel %vm79, %v627, 0.0
    %v632 = vadd.f32 %v630, %v631
    %v633 = vsel %vm79, %v628, 0.0
    %v634 = vadd.f32 %v632, %v633
    %v635 = vsel %vm79, %v629, 0.0
    %v636 = vadd.f32 %v634, %v635
    %637 = vadd.xlane.f32.xlu0 %v636
    %v638 = vpop.xlane.xlu0 %637
    %v639 = vrot.slane %v638, 4
    %v640 = vadd.f32 %v638, %v639
    %v641 = vrot.slane %v640, 2
    %v642 = vadd.f32 %v640, %v641
    %v643 = vrot.slane %v642, 1
    %v644 = vadd.f32 %v642, %v643
    %s645 = vtos %v644
    %v646 = vstv %s645
    %v647 = vcvt.s32.f32 %v139
    %v648 = vsub.f32 %v647, %v625
    %v649 = vmax.f32 %v648, 0.0
    %v650 = vmul.f32 %v649, %v504
    %v651 = vadd.f32 %v646, %v650
    %vm652 = vcmp.gt.s32.totalorder %v106, 0
    %vm653 = vcmp.gt.s32.totalorder %v139, 0
    %vm654 = vmand %vm652, %vm653
    %vm655 = vcmp.gt.s32.totalorder %v106, 1
    %v656 = vsel %vm655, %v106, 1
    %v657 = vcvt.s32.f32 %v656
    %v658 = vmul.f32 %v657, 2.0
    %v659 = vrcp.pop %v658
    %v660 = vmul.f32 %v651, %v659
    %v661 = vsel %vm654, %v660, 0.0
    %vm662 = vcmask 0
    %663 = vst.msk [vmem:[#allocation7] sm:$0x1] %vm662, %v661
    %v664 = vlaneseq
    %v665 = vand.u32 %v664, 127
    %v666 = vsel %vm652, 1, 0
    %v667 = vcvt.s32.f32 %v666
    %vm668 = vcmp.eq.s32.totalorder %v665, 0
    %v669 = vsel %vm668, %v434, 0.0
    %vm670 = vcmp.eq.s32.totalorder %v665, 1
    %v671 = vsel %vm670, %v438, 0.0
    %v672 = vadd.f32 %v669, %v671
    %vm673 = vcmp.eq.s32.totalorder %v665, 2
    %v674 = vsel %vm673, %v442, 0.0
    %v675 = vadd.f32 %v672, %v674
    %vm676 = vcmp.eq.s32.totalorder %v665, 3
    %v677 = vsel %vm676, %v446, 0.0
    %v678 = vadd.f32 %v675, %v677
    %vm679 = vcmp.eq.s32.totalorder %v665, 4
    %v680 = vsel %vm679, %v667, 0.0
    %v681 = vadd.f32 %v678, %v680
    %vm682 = vcmask 57344
    %683 = vst.msk [vmem:[%s4] sm:$0x1] %vm682, %v681
    // Predicated region
    $region36: #{trimmed_procrustes_loss.2} parent=1 // pred_check
      _
    $region37: #{trimmed_procrustes_loss.2} parent=1 // pred_check_branch
      %685 = sbr.rel (0) target = $region39
    $region38: #{trimmed_procrustes_loss.2} parent=1 // pred_region
      %s687 = ssub.s32 16, 16
      %688 = vsyncadd [#allocation4], %s687
      %s690 = sshll.u32 [#allocation7], 4
      %s691 = int_to_ptr.vmem [resolvable:$true] %s690
      %693 = dma.vmem_to_hbm [thread:$0]  %s691, 16, %s3, [#allocation4]
    $region39: #{trimmed_procrustes_loss.2} parent=1 // pred_fallthru
      _
    // Predicated region
    $region40: #{trimmed_procrustes_loss.2} parent=1 // pred_check
      _
    $region41: #{trimmed_procrustes_loss.2} parent=1 // pred_check_branch
      %695 = sbr.rel (0) target = $region43
    $region42: #{trimmed_procrustes_loss.2} parent=1 // pred_region
      _
    $region43: #{trimmed_procrustes_loss.2} parent=1 // pred_fallthru
      _
    // Predicated region
    $region44: #{trimmed_procrustes_loss.2} parent=1 // pred_check
      _
    $region45: #{trimmed_procrustes_loss.2} parent=1 // pred_check_branch
      %697 = sbr.rel (0) target = $region47
    $region46: #{trimmed_procrustes_loss.2} parent=1 // pred_region
      %698 = dma.done [#allocation4], 16
    $region47: #{trimmed_procrustes_loss.2} parent=1 // pred_fallthru
      _
    // Predicated region
    $region48: #{trimmed_procrustes_loss.2} parent=1 // pred_check
      _
    $region49: #{trimmed_procrustes_loss.2} parent=1 // pred_check_branch
      %700 = sbr.rel (0) target = $region51
    $region50: #{trimmed_procrustes_loss.2} parent=1 // pred_region
      _
    $region51: #{trimmed_procrustes_loss.2} parent=1 // pred_fallthru
      _
    %701 = vsyncpa [#allocation3], 1
    %702 = vsyncpa [#allocation6], 1
    %703 = vsyncpa [#allocation4], 1

// kernel: trimmed_procrustes_loss.3
$region0: #{trimmed_procrustes_loss.3}
  #allocation0 [shape = 'u32[]', space=smem, size = 0x4, offset = 0x4, fixed_abs, tag = 'smem constant byte address 0x4 - core index']
  #allocation1 [shape = 'u32[144,128]{1,0:T(1,128)}', space=vmem, size = 0x12000, scoped, tag = 'internal scratch']
  %s0 = inlined_call_operand.vmem [shape: f32[1,8], index: 0, kind: input, shape index: {}]
  %s1 = inlined_call_operand.vmem [shape: f32[2,16,16], index: 1, kind: input, shape index: {}]
  %s2 = inlined_call_operand.vmem [shape: f32[2,16,16], index: 2, kind: input, shape index: {}]
  %s3 = inlined_call_operand.vmem [shape: s8[2,16,16], index: 3, kind: input, shape index: {}]
  %s4 = inlined_call_operand.vmem [shape: f32[2,1,8], index: 4, kind: output, shape index: {}]
  %s5 = sld [smem:[#allocation0]]
  $region49: #{trimmed_procrustes_loss.3} parent=0
    _
  %s7 = ssub.s32 1, %s5
  %s8 = scalar_select 0, %s7, %s5
  loop: start=0, step=1, limit=4
  $region2: #{trimmed_procrustes_loss.3} parent=0 // loop_pre_header
    _
  $region3: #{trimmed_procrustes_loss.3} parent=0 // loop_header
    %s10 = sphi 0, %s14
    %p11 = scmp.ge.s32.totalorder %s10, 4
    %s18 = sphi 0, %s18
    %s20 = sphi 0, %s18
    %s21 = sphi 0, %s20
    %s35 = sphi 0, %s21
    %s41 = sphi 0, %s43
    %s44 = sphi 0, %s41
    %s45 = sphi 0, %s44
    %s61 = sphi 0, %s45
    %s67 = sphi 0, %s69
    %s70 = sphi 0, %s67
    %s71 = sphi 0, %s70
    %s87 = sphi 0, %s71
    %s93 = sphi 0, %s95
    %s96 = sphi 0, %s93
    %s97 = sphi 0, %s96
    %s113 = sphi 0, %s97
    %s119 = sphi 0, %s121
    %s122 = sphi 0, %s119
    %s123 = sphi 0, %s122
    %s139 = sphi 0, %s123
  $region4: #{trimmed_procrustes_loss.3} parent=0 // loop_header_branch
    %13 = sbr.rel (%p11) target = $region8
  $region5: #{trimmed_procrustes_loss.3} parent=0 // loop_body
    %s15 = ssub.s32 %s10, 1
    %s16 = ssub.s32 %s10, 2
    %s17 = sadd.s32 %s10, 1
    %s19 = sadd.s32 %s18, 1
    %p22 = scmp.eq.s32.totalorder %s10, 1
    %p23 = scmp.ne.s32.totalorder %s18, %s20
    %p24 = scmp.eq.s32.totalorder %s10, 0
    %p25 = por %p23, %p24
    %p26 = scmp.ne.s32.totalorder %s18, %s20
    %p27 = scmp.eq.s32.totalorder %s15, 1
    %p28 = por %p26, %p27
    %p29 = scmp.ne.s32.totalorder %s20, %s21
    %p30 = scmp.eq.s32.totalorder %s15, 0
    %p31 = por %p29, %p30
    %p32 = scmp.ne.s32.totalorder %s20, %s21
    %p33 = scmp.eq.s32.totalorder %s16, 1
    %p34 = por %p32, %p33
    %p36 = scmp.ne.s32.totalorder %s21, %s35
    %p37 = scmp.eq.s32.totalorder %s16, 0
    %p38 = por %p36, %p37
    %s39 = ssub.s32 %s10, %s17
    %p40 = scmp.eq.s32.totalorder %s39, 0
    %s42 = sadd.s32 %s41, 1
    %s43 = scalar_select %p40, %s41, %s42
    %p46 = pneg %p40
    %p47 = scmp.eq.s32.totalorder %s10, 1
    %p48 = por %p46, %p47
    %p49 = scmp.ne.s32.totalorder %s41, %s44
    %p50 = scmp.eq.s32.totalorder %s10, 0
    %p51 = por %p49, %p50
    %p52 = scmp.ne.s32.totalorder %s41, %s44
    %p53 = scmp.eq.s32.totalorder %s15, 1
    %p54 = por %p52, %p53
    %p55 = scmp.ne.s32.totalorder %s44, %s45
    %p56 = scmp.eq.s32.totalorder %s15, 0
    %p57 = por %p55, %p56
    %p58 = scmp.ne.s32.totalorder %s44, %s45
    %p59 = scmp.eq.s32.totalorder %s16, 1
    %p60 = por %p58, %p59
    %p62 = scmp.ne.s32.totalorder %s45, %s61
    %p63 = scmp.eq.s32.totalorder %s16, 0
    %p64 = por %p62, %p63
    %s65 = ssub.s32 %s10, %s17
    %p66 = scmp.eq.s32.totalorder %s65, 0
    %s68 = sadd.s32 %s67, 1
    %s69 = scalar_select %p66, %s67, %s68
    %p72 = pneg %p66
    %p73 = scmp.eq.s32.totalorder %s10, 1
    %p74 = por %p72, %p73
    %p75 = scmp.ne.s32.totalorder %s67, %s70
    %p76 = scmp.eq.s32.totalorder %s10, 0
    %p77 = por %p75, %p76
    %p78 = scmp.ne.s32.totalorder %s67, %s70
    %p79 = scmp.eq.s32.totalorder %s15, 1
    %p80 = por %p78, %p79
    %p81 = scmp.ne.s32.totalorder %s70, %s71
    %p82 = scmp.eq.s32.totalorder %s15, 0
    %p83 = por %p81, %p82
    %p84 = scmp.ne.s32.totalorder %s70, %s71
    %p85 = scmp.eq.s32.totalorder %s16, 1
    %p86 = por %p84, %p85
    %p88 = scmp.ne.s32.totalorder %s71, %s87
    %p89 = scmp.eq.s32.totalorder %s16, 0
    %p90 = por %p88, %p89
    %s91 = ssub.s32 %s10, %s17
    %p92 = scmp.eq.s32.totalorder %s91, 0
    %s94 = sadd.s32 %s93, 1
    %s95 = scalar_select %p92, %s93, %s94
    %p98 = pneg %p92
    %p99 = scmp.eq.s32.totalorder %s10, 1
    %p100 = por %p98, %p99
    %p101 = scmp.ne.s32.totalorder %s93, %s96
    %p102 = scmp.eq.s32.totalorder %s10, 0
    %p103 = por %p101, %p102
    %p104 = scmp.ne.s32.totalorder %s93, %s96
    %p105 = scmp.eq.s32.totalorder %s15, 1
    %p106 = por %p104, %p105
    %p107 = scmp.ne.s32.totalorder %s96, %s97
    %p108 = scmp.eq.s32.totalorder %s15, 0
    %p109 = por %p107, %p108
    %p110 = scmp.ne.s32.totalorder %s96, %s97
    %p111 = scmp.eq.s32.totalorder %s16, 1
    %p112 = por %p110, %p111
    %p114 = scmp.ne.s32.totalorder %s97, %s113
    %p115 = scmp.eq.s32.totalorder %s16, 0
    %p116 = por %p114, %p115
    %s117 = ssub.s32 %s10, %s17
    %p118 = scmp.eq.s32.totalorder %s117, 0
    %s120 = sadd.s32 %s119, 1
    %s121 = scalar_select %p118, %s119, %s120
    %p124 = pneg %p118
    %p125 = scmp.eq.s32.totalorder %s10, 1
    %p126 = por %p124, %p125
    %p127 = scmp.ne.s32.totalorder %s119, %s122
    %p128 = scmp.eq.s32.totalorder %s10, 0
    %p129 = por %p127, %p128
    %p130 = scmp.ne.s32.totalorder %s119, %s122
    %p131 = scmp.eq.s32.totalorder %s15, 1
    %p132 = por %p130, %p131
    %p133 = scmp.ne.s32.totalorder %s122, %s123
    %p134 = scmp.eq.s32.totalorder %s15, 0
    %p135 = por %p133, %p134
    %p136 = scmp.ne.s32.totalorder %s122, %s123
    %p137 = scmp.eq.s32.totalorder %s16, 1
    %p138 = por %p136, %p137
    %p140 = scmp.ne.s32.totalorder %s123, %s139
    %p141 = scmp.eq.s32.totalorder %s16, 0
    %p142 = por %p140, %p141
    %p143 = scmp.le.s32.totalorder 1, %s10
    %p144 = scmp.lt.s32.totalorder %s10, 3
    %p145 = pnand %p143, %p144
    %p146 = pneg %p145
    // Predicated region
    $region9: #{trimmed_procrustes_loss.3} parent=5 // pred_check
      _
    $region10: #{trimmed_procrustes_loss.3} parent=5 // pred_check_branch
      %148 = sbr.rel (%p145) target = $region12
    $region11: #{trimmed_procrustes_loss.3} parent=5 // pred_region
      %s149 = ssub.s32 %s10, 1
      // Predicated region
      $region13: #{trimmed_procrustes_loss.3} parent=11 // pred_check
        %p150 = pneg %p31
      $region14: #{trimmed_procrustes_loss.3} parent=11 // pred_check_branch
        %152 = sbr.rel (%p150) target = $region16
      $region15: #{trimmed_procrustes_loss.3} parent=11 // pred_region
        _
      $region16: #{trimmed_procrustes_loss.3} parent=11 // pred_fallthru
        _
    $region12: #{trimmed_procrustes_loss.3} parent=5 // pred_fallthru
      _
    %p153 = scmp.lt.s32.totalorder %s10, 2
    // Predicated region
    $region17: #{trimmed_procrustes_loss.3} parent=5 // pred_check
      %p154 = pneg %p153
    $region18: #{trimmed_procrustes_loss.3} parent=5 // pred_check_branch
      %156 = sbr.rel (%p154) target = $region20
    $region19: #{trimmed_procrustes_loss.3} parent=5 // pred_region
      // Predicated region
      $region21: #{trimmed_procrustes_loss.3} parent=19 // pred_check
        %p157 = pneg %p51
      $region22: #{trimmed_procrustes_loss.3} parent=19 // pred_check_branch
        %159 = sbr.rel (%p157) target = $region24
      $region23: #{trimmed_procrustes_loss.3} parent=19 // pred_region
        %p160 = scmp.lt.s32.totalorder %s10, 1
        %s161 = scalar_select %p160, %s10, 1
        %s162 = smul.addr %s161, 2
        %s163 = smul.addr %s162, 8
        %s164 = scalar_lea.vmem %s1, %s163
      $region24: #{trimmed_procrustes_loss.3} parent=19 // pred_fallthru
        _
      // Predicated region
      $region25: #{trimmed_procrustes_loss.3} parent=19 // pred_check
        %p165 = pneg %p77
      $region26: #{trimmed_procrustes_loss.3} parent=19 // pred_check_branch
        %167 = sbr.rel (%p165) target = $region28
      $region27: #{trimmed_procrustes_loss.3} parent=19 // pred_region
        %p168 = scmp.lt.s32.totalorder %s10, 1
        %s169 = scalar_select %p168, %s10, 1
        %s170 = smul.addr %s169, 2
        %s171 = smul.addr %s170, 8
        %s172 = scalar_lea.vmem %s2, %s171
      $region28: #{trimmed_procrustes_loss.3} parent=19 // pred_fallthru
        _
      // Predicated region
      $region29: #{trimmed_procrustes_loss.3} parent=19 // pred_check
        %p173 = pneg %p103
      $region30: #{trimmed_procrustes_loss.3} parent=19 // pred_check_branch
        %175 = sbr.rel (%p173) target = $region32
      $region31: #{trimmed_procrustes_loss.3} parent=19 // pred_region
        %p176 = scmp.lt.s32.totalorder %s10, 1
        %s177 = scalar_select %p176, %s10, 1
        %s178 = smul.addr %s177, 2
        %s179 = smul.addr %s178, 2
        %s180 = scalar_lea.vmem %s3, %s179
      $region32: #{trimmed_procrustes_loss.3} parent=19 // pred_fallthru
        _
    $region20: #{trimmed_procrustes_loss.3} parent=5 // pred_fallthru
      _
    %p181 = scmp.le.s32.totalorder 1, %s10
    %p182 = scmp.lt.s32.totalorder %s10, 3
    %p183 = pnand %p181, %p182
    %p184 = pneg %p183
    // Predicated region
    $region33: #{trimmed_procrustes_loss.3} parent=5 // pred_check
      _
    $region34: #{trimmed_procrustes_loss.3} parent=5 // pred_check_branch
      %186 = sbr.rel (%p183) target = $region36
    $region35: #{trimmed_procrustes_loss.3} parent=5 // pred_region
      %s187 = ssub.s32 %s10, 1
      %p188 = pneg %p31
      %p189 = pneg %p28
      %p190 = scmp.lt.s32.totalorder %s15, 1
      %s191 = scalar_select %p190, %s15, 1
      %s192 = smul.addr %s191, 2
      %s193 = smul.addr %s192, 8
      %s194 = scalar_lea.vmem %s1, %s193
      %p195 = pneg %p57
      %p196 = pneg %p54
      %p197 = scmp.lt.s32.totalorder %s15, 1
      %s198 = scalar_select %p197, %s15, 1
      %s199 = smul.addr %s198, 2
      %s200 = smul.addr %s199, 8
      %s201 = scalar_lea.vmem %s2, %s200
      %p202 = pneg %p83
      %p203 = pneg %p80
      %p204 = scmp.lt.s32.totalorder %s15, 1
      %s205 = scalar_select %p204, %s15, 1
      %s206 = smul.addr %s205, 2
      %s207 = smul.addr %s206, 2
      %s208 = scalar_lea.vmem %s3, %s207
      %p209 = pneg %p109
      %p210 = pneg %p106
      %p211 = pneg %p135
      %p212 = pneg %p132
      %p213 = scmp.lt.s32.totalorder %s15, 1
      %s214 = scalar_select %p213, %s15, 1
      %s215 = scalar_lea.vmem %s4, %s214
      %p216 = scmp.lt.s32.totalorder %s15, 1
      %s217 = scalar_select %p216, %s15, 1
      %s218 = smul.addr %s217, 2
      %s219 = smul.addr %s218, 8
      %s220 = scalar_lea.vmem %s1, %s219
      %p221 = scmp.lt.s32.totalorder %s15, 1
      %s222 = scalar_select %p221, %s15, 1
      %s223 = smul.addr %s222, 2
      %s224 = smul.addr %s223, 8
      %s225 = scalar_lea.vmem %s2, %s224
      %p226 = scmp.lt.s32.totalorder %s15, 1
      %s227 = scalar_select %p226, %s15, 1
      %s228 = smul.addr %s227, 2
      %s229 = smul.addr %s228, 2
      %s230 = scalar_lea.vmem %s3, %s229
      %p231 = scmp.lt.s32.totalorder %s15, 1
      %s232 = scalar_select %p231, %s15, 1
      %s233 = scalar_lea.vmem %s4, %s232
      %v236 = vld [vmem:[%s0] sm:$0x1]
      %vm237 = vcmp.gt.f32.partialorder %v236, 0.5
      %v238 = vld [vmem:[%s220] sm:$0xff]
      %v239 = vld [vmem:[%s220 + $0x8] sm:$0xff]
      %v240 = vld [vmem:[%s225] sm:$0xff]
      %v241 = vld [vmem:[%s225 + $0x8] sm:$0xff]
      %v242 = vld [vmem:[%s230] sm:$0x3]
      %v243 = vld [vmem:[%s230 + $0x2] sm:$0x3]
      %vm244 = vnez %v242
      %vm245 = vnez %v243
      %v246 = vsel %vm244, 16843009, 0
      %v247 = vsel %vm245, 16843009, 0
      %v248 = vunpack.c.0.s8 %v246
      %v249 = vunpack.c.0.s8 %v247
      %vm250 = vcmp.ne.s32.totalorder %v248, 0
      %vm251 = vcmp.ne.s32.totalorder %v249, 0
      %v252 = vsel %vm250, 1, 0
      %v253 = vsel %vm251, 1, 0
      %v254 = vcvt.s32.f32 %v252
      %v255 = vcvt.s32.f32 %v253
      %257 = vrot.lane.b32.xlu0 %v236, 1
      %v258 = vpop.permute.xlu0 %257
      %v260 = vsub.f32 %v236, %v258
      %v261 = vadd.f32 %v260, 1e-08
      %v262 = vrcp.pop %v261
      %v263 = vmul.f32 1.0, %v262
      %v264 = vlaneseq
      %v265 = vshrl.u32 %v264, 7
      %v266 = vsub.s32 0, %v265
      %v267 = vrot.slane %v236, %v266
      %268 = vset.pattern.permute.xlu0 0
      %269 = vperm.xlu0 %268, %v267
      %v270 = vpop.permute.xlu0 %269
      %v272 = vsub.f32 %v238, %v270
      %v273 = vsub.f32 %v239, %v270
      %v275 = vlaneseq
      %v276 = vshrl.u32 %v275, 7
      %v277 = vsub.s32 0, %v276
      %v278 = vrot.slane %v263, %v277
      %279 = vset.pattern.permute.xlu0 1
      %280 = vperm.xlu0 %279, %v278
      %v281 = vpop.permute.xlu0 %280
      %v283 = vmul.f32 %v272, %v281
      %v284 = vmul.f32 %v273, %v281
      %v285 = vmax.f32 %v283, 0.0
      %v286 = vmax.f32 %v284, 0.0
      %v287 = vmin.f32 %v285, 1.0
      %v288 = vmin.f32 %v286, 1.0
      %v289 = vsel %vm237, 1, 0
      %v290 = vlaneseq
      %v291 = vshrl.u32 %v290, 7
      %v292 = vsub.s32 0, %v291
      %v293 = vrot.slane %v289, %v292
      %294 = vset.pattern.permute.xlu0 4
      %295 = vperm.xlu0 %294, %v293
      %v296 = vpop.permute.xlu0 %295
      %vm297 = vcmp.eq.s32.totalorder %v296, 1
      %v298 = vsel %vm297, %v287, %v238
      %v299 = vsel %vm297, %v288, %v239
      %300 = vset.pattern.permute.xlu0 2
      %301 = vperm.xlu0 %300, %v267
      %v302 = vpop.permute.xlu0 %301
      %v304 = vsub.f32 %v240, %v302
      %v305 = vsub.f32 %v241, %v302
      %306 = vset.pattern.permute.xlu0 3
      %307 = vperm.xlu0 %306, %v278
      %v308 = vpop.permute.xlu0 %307
      %v310 = vmul.f32 %v304, %v308
      %v311 = vmul.f32 %v305, %v308
      %v312 = vmax.f32 %v310, 0.0
      %v313 = vmax.f32 %v311, 0.0
      %v314 = vmin.f32 %v312, 1.0
      %v315 = vmin.f32 %v313, 1.0
      %v316 = vsel %vm297, %v314, %v240
      %v317 = vsel %vm297, %v315, %v241
      %v318 = vsub.f32 %v298, %v316
      %v319 = vsub.f32 %v299, %v317
      %v320 = vmul.f32 %v254, %v318
      %v321 = vmul.f32 %v255, %v319
      %v322 = vlaneseq
      %v323 = vand.u32 %v322, 127
      %326 = vrot.lane.b32.xlu0 %v320, 1
      %v327 = vpop.permute.xlu0 %326
      %328 = vrot.lane.b32.xlu0 %v321, 1
      %v329 = vpop.permute.xlu0 %328
      %v332 = vsub.f32 %v320, %v327
      %v333 = vsub.f32 %v321, %v329
      %336 = vrot.lane.b32.xlu0 %v254, 1
      %v337 = vpop.permute.xlu0 %336
      %338 = vrot.lane.b32.xlu0 %v255, 1
      %v339 = vpop.permute.xlu0 %338
      %v342 = vmul.f32 %v254, %v337
      %v343 = vmul.f32 %v255, %v339
      %v344 = vand.u32 2147483647, %v332
      %v345 = vand.u32 2147483647, %v333
      %v346 = vmul.f32 %v344, %v342
      %v347 = vmul.f32 %v345, %v343
      %350 = vrot.lane.b32.xlu0 %v346, 127
      %v351 = vpop.permute.xlu0 %350
      %352 = vrot.lane.b32.xlu0 %v347, 127
      %v353 = vpop.permute.xlu0 %352
      %vm356 = vcmask 121856
      %v357 = vsel %vm356, %v351, 0.0
      %v358 = vsel %vm356, %v353, 0.0
      %v359 = vadd.f32 %v357, %v358
      %360 = vadd.xlane.f32.xlu0 %v359
      %v361 = vpop.xlane.xlu0 %360
      %v362 = vrot.slane %v361, 4
      %v363 = vadd.f32 %v361, %v362
      %v364 = vrot.slane %v363, 2
      %v365 = vadd.f32 %v363, %v364
      %v366 = vrot.slane %v365, 1
      %v367 = vadd.f32 %v365, %v366
      %s368 = vtos %v367
      %vm369 = vcmask 1040384
      %v370 = vrot.slane %v320, 7
      %v371 = vrot.slane %v321, 7
      %v372 = vsel %vm369, %v370, %v371
      %v375 = vsub.f32 %v320, %v370
      %v376 = vsub.f32 %v321, %v372
      %v377 = vrot.slane %v254, 7
      %v378 = vrot.slane %v255, 7
      %v379 = vsel %vm369, %v377, %v378
      %v382 = vmul.f32 %v254, %v377
      %v383 = vmul.f32 %v255, %v379
      %v384 = vand.u32 2147483647, %v375
      %v385 = vand.u32 2147483647, %v376
      %v386 = vmul.f32 %v384, %v382
      %v387 = vmul.f32 %v385, %v383
      %vm390 = vcmask 1046528
      %v391 = vrot.slane %v386, 1
      %v392 = vrot.slane %v387, 1
      %v393 = vsel %vm390, %v391, %v392
      %vm396 = vcmask 130048
      %v397 = vsel %vm396, %v393, 0.0
      %vm398 = vcmask 129024
      %v399 = vsel %vm398, %v392, 0.0
      %v400 = vadd.f32 %v397, %v399
      %401 = vadd.xlane.f32.xlu0 %v400
      %v402 = vpop.xlane.xlu0 %401
      %v403 = vrot.slane %v402, 4
      %v404 = vadd.f32 %v402, %v403
      %v405 = vrot.slane %v404, 2
      %v406 = vadd.f32 %v404, %v405
      %v407 = vrot.slane %v406, 1
      %v408 = vadd.f32 %v406, %v407
      %s409 = vtos %v408
      %s410 = sadd.f32 %s368, %s409
      %v411 = vsel %vm396, %v254, 0.0
      %v412 = vsel %vm396, %v255, 0.0
      %v413 = vadd.f32 %v411, %v412
      %414 = vadd.xlane.f32.xlu0 %v413
      %v415 = vpop.xlane.xlu0 %414
      %v416 = vrot.slane %v415, 4
      %v417 = vadd.f32 %v415, %v416
      %v418 = vrot.slane %v417, 2
      %v419 = vadd.f32 %v417, %v418
      %v420 = vrot.slane %v419, 1
      %v421 = vadd.f32 %v419, %v420
      %s422 = vtos %v421
      %vm423 = vcmp.eq.s32.totalorder %v323, 0
      %v424 = vstv %s410
      %v425 = vsel %vm423, %v424, 0.0
      %v426 = vadd.f32 %v425, 0.0
      %vm427 = vcmp.eq.s32.totalorder %v323, 4
      %v428 = vstv %s422
      %v429 = vsel %vm427, %v428, 0.0
      %v430 = vadd.f32 %v426, %v429
      %v431 = vlaneseq
      %v432 = vshrl.u32 %v431, 7
      %v433 = vadd.s32 %v432, 8
      %v434 = vmul.u32 %v323, 2
      %vm435 = vcmp.eq.s32.totalorder %v432, %v434
      %vm436 = vcmp.eq.s32.totalorder %v433, %v434
      %v437 = vsel %vm435, 1, 0
      %v438 = vsel %vm436, 1, 0
      %v439 = vcvt.s32.f32 %v437
      %v440 = vcvt.s32.f32 %v438
      %v441 = vmul.u32 %v432, 2
      %vm442 = vcmp.eq.s32.totalorder %v323, %v441
      %v443 = vsel %vm442, 1, 0
      %v444 = vcvt.s32.f32 %v443
      %v445 = vsel %vm396, %v320, 0
      %v447 = vsel %vm396, %v321, 0
      %449 = vmatprep.subr.mxu0 0.0
      %450 = vmatpush1.msra.mxu0 %v439
      %451 = vmatprep.subr.mxu0 0.0
      %452 = vmatpush1.msra.mxu0 %v440
      %453 = vmatprep.subr.mxu0 0.0
      %454 = vmatpush1.msra.mxu0 0.0
      %455 = vmatprep.subr.mxu0 0.0
      %456 = vmatpush1.msra.mxu0 0.0
      %457 = vmatprep.subr.mxu0 0.0
      %458 = vmatpush1.msra.mxu0 0.0
      %459 = vmatprep.subr.mxu0 0.0
      %460 = vmatpush1.msra.mxu0 0.0
      %461 = vmatprep.subr.mxu0 0.0
      %462 = vmatpush1.msra.mxu0 0.0
      %463 = vmatprep.subr.mxu0 0.0
      %464 = vmatpush1.msra.mxu0 0.0
      %465 = vmatprep.subr.mxu0 0.0
      %466 = vmatpush1.msra.mxu0 0.0
      %467 = vmatprep.subr.mxu0 0.0
      %468 = vmatpush1.msra.mxu0 0.0
      %469 = vmatprep.subr.mxu0 0.0
      %470 = vmatpush1.msra.mxu0 0.0
      %471 = vmatprep.subr.mxu0 0.0
      %472 = vmatpush1.msra.mxu0 0.0
      %473 = vmatprep.subr.mxu0 0.0
      %474 = vmatpush1.msra.mxu0 0.0
      %475 = vmatprep.subr.mxu0 0.0
      %476 = vmatpush1.msra.mxu0 0.0
      %477 = vmatprep.subr.mxu0 0.0
      %478 = vmatpush1.msra.mxu0 0.0
      %479 = vmatprep.subr.mxu0 0.0
      %480 = vmatpush1.msra.mxu0 0.0
      %481 = vmatprep.subr.mxu0 0.0
      %482 = vmatpush1.msra.mxu0 0.0
      %483 = vmatprep.subr.mxu0 0.0
      %484 = vmatpush1.msra.mxu0 0.0
      %485 = vmatprep.subr.mxu0 0.0
      %486 = vmatpush1.msra.mxu0 0.0
      %487 = vmatprep.subr.mxu0 0.0
      %488 = vmatpush1.msra.mxu0 0.0
      %489 = vmatprep.subr.mxu0 0.0
      %490 = vmatpush1.msra.mxu0 0.0
      %491 = vmatprep.subr.mxu0 0.0
      %492 = vmatpush1.msra.mxu0 0.0
      %493 = vmatprep.subr.mxu0 0.0
      %494 = vmatpush1.msra.mxu0 0.0
      %495 = vmatprep.subr.mxu0 0.0
      %496 = vmatpush1.msra.mxu0 0.0
      %497 = vmatprep.subr.mxu0 0.0
      %498 = vmatpush1.msra.mxu0 0.0
      %499 = vmatprep.subr.mxu0 0.0
      %500 = vmatpush1.msra.mxu0 0.0
      %501 = vmatprep.subr.mxu0 0.0
      %502 = vmatpush1.msra.mxu0 0.0
      %503 = vmatprep.subr.mxu0 0.0
      %504 = vmatpush1.msra.mxu0 0.0
      %505 = vmatprep.subr.mxu0 0.0
      %506 = vmatpush1.msra.mxu0 0.0
      %507 = vmatprep.subr.mxu0 0.0
      %508 = vmatpush1.msra.mxu0 0.0
      %509 = vmatprep.subr.mxu0 0.0
      %510 = vmatpush1.msra.mxu0 0.0
      %511 = vmatprep.subr.mxu0 0.0
      %512 = vmatpush1.msra.mxu0 0.0
      %513 = vmatprep.mubr.f32.mxu0 0.0
      %514 = vmatmul.mubr.f32.gmra.mrb[0].mxu0 %v445
      %v515 = vpop.f32.mrb[0].mxu0
      %v516 = vadd.f32 0.0, %v515
      %v517 = vpop.f32.mrb[0].mxu0
      %518 = vmatprep.mubr.f32.mxu0 0.0
      %519 = vmatmul.mubr.f32.gmra.mrb[0].mxu0 %v447
      %v520 = vpop.f32.mrb[0].mxu0
      %v521 = vadd.f32 0.0, %v520
      %v522 = vpop.f32.mrb[0].mxu0
      %523 = vdwg.mxu0
      %v525 = vsel %vm396, %v444, 0
      %527 = vmatprep.subr.mxu0 0.0
      %528 = vmatpush1.msra.mxu0 %v516
      %529 = vmatprep.subr.mxu0 0.0
      %530 = vmatpush1.msra.mxu0 %v521
      %531 = vmatprep.subr.mxu0 0.0
      %532 = vmatpush1.msra.mxu0 0.0
      %533 = vmatprep.subr.mxu0 0.0
      %534 = vmatpush1.msra.mxu0 0.0
      %535 = vmatprep.subr.mxu0 0.0
      %536 = vmatpush1.msra.mxu0 0.0
      %537 = vmatprep.subr.mxu0 0.0
      %538 = vmatpush1.msra.mxu0 0.0
      %539 = vmatprep.subr.mxu0 0.0
      %540 = vmatpush1.msra.mxu0 0.0
      %541 = vmatprep.subr.mxu0 0.0
      %542 = vmatpush1.msra.mxu0 0.0
      %543 = vmatprep.subr.mxu0 0.0
      %544 = vmatpush1.msra.mxu0 0.0
      %545 = vmatprep.subr.mxu0 0.0
      %546 = vmatpush1.msra.mxu0 0.0
      %547 = vmatprep.subr.mxu0 0.0
      %548 = vmatpush1.msra.mxu0 0.0
      %549 = vmatprep.subr.mxu0 0.0
      %550 = vmatpush1.msra.mxu0 0.0
      %551 = vmatprep.subr.mxu0 0.0
      %552 = vmatpush1.msra.mxu0 0.0
      %553 = vmatprep.subr.mxu0 0.0
      %554 = vmatpush1.msra.mxu0 0.0
      %555 = vmatprep.subr.mxu0 0.0
      %556 = vmatpush1.msra.mxu0 0.0
      %557 = vmatprep.subr.mxu0 0.0
      %558 = vmatpush1.msra.mxu0 0.0
      %559 = vmatprep.subr.mxu0 0.0
      %560 = vmatpush1.msra.mxu0 0.0
      %561 = vmatprep.subr.mxu0 0.0
      %562 = vmatpush1.msra.mxu0 0.0
      %563 = vmatprep.subr.mxu0 0.0
      %564 = vmatpush1.msra.mxu0 0.0
      %565 = vmatprep.subr.mxu0 0.0
      %566 = vmatpush1.msra.mxu0 0.0
      %567 = vmatprep.subr.mxu0 0.0
      %568 = vmatpush1.msra.mxu0 0.0
      %569 = vmatprep.subr.mxu0 0.0
      %570 = vmatpush1.msra.mxu0 0.0
      %571 = vmatprep.subr.mxu0 0.0
      %572 = vmatpush1.msra.mxu0 0.0
      %573 = vmatprep.subr.mxu0 0.0
      %574 = vmatpush1.msra.mxu0 0.0
      %575 = vmatprep.subr.mxu0 0.0
      %576 = vmatpush1.msra.mxu0 0.0
      %577 = vmatprep.subr.mxu0 0.0
      %578 = vmatpush1.msra.mxu0 0.0
      %579 = vmatprep.subr.mxu0 0.0
      %580 = vmatpush1.msra.mxu0 0.0
      %581 = vmatprep.subr.mxu0 0.0
      %582 = vmatpush1.msra.mxu0 0.0
      %583 = vmatprep.subr.mxu0 0.0
      %584 = vmatpush1.msra.mxu0 0.0
      %585 = vmatprep.subr.mxu0 0.0
      %586 = vmatpush1.msra.mxu0 0.0
      %587 = vmatprep.subr.mxu0 0.0
      %588 = vmatpush1.msra.mxu0 0.0
      %589 = vmatprep.subr.mxu0 0.0
      %590 = vmatpush1.msra.mxu0 0.0
      %591 = vmatprep.mubr.f32.mxu0 0.0
      %592 = vmatmul.mubr.f32.gmra.mrb[0].mxu0 %v525
      %v593 = vpop.f32.mrb[0].mxu0
      %v594 = vadd.f32 0.0, %v593
      %v595 = vpop.f32.mrb[0].mxu0
      %596 = vdwg.mxu0
      %v597 = vsel %vm396, %v254, 0
      %v599 = vsel %vm396, %v255, 0
      %601 = vmatprep.subr.mxu0 0.0
      %602 = vmatpush1.msra.mxu0 %v439
      %603 = vmatprep.subr.mxu0 0.0
      %604 = vmatpush1.msra.mxu0 %v440
      %605 = vmatprep.subr.mxu0 0.0
      %606 = vmatpush1.msra.mxu0 0.0
      %607 = vmatprep.subr.mxu0 0.0
      %608 = vmatpush1.msra.mxu0 0.0
      %609 = vmatprep.subr.mxu0 0.0
      %610 = vmatpush1.msra.mxu0 0.0
      %611 = vmatprep.subr.mxu0 0.0
      %612 = vmatpush1.msra.mxu0 0.0
      %613 = vmatprep.subr.mxu0 0.0
      %614 = vmatpush1.msra.mxu0 0.0
      %615 = vmatprep.subr.mxu0 0.0
      %616 = vmatpush1.msra.mxu0 0.0
      %617 = vmatprep.subr.mxu0 0.0
      %618 = vmatpush1.msra.mxu0 0.0
      %619 = vmatprep.subr.mxu0 0.0
      %620 = vmatpush1.msra.mxu0 0.0
      %621 = vmatprep.subr.mxu0 0.0
      %622 = vmatpush1.msra.mxu0 0.0
      %623 = vmatprep.subr.mxu0 0.0
      %624 = vmatpush1.msra.mxu0 0.0
      %625 = vmatprep.subr.mxu0 0.0
      %626 = vmatpush1.msra.mxu0 0.0
      %627 = vmatprep.subr.mxu0 0.0
      %628 = vmatpush1.msra.mxu0 0.0
      %629 = vmatprep.subr.mxu0 0.0
      %630 = vmatpush1.msra.mxu0 0.0
      %631 = vmatprep.subr.mxu0 0.0
      %632 = vmatpush1.msra.mxu0 0.0
      %633 = vmatprep.subr.mxu0 0.0
      %634 = vmatpush1.msra.mxu0 0.0
      %635 = vmatprep.subr.mxu0 0.0
      %636 = vmatpush1.msra.mxu0 0.0
      %637 = vmatprep.subr.mxu0 0.0
      %638 = vmatpush1.msra.mxu0 0.0
      %639 = vmatprep.subr.mxu0 0.0
      %640 = vmatpush1.msra.mxu0 0.0
      %641 = vmatprep.subr.mxu0 0.0
      %642 = vmatpush1.msra.mxu0 0.0
      %643 = vmatprep.subr.mxu0 0.0
      %644 = vmatpush1.msra.mxu0 0.0
      %645 = vmatprep.subr.mxu0 0.0
      %646 = vmatpush1.msra.mxu0 0.0
      %647 = vmatprep.subr.mxu0 0.0
      %648 = vmatpush1.msra.mxu0 0.0
      %649 = vmatprep.subr.mxu0 0.0
      %650 = vmatpush1.msra.mxu0 0.0
      %651 = vmatprep.subr.mxu0 0.0
      %652 = vmatpush1.msra.mxu0 0.0
      %653 = vmatprep.subr.mxu0 0.0
      %654 = vmatpush1.msra.mxu0 0.0
      %655 = vmatprep.subr.mxu0 0.0
      %656 = vmatpush1.msra.mxu0 0.0
      %657 = vmatprep.subr.mxu0 0.0
      %658 = vmatpush1.msra.mxu0 0.0
      %659 = vmatprep.subr.mxu0 0.0
      %660 = vmatpush1.msra.mxu0 0.0
      %661 = vmatprep.subr.mxu0 0.0
      %662 = vmatpush1.msra.mxu0 0.0
      %663 = vmatprep.subr.mxu0 0.0
      %664 = vmatpush1.msra.mxu0 0.0
      %665 = vmatprep.mubr.f32.mxu0 0.0
      %666 = vmatmul.mubr.f32.gmra.mrb[0].mxu0 %v597
      %v667 = vpop.f32.mrb[0].mxu0
      %v668 = vadd.f32 0.0, %v667
      %v669 = vpop.f32.mrb[0].mxu0
      %670 = vmatprep.mubr.f32.mxu0 0.0
      %671 = vmatmul.mubr.f32.gmra.mrb[0].mxu0 %v599
      %v672 = vpop.f32.mrb[0].mxu0
      %v673 = vadd.f32 0.0, %v672
      %v674 = vpop.f32.mrb[0].mxu0
      %675 = vdwg.mxu0
      %676 = vmatprep.subr.mxu0 0.0
      %677 = vmatpush1.msra.mxu0 %v668
      %678 = vmatprep.subr.mxu0 0.0
      %679 = vmatpush1.msra.mxu0 %v673
      %680 = vmatprep.subr.mxu0 0.0
      %681 = vmatpush1.msra.mxu0 0.0
      %682 = vmatprep.subr.mxu0 0.0
      %683 = vmatpush1.msra.mxu0 0.0
      %684 = vmatprep.subr.mxu0 0.0
      %685 = vmatpush1.msra.mxu0 0.0
      %686 = vmatprep.subr.mxu0 0.0
      %687 = vmatpush1.msra.mxu0 0.0
      %688 = vmatprep.subr.mxu0 0.0
      %689 = vmatpush1.msra.mxu0 0.0
      %690 = vmatprep.subr.mxu0 0.0
      %691 = vmatpush1.msra.mxu0 0.0
      %692 = vmatprep.subr.mxu0 0.0
      %693 = vmatpush1.msra.mxu0 0.0
      %694 = vmatprep.subr.mxu0 0.0
      %695 = vmatpush1.msra.mxu0 0.0
      %696 = vmatprep.subr.mxu0 0.0
      %697 = vmatpush1.msra.mxu0 0.0
      %698 = vmatprep.subr.mxu0 0.0
      %699 = vmatpush1.msra.mxu0 0.0
      %700 = vmatprep.subr.mxu0 0.0
      %701 = vmatpush1.msra.mxu0 0.0
      %702 = vmatprep.subr.mxu0 0.0
      %703 = vmatpush1.msra.mxu0 0.0
      %704 = vmatprep.subr.mxu0 0.0
      %705 = vmatpush1.msra.mxu0 0.0
      %706 = vmatprep.subr.mxu0 0.0
      %707 = vmatpush1.msra.mxu0 0.0
      %708 = vmatprep.subr.mxu0 0.0
      %709 = vmatpush1.msra.mxu0 0.0
      %710 = vmatprep.subr.mxu0 0.0
      %711 = vmatpush1.msra.mxu0 0.0
      %712 = vmatprep.subr.mxu0 0.0
      %713 = vmatpush1.msra.mxu0 0.0
      %714 = vmatprep.subr.mxu0 0.0
      %715 = vmatpush1.msra.mxu0 0.0
      %716 = vmatprep.subr.mxu0 0.0
      %717 = vmatpush1.msra.mxu0 0.0
      %718 = vmatprep.subr.mxu0 0.0
      %719 = vmatpush1.msra.mxu0 0.0
      %720 = vmatprep.subr.mxu0 0.0
      %721 = vmatpush1.msra.mxu0 0.0
      %722 = vmatprep.subr.mxu0 0.0
      %723 = vmatpush1.msra.mxu0 0.0
      %724 = vmatprep.subr.mxu0 0.0
      %725 = vmatpush1.msra.mxu0 0.0
      %726 = vmatprep.subr.mxu0 0.0
      %727 = vmatpush1.msra.mxu0 0.0
      %728 = vmatprep.subr.mxu0 0.0
      %729 = vmatpush1.msra.mxu0 0.0
      %730 = vmatprep.subr.mxu0 0.0
      %731 = vmatpush1.msra.mxu0 0.0
      %732 = vmatprep.subr.mxu0 0.0
      %733 = vmatpush1.msra.mxu0 0.0
      %734 = vmatprep.subr.mxu0 0.0
      %735 = vmatpush1.msra.mxu0 0.0
      %736 = vmatprep.subr.mxu0 0.0
      %737 = vmatpush1.msra.mxu0 0.0
      %738 = vmatprep.subr.mxu0 0.0
      %739 = vmatpush1.msra.mxu0 0.0
      %740 = vmatprep.mubr.f32.mxu0 0.0
      %741 = vmatmul.mubr.f32.gmra.mrb[0].mxu0 %v525
      %v742 = vpop.f32.mrb[0].mxu0
      %v743 = vadd.f32 0.0, %v742
      %v744 = vpop.f32.mrb[0].mxu0
      %745 = vdwg.mxu0
      %747 = vrot.lane.b32.xlu0 %v594, 1
      %v748 = vpop.permute.xlu0 %747
      %v750 = vsub.f32 %v594, %v748
      %752 = vrot.lane.b32.xlu0 %v743, 1
      %v753 = vpop.permute.xlu0 %752
      %v755 = vmul.f32 %v743, %v753
      %v756 = vand.u32 2147483647, %v750
      %v757 = vmul.f32 %v756, %v755
      %759 = vrot.lane.b32.xlu0 %v757, 127
      %v760 = vpop.permute.xlu0 %759
      %vm762 = vcmask 56320
      %v763 = vsel %vm762, %v760, 0.0
      %764 = vadd.xlane.f32.xlu0 %v763
      %v765 = vpop.xlane.xlu0 %764
      %v766 = vrot.slane %v765, 4
      %v767 = vadd.f32 %v765, %v766
      %v768 = vrot.slane %v767, 2
      %v769 = vadd.f32 %v767, %v768
      %v770 = vrot.slane %v769, 1
      %v771 = vadd.f32 %v769, %v770
      %s772 = vtos %v771
      %v773 = vrot.slane %v594, 7
      %v775 = vsub.f32 %v594, %v773
      %v776 = vrot.slane %v743, 7
      %v778 = vmul.f32 %v743, %v776
      %v779 = vand.u32 2147483647, %v775
      %v780 = vmul.f32 %v779, %v778
      %v782 = vrot.slane %v780, 1
      %vm784 = vcmask 63488
      %v785 = vsel %vm784, %v782, 0.0
      %786 = vadd.xlane.f32.xlu0 %v785
      %v787 = vpop.xlane.xlu0 %786
      %v788 = vrot.slane %v787, 4
      %v789 = vadd.f32 %v787, %v788
      %v790 = vrot.slane %v789, 2
      %v791 = vadd.f32 %v789, %v790
      %v792 = vrot.slane %v791, 1
      %v793 = vadd.f32 %v791, %v792
      %s794 = vtos %v793
      %s795 = sadd.f32 %s772, %s794
      %vm796 = vcmask 64512
      %v797 = vsel %vm796, %v743, 0.0
      %798 = vadd.xlane.f32.xlu0 %v797
      %v799 = vpop.xlane.xlu0 %798
      %v800 = vrot.slane %v799, 4
      %v801 = vadd.f32 %v799, %v800
      %v802 = vrot.slane %v801, 2
      %v803 = vadd.f32 %v801, %v802
      %v804 = vrot.slane %v803, 1
      %v805 = vadd.f32 %v803, %v804
      %s806 = vtos %v805
      %vm807 = vcmp.eq.s32.totalorder %v323, 1
      %v808 = vstv %s795
      %v809 = vsel %vm807, %v808, 0.0
      %v810 = vadd.f32 %v430, %v809
      %vm811 = vcmp.eq.s32.totalorder %v323, 5
      %v812 = vstv %s806
      %v813 = vsel %vm811, %v812, 0.0
      %v814 = vadd.f32 %v810, %v813
      %v815 = vsel %vm796, %v594, 0
      %817 = vmatprep.subr.mxu0 0.0
      %818 = vmatpush1.msra.mxu0 %v439
      %819 = vmatprep.subr.mxu0 0.0
      %820 = vmatpush1.msra.mxu0 0.0
      %821 = vmatprep.subr.mxu0 0.0
      %822 = vmatpush1.msra.mxu0 0.0
      %823 = vmatprep.subr.mxu0 0.0
      %824 = vmatpush1.msra.mxu0 0.0
      %825 = vmatprep.subr.mxu0 0.0
      %826 = vmatpush1.msra.mxu0 0.0
      %827 = vmatprep.subr.mxu0 0.0
      %828 = vmatpush1.msra.mxu0 0.0
      %829 = vmatprep.subr.mxu0 0.0
      %830 = vmatpush1.msra.mxu0 0.0
      %831 = vmatprep.subr.mxu0 0.0
      %832 = vmatpush1.msra.mxu0 0.0
      %833 = vmatprep.subr.mxu0 0.0
      %834 = vmatpush1.msra.mxu0 0.0
      %835 = vmatprep.subr.mxu0 0.0
      %836 = vmatpush1.msra.mxu0 0.0
      %837 = vmatprep.subr.mxu0 0.0
      %838 = vmatpush1.msra.mxu0 0.0
      %839 = vmatprep.subr.mxu0 0.0
      %840 = vmatpush1.msra.mxu0 0.0
      %841 = vmatprep.subr.mxu0 0.0
      %842 = vmatpush1.msra.mxu0 0.0
      %843 = vmatprep.subr.mxu0 0.0
      %844 = vmatpush1.msra.mxu0 0.0
      %845 = vmatprep.subr.mxu0 0.0
      %846 = vmatpush1.msra.mxu0 0.0
      %847 = vmatprep.subr.mxu0 0.0
      %848 = vmatpush1.msra.mxu0 0.0
      %849 = vmatprep.subr.mxu0 0.0
      %850 = vmatpush1.msra.mxu0 0.0
      %851 = vmatprep.subr.mxu0 0.0
      %852 = vmatpush1.msra.mxu0 0.0
      %853 = vmatprep.subr.mxu0 0.0
      %854 = vmatpush1.msra.mxu0 0.0
      %855 = vmatprep.subr.mxu0 0.0
      %856 = vmatpush1.msra.mxu0 0.0
      %857 = vmatprep.subr.mxu0 0.0
      %858 = vmatpush1.msra.mxu0 0.0
      %859 = vmatprep.subr.mxu0 0.0
      %860 = vmatpush1.msra.mxu0 0.0
      %861 = vmatprep.subr.mxu0 0.0
      %862 = vmatpush1.msra.mxu0 0.0
      %863 = vmatprep.subr.mxu0 0.0
      %864 = vmatpush1.msra.mxu0 0.0
      %865 = vmatprep.subr.mxu0 0.0
      %866 = vmatpush1.msra.mxu0 0.0
      %867 = vmatprep.subr.mxu0 0.0
      %868 = vmatpush1.msra.mxu0 0.0
      %869 = vmatprep.subr.mxu0 0.0
      %870 = vmatpush1.msra.mxu0 0.0
      %871 = vmatprep.subr.mxu0 0.0
      %872 = vmatpush1.msra.mxu0 0.0
      %873 = vmatprep.subr.mxu0 0.0
      %874 = vmatpush1.msra.mxu0 0.0
      %875 = vmatprep.subr.mxu0 0.0
      %876 = vmatpush1.msra.mxu0 0.0
      %877 = vmatprep.subr.mxu0 0.0
      %878 = vmatpush1.msra.mxu0 0.0
      %879 = vmatprep.subr.mxu0 0.0
      %880 = vmatpush1.msra.mxu0 0.0
      %881 = vmatprep.mubr.f32.mxu0 0.0
      %882 = vmatmul.mubr.f32.gmra.mrb[0].mxu0 %v815
      %v883 = vpop.f32.mrb[0].mxu0
      %v884 = vadd.f32 0.0, %v883
      %v885 = vpop.f32.mrb[0].mxu0
      %886 = vdwg.mxu0
      %v887 = vsel %vm796, %v444, 0
      %889 = vmatprep.subr.mxu0 0.0
      %890 = vmatpush1.msra.mxu0 %v884
      %891 = vmatprep.subr.mxu0 0.0
      %892 = vmatpush1.msra.mxu0 0.0
      %893 = vmatprep.subr.mxu0 0.0
      %894 = vmatpush1.msra.mxu0 0.0
      %895 = vmatprep.subr.mxu0 0.0
      %896 = vmatpush1.msra.mxu0 0.0
      %897 = vmatprep.subr.mxu0 0.0
      %898 = vmatpush1.msra.mxu0 0.0
      %899 = vmatprep.subr.mxu0 0.0
      %900 = vmatpush1.msra.mxu0 0.0
      %901 = vmatprep.subr.mxu0 0.0
      %902 = vmatpush1.msra.mxu0 0.0
      %903 = vmatprep.subr.mxu0 0.0
      %904 = vmatpush1.msra.mxu0 0.0
      %905 = vmatprep.subr.mxu0 0.0
      %906 = vmatpush1.msra.mxu0 0.0
      %907 = vmatprep.subr.mxu0 0.0
      %908 = vmatpush1.msra.mxu0 0.0
      %909 = vmatprep.subr.mxu0 0.0
      %910 = vmatpush1.msra.mxu0 0.0
      %911 = vmatprep.subr.mxu0 0.0
      %912 = vmatpush1.msra.mxu0 0.0
      %913 = vmatprep.subr.mxu0 0.0
      %914 = vmatpush1.msra.mxu0 0.0
      %915 = vmatprep.subr.mxu0 0.0
      %916 = vmatpush1.msra.mxu0 0.0
      %917 = vmatprep.subr.mxu0 0.0
      %918 = vmatpush1.msra.mxu0 0.0
      %919 = vmatprep.subr.mxu0 0.0
      %920 = vmatpush1.msra.mxu0 0.0
      %921 = vmatprep.subr.mxu0 0.0
      %922 = vmatpush1.msra.mxu0 0.0
      %923 = vmatprep.subr.mxu0 0.0
      %924 = vmatpush1.msra.mxu0 0.0
      %925 = vmatprep.subr.mxu0 0.0
      %926 = vmatpush1.msra.mxu0 0.0
      %927 = vmatprep.subr.mxu0 0.0
      %928 = vmatpush1.msra.mxu0 0.0
      %929 = vmatprep.subr.mxu0 0.0
      %930 = vmatpush1.msra.mxu0 0.0
      %931 = vmatprep.subr.mxu0 0.0
      %932 = vmatpush1.msra.mxu0 0.0
      %933 = vmatprep.subr.mxu0 0.0
      %934 = vmatpush1.msra.mxu0 0.0
      %935 = vmatprep.subr.mxu0 0.0
      %936 = vmatpush1.msra.mxu0 0.0
      %937 = vmatprep.subr.mxu0 0.0
      %938 = vmatpush1.msra.mxu0 0.0
      %939 = vmatprep.subr.mxu0 0.0
      %940 = vmatpush1.msra.mxu0 0.0
      %941 = vmatprep.subr.mxu0 0.0
      %942 = vmatpush1.msra.mxu0 0.0
      %943 = vmatprep.subr.mxu0 0.0
      %944 = vmatpush1.msra.mxu0 0.0
      %945 = vmatprep.subr.mxu0 0.0
      %946 = vmatpush1.msra.mxu0 0.0
      %947 = vmatprep.subr.mxu0 0.0
      %948 = vmatpush1.msra.mxu0 0.0
      %949 = vmatprep.subr.mxu0 0.0
      %950 = vmatpush1.msra.mxu0 0.0
      %951 = vmatprep.subr.mxu0 0.0
      %952 = vmatpush1.msra.mxu0 0.0
      %953 = vmatprep.mubr.f32.mxu0 0.0
      %954 = vmatmul.mubr.f32.gmra.mrb[0].mxu0 %v887
      %v955 = vpop.f32.mrb[0].mxu0
      %v956 = vadd.f32 0.0, %v955
      %v957 = vpop.f32.mrb[0].mxu0
      %958 = vdwg.mxu0
      %v959 = vsel %vm796, %v743, 0
      %961 = vmatprep.subr.mxu0 0.0
      %962 = vmatpush1.msra.mxu0 %v439
      %963 = vmatprep.subr.mxu0 0.0
      %964 = vmatpush1.msra.mxu0 0.0
      %965 = vmatprep.subr.mxu0 0.0
      %966 = vmatpush1.msra.mxu0 0.0
      %967 = vmatprep.subr.mxu0 0.0
      %968 = vmatpush1.msra.mxu0 0.0
      %969 = vmatprep.subr.mxu0 0.0
      %970 = vmatpush1.msra.mxu0 0.0
      %971 = vmatprep.subr.mxu0 0.0
      %972 = vmatpush1.msra.mxu0 0.0
      %973 = vmatprep.subr.mxu0 0.0
      %974 = vmatpush1.msra.mxu0 0.0
      %975 = vmatprep.subr.mxu0 0.0
      %976 = vmatpush1.msra.mxu0 0.0
      %977 = vmatprep.subr.mxu0 0.0
      %978 = vmatpush1.msra.mxu0 0.0
      %979 = vmatprep.subr.mxu0 0.0
      %980 = vmatpush1.msra.mxu0 0.0
      %981 = vmatprep.subr.mxu0 0.0
      %982 = vmatpush1.msra.mxu0 0.0
      %983 = vmatprep.subr.mxu0 0.0
      %984 = vmatpush1.msra.mxu0 0.0
      %985 = vmatprep.subr.mxu0 0.0
      %986 = vmatpush1.msra.mxu0 0.0
      %987 = vmatprep.subr.mxu0 0.0
      %988 = vmatpush1.msra.mxu0 0.0
      %989 = vmatprep.subr.mxu0 0.0
      %990 = vmatpush1.msra.mxu0 0.0
      %991 = vmatprep.subr.mxu0 0.0
      %992 = vmatpush1.msra.mxu0 0.0
      %993 = vmatprep.subr.mxu0 0.0
      %994 = vmatpush1.msra.mxu0 0.0
      %995 = vmatprep.subr.mxu0 0.0
      %996 = vmatpush1.msra.mxu0 0.0
      %997 = vmatprep.subr.mxu0 0.0
      %998 = vmatpush1.msra.mxu0 0.0
      %999 = vmatprep.subr.mxu0 0.0
      %1000 = vmatpush1.msra.mxu0 0.0
      %1001 = vmatprep.subr.mxu0 0.0
      %1002 = vmatpush1.msra.mxu0 0.0
      %1003 = vmatprep.subr.mxu0 0.0
      %1004 = vmatpush1.msra.mxu0 0.0
      %1005 = vmatprep.subr.mxu0 0.0
      %1006 = vmatpush1.msra.mxu0 0.0
      %1007 = vmatprep.subr.mxu0 0.0
      %1008 = vmatpush1.msra.mxu0 0.0
      %1009 = vmatprep.subr.mxu0 0.0
      %1010 = vmatpush1.msra.mxu0 0.0
      %1011 = vmatprep.subr.mxu0 0.0
      %1012 = vmatpush1.msra.mxu0 0.0
      %1013 = vmatprep.subr.mxu0 0.0
      %1014 = vmatpush1.msra.mxu0 0.0
      %1015 = vmatprep.subr.mxu0 0.0
      %1016 = vmatpush1.msra.mxu0 0.0
      %1017 = vmatprep.subr.mxu0 0.0
      %1018 = vmatpush1.msra.mxu0 0.0
      %1019 = vmatprep.subr.mxu0 0.0
      %1020 = vmatpush1.msra.mxu0 0.0
      %1021 = vmatprep.subr.mxu0 0.0
      %1022 = vmatpush1.msra.mxu0 0.0
      %1023 = vmatprep.subr.mxu0 0.0
      %1024 = vmatpush1.msra.mxu0 0.0
      %1025 = vmatprep.mubr.f32.mxu0 0.0
      %1026 = vmatmul.mubr.f32.gmra.mrb[0].mxu0 %v959
      %v1027 = vpop.f32.mrb[0].mxu0
      %v1028 = vadd.f32 0.0, %v1027
      %v1029 = vpop.f32.mrb[0].mxu0
      %1030 = vdwg.mxu0
      %1031 = vmatprep.subr.mxu0 0.0
      %1032 = vmatpush1.msra.mxu0 %v1028
      %1033 = vmatprep.subr.mxu0 0.0
      %1034 = vmatpush1.msra.mxu0 0.0
      %1035 = vmatprep.subr.mxu0 0.0
      %1036 = vmatpush1.msra.mxu0 0.0
      %1037 = vmatprep.subr.mxu0 0.0
      %1038 = vmatpush1.msra.mxu0 0.0
      %1039 = vmatprep.subr.mxu0 0.0
      %1040 = vmatpush1.msra.mxu0 0.0
      %1041 = vmatprep.subr.mxu0 0.0
      %1042 = vmatpush1.msra.mxu0 0.0
      %1043 = vmatprep.subr.mxu0 0.0
      %1044 = vmatpush1.msra.mxu0 0.0
      %1045 = vmatprep.subr.mxu0 0.0
      %1046 = vmatpush1.msra.mxu0 0.0
      %1047 = vmatprep.subr.mxu0 0.0
      %1048 = vmatpush1.msra.mxu0 0.0
      %1049 = vmatprep.subr.mxu0 0.0
      %1050 = vmatpush1.msra.mxu0 0.0
      %1051 = vmatprep.subr.mxu0 0.0
      %1052 = vmatpush1.msra.mxu0 0.0
      %1053 = vmatprep.subr.mxu0 0.0
      %1054 = vmatpush1.msra.mxu0 0.0
      %1055 = vmatprep.subr.mxu0 0.0
      %1056 = vmatpush1.msra.mxu0 0.0
      %1057 = vmatprep.subr.mxu0 0.0
      %1058 = vmatpush1.msra.mxu0 0.0
      %1059 = vmatprep.subr.mxu0 0.0
      %1060 = vmatpush1.msra.mxu0 0.0
      %1061 = vmatprep.subr.mxu0 0.0
      %1062 = vmatpush1.msra.mxu0 0.0
      %1063 = vmatprep.subr.mxu0 0.0
      %1064 = vmatpush1.msra.mxu0 0.0
      %1065 = vmatprep.subr.mxu0 0.0
      %1066 = vmatpush1.msra.mxu0 0.0
      %1067 = vmatprep.subr.mxu0 0.0
      %1068 = vmatpush1.msra.mxu0 0.0
      %1069 = vmatprep.subr.mxu0 0.0
      %1070 = vmatpush1.msra.mxu0 0.0
      %1071 = vmatprep.subr.mxu0 0.0
      %1072 = vmatpush1.msra.mxu0 0.0
      %1073 = vmatprep.subr.mxu0 0.0
      %1074 = vmatpush1.msra.mxu0 0.0
      %1075 = vmatprep.subr.mxu0 0.0
      %1076 = vmatpush1.msra.mxu0 0.0
      %1077 = vmatprep.subr.mxu0 0.0
      %1078 = vmatpush1.msra.mxu0 0.0
      %1079 = vmatprep.subr.mxu0 0.0
      %1080 = vmatpush1.msra.mxu0 0.0
      %1081 = vmatprep.subr.mxu0 0.0
      %1082 = vmatpush1.msra.mxu0 0.0
      %1083 = vmatprep.subr.mxu0 0.0
      %1084 = vmatpush1.msra.mxu0 0.0
      %1085 = vmatprep.subr.mxu0 0.0
      %1086 = vmatpush1.msra.mxu0 0.0
      %1087 = vmatprep.subr.mxu0 0.0
      %1088 = vmatpush1.msra.mxu0 0.0
      %1089 = vmatprep.subr.mxu0 0.0
      %1090 = vmatpush1.msra.mxu0 0.0
      %1091 = vmatprep.subr.mxu0 0.0
      %1092 = vmatpush1.msra.mxu0 0.0
      %1093 = vmatprep.subr.mxu0 0.0
      %1094 = vmatpush1.msra.mxu0 0.0
      %1095 = vmatprep.mubr.f32.mxu0 0.0
      %1096 = vmatmul.mubr.f32.gmra.mrb[0].mxu0 %v887
      %v1097 = vpop.f32.mrb[0].mxu0
      %v1098 = vadd.f32 0.0, %v1097
      %v1099 = vpop.f32.mrb[0].mxu0
      %1100 = vdwg.mxu0
      %1102 = vrot.lane.b32.xlu0 %v956, 1
      %v1103 = vpop.permute.xlu0 %1102
      %v1105 = vsub.f32 %v956, %v1103
      %1107 = vrot.lane.b32.xlu0 %v1098, 1
      %v1108 = vpop.permute.xlu0 %1107
      %v1110 = vmul.f32 %v1098, %v1108
      %v1111 = vand.u32 2147483647, %v1105
      %v1112 = vmul.f32 %v1111, %v1110
      %1114 = vrot.lane.b32.xlu0 %v1112, 127
      %v1115 = vpop.permute.xlu0 %1114
      %vm1117 = vcmask 19456
      %v1118 = vsel %vm1117, %v1115, 0.0
      %1119 = vadd.xlane.f32.xlu0 %v1118
      %v1120 = vpop.xlane.xlu0 %1119
      %v1121 = vrot.slane %v1120, 4
      %v1122 = vadd.f32 %v1120, %v1121
      %v1123 = vrot.slane %v1122, 2
      %v1124 = vadd.f32 %v1122, %v1123
      %v1125 = vrot.slane %v1124, 1
      %v1126 = vadd.f32 %v1124, %v1125
      %s1127 = vtos %v1126
      %v1128 = vrot.slane %v956, 7
      %v1130 = vsub.f32 %v956, %v1128
      %v1131 = vrot.slane %v1098, 7
      %v1133 = vmul.f32 %v1098, %v1131
      %v1134 = vand.u32 2147483647, %v1130
      %v1135 = vmul.f32 %v1134, %v1133
      %v1137 = vrot.slane %v1135, 1
      %vm1139 = vcmask 26624
      %v1140 = vsel %vm1139, %v1137, 0.0
      %1141 = vadd.xlane.f32.xlu0 %v1140
      %v1142 = vpop.xlane.xlu0 %1141
      %v1143 = vrot.slane %v1142, 4
      %v1144 = vadd.f32 %v1142, %v1143
      %v1145 = vrot.slane %v1144, 2
      %v1146 = vadd.f32 %v1144, %v1145
      %v1147 = vrot.slane %v1146, 1
      %v1148 = vadd.f32 %v1146, %v1147
      %s1149 = vtos %v1148
      %s1150 = sadd.f32 %s1127, %s1149
      %vm1151 = vcmask 27648
      %v1152 = vsel %vm1151, %v1098, 0.0
      %1153 = vadd.xlane.f32.xlu0 %v1152
      %v1154 = vpop.xlane.xlu0 %1153
      %v1155 = vrot.slane %v1154, 4
      %v1156 = vadd.f32 %v1154, %v1155
      %v1157 = vrot.slane %v1156, 2
      %v1158 = vadd.f32 %v1156, %v1157
      %v1159 = vrot.slane %v1158, 1
      %v1160 = vadd.f32 %v1158, %v1159
      %s1161 = vtos %v1160
      %vm1162 = vcmp.eq.s32.totalorder %v323, 2
      %v1163 = vstv %s1150
      %v1164 = vsel %vm1162, %v1163, 0.0
      %v1165 = vadd.f32 %v814, %v1164
      %vm1166 = vcmp.eq.s32.totalorder %v323, 6
      %v1167 = vstv %s1161
      %v1168 = vsel %vm1166, %v1167, 0.0
      %v1169 = vadd.f32 %v1165, %v1168
      %vm1170 = vcmask 31744
      %v1171 = vsel %vm1170, %v956, 0
      %vm1173 = vcmask 1043456
      %v1175 = vsel %vm1173, %v439, 0
      %1177 = vmatprep.subr.mxu0 0.0
      %1178 = vmatpush1.msra.mxu0 %v1175
      %1179 = vmatprep.subr.mxu0 0.0
      %1180 = vmatpush1.msra.mxu0 0.0
      %1181 = vmatprep.subr.mxu0 0.0
      %1182 = vmatpush1.msra.mxu0 0.0
      %1183 = vmatprep.subr.mxu0 0.0
      %1184 = vmatpush1.msra.mxu0 0.0
      %1185 = vmatprep.subr.mxu0 0.0
      %1186 = vmatpush1.msra.mxu0 0.0
      %1187 = vmatprep.subr.mxu0 0.0
      %1188 = vmatpush1.msra.mxu0 0.0
      %1189 = vmatprep.subr.mxu0 0.0
      %1190 = vmatpush1.msra.mxu0 0.0
      %1191 = vmatprep.subr.mxu0 0.0
      %1192 = vmatpush1.msra.mxu0 0.0
      %1193 = vmatprep.subr.mxu0 0.0
      %1194 = vmatpush1.msra.mxu0 0.0
      %1195 = vmatprep.subr.mxu0 0.0
      %1196 = vmatpush1.msra.mxu0 0.0
      %1197 = vmatprep.subr.mxu0 0.0
      %1198 = vmatpush1.msra.mxu0 0.0
      %1199 = vmatprep.subr.mxu0 0.0
      %1200 = vmatpush1.msra.mxu0 0.0
      %1201 = vmatprep.subr.mxu0 0.0
      %1202 = vmatpush1.msra.mxu0 0.0
      %1203 = vmatprep.subr.mxu0 0.0
      %1204 = vmatpush1.msra.mxu0 0.0
      %1205 = vmatprep.subr.mxu0 0.0
      %1206 = vmatpush1.msra.mxu0 0.0
      %1207 = vmatprep.subr.mxu0 0.0
      %1208 = vmatpush1.msra.mxu0 0.0
      %1209 = vmatprep.subr.mxu0 0.0
      %1210 = vmatpush1.msra.mxu0 0.0
      %1211 = vmatprep.subr.mxu0 0.0
      %1212 = vmatpush1.msra.mxu0 0.0
      %1213 = vmatprep.subr.mxu0 0.0
      %1214 = vmatpush1.msra.mxu0 0.0
      %1215 = vmatprep.subr.mxu0 0.0
      %1216 = vmatpush1.msra.mxu0 0.0
      %1217 = vmatprep.subr.mxu0 0.0
      %1218 = vmatpush1.msra.mxu0 0.0
      %1219 = vmatprep.subr.mxu0 0.0
      %1220 = vmatpush1.msra.mxu0 0.0
      %1221 = vmatprep.subr.mxu0 0.0
      %1222 = vmatpush1.msra.mxu0 0.0
      %1223 = vmatprep.subr.mxu0 0.0
      %1224 = vmatpush1.msra.mxu0 0.0
      %1225 = vmatprep.subr.mxu0 0.0
      %1226 = vmatpush1.msra.mxu0 0.0
      %1227 = vmatprep.subr.mxu0 0.0
      %1228 = vmatpush1.msra.mxu0 0.0
      %1229 = vmatprep.subr.mxu0 0.0
      %1230 = vmatpush1.msra.mxu0 0.0
      %1231 = vmatprep.subr.mxu0 0.0
      %1232 = vmatpush1.msra.mxu0 0.0
      %1233 = vmatprep.subr.mxu0 0.0
      %1234 = vmatpush1.msra.mxu0 0.0
      %1235 = vmatprep.subr.mxu0 0.0
      %1236 = vmatpush1.msra.mxu0 0.0
      %1237 = vmatprep.subr.mxu0 0.0
      %1238 = vmatpush1.msra.mxu0 0.0
      %1239 = vmatprep.subr.mxu0 0.0
      %1240 = vmatpush1.msra.mxu0 0.0
      %1241 = vmatprep.mubr.f32.mxu0 0.0
      %1242 = vmatmul.mubr.f32.gmra.mrb[0].mxu0 %v1171
      %v1243 = vpop.f32.mrb[0].mxu0
      %v1244 = vadd.f32 0.0, %v1243
      %v1245 = vpop.f32.mrb[0].mxu0
      %1246 = vdwg.mxu0
      %v1247 = vsel %vm1170, %v444, 0
      %v1250 = vsel %vm1173, %v1244, 0
      %1252 = vmatprep.subr.mxu0 0.0
      %1253 = vmatpush1.msra.mxu0 %v1250
      %1254 = vmatprep.subr.mxu0 0.0
      %1255 = vmatpush1.msra.mxu0 0.0
      %1256 = vmatprep.subr.mxu0 0.0
      %1257 = vmatpush1.msra.mxu0 0.0
      %1258 = vmatprep.subr.mxu0 0.0
      %1259 = vmatpush1.msra.mxu0 0.0
      %1260 = vmatprep.subr.mxu0 0.0
      %1261 = vmatpush1.msra.mxu0 0.0
      %1262 = vmatprep.subr.mxu0 0.0
      %1263 = vmatpush1.msra.mxu0 0.0
      %1264 = vmatprep.subr.mxu0 0.0
      %1265 = vmatpush1.msra.mxu0 0.0
      %1266 = vmatprep.subr.mxu0 0.0
      %1267 = vmatpush1.msra.mxu0 0.0
      %1268 = vmatprep.subr.mxu0 0.0
      %1269 = vmatpush1.msra.mxu0 0.0
      %1270 = vmatprep.subr.mxu0 0.0
      %1271 = vmatpush1.msra.mxu0 0.0
      %1272 = vmatprep.subr.mxu0 0.0
      %1273 = vmatpush1.msra.mxu0 0.0
      %1274 = vmatprep.subr.mxu0 0.0
      %1275 = vmatpush1.msra.mxu0 0.0
      %1276 = vmatprep.subr.mxu0 0.0
      %1277 = vmatpush1.msra.mxu0 0.0
      %1278 = vmatprep.subr.mxu0 0.0
      %1279 = vmatpush1.msra.mxu0 0.0
      %1280 = vmatprep.subr.mxu0 0.0
      %1281 = vmatpush1.msra.mxu0 0.0
      %1282 = vmatprep.subr.mxu0 0.0
      %1283 = vmatpush1.msra.mxu0 0.0
      %1284 = vmatprep.subr.mxu0 0.0
      %1285 = vmatpush1.msra.mxu0 0.0
      %1286 = vmatprep.subr.mxu0 0.0
      %1287 = vmatpush1.msra.mxu0 0.0
      %1288 = vmatprep.subr.mxu0 0.0
      %1289 = vmatpush1.msra.mxu0 0.0
      %1290 = vmatprep.subr.mxu0 0.0
      %1291 = vmatpush1.msra.mxu0 0.0
      %1292 = vmatprep.subr.mxu0 0.0
      %1293 = vmatpush1.msra.mxu0 0.0
      %1294 = vmatprep.subr.mxu0 0.0
      %1295 = vmatpush1.msra.mxu0 0.0
      %1296 = vmatprep.subr.mxu0 0.0
      %1297 = vmatpush1.msra.mxu0 0.0
      %1298 = vmatprep.subr.mxu0 0.0
      %1299 = vmatpush1.msra.mxu0 0.0
      %1300 = vmatprep.subr.mxu0 0.0
      %1301 = vmatpush1.msra.mxu0 0.0
      %1302 = vmatprep.subr.mxu0 0.0
      %1303 = vmatpush1.msra.mxu0 0.0
      %1304 = vmatprep.subr.mxu0 0.0
      %1305 = vmatpush1.msra.mxu0 0.0
      %1306 = vmatprep.subr.mxu0 0.0
      %1307 = vmatpush1.msra.mxu0 0.0
      %1308 = vmatprep.subr.mxu0 0.0
      %1309 = vmatpush1.msra.mxu0 0.0
      %1310 = vmatprep.subr.mxu0 0.0
      %1311 = vmatpush1.msra.mxu0 0.0
      %1312 = vmatprep.subr.mxu0 0.0
      %1313 = vmatpush1.msra.mxu0 0.0
      %1314 = vmatprep.subr.mxu0 0.0
      %1315 = vmatpush1.msra.mxu0 0.0
      %1316 = vmatprep.mubr.f32.mxu0 0.0
      %1317 = vmatmul.mubr.f32.gmra.mrb[0].mxu0 %v1247
      %v1318 = vpop.f32.mrb[0].mxu0
      %v1319 = vadd.f32 0.0, %v1318
      %v1320 = vpop.f32.mrb[0].mxu0
      %1321 = vdwg.mxu0
      %v1322 = vsel %vm1170, %v1098, 0
      %1324 = vmatprep.subr.mxu0 0.0
      %1325 = vmatpush1.msra.mxu0 %v1175
      %1326 = vmatprep.subr.mxu0 0.0
      %1327 = vmatpush1.msra.mxu0 0.0
      %1328 = vmatprep.subr.mxu0 0.0
      %1329 = vmatpush1.msra.mxu0 0.0
      %1330 = vmatprep.subr.mxu0 0.0
      %1331 = vmatpush1.msra.mxu0 0.0
      %1332 = vmatprep.subr.mxu0 0.0
      %1333 = vmatpush1.msra.mxu0 0.0
      %1334 = vmatprep.subr.mxu0 0.0
      %1335 = vmatpush1.msra.mxu0 0.0
      %1336 = vmatprep.subr.mxu0 0.0
      %1337 = vmatpush1.msra.mxu0 0.0
      %1338 = vmatprep.subr.mxu0 0.0
      %1339 = vmatpush1.msra.mxu0 0.0
      %1340 = vmatprep.subr.mxu0 0.0
      %1341 = vmatpush1.msra.mxu0 0.0
      %1342 = vmatprep.subr.mxu0 0.0
      %1343 = vmatpush1.msra.mxu0 0.0
      %1344 = vmatprep.subr.mxu0 0.0
      %1345 = vmatpush1.msra.mxu0 0.0
      %1346 = vmatprep.subr.mxu0 0.0
      %1347 = vmatpush1.msra.mxu0 0.0
      %1348 = vmatprep.subr.mxu0 0.0
      %1349 = vmatpush1.msra.mxu0 0.0
      %1350 = vmatprep.subr.mxu0 0.0
      %1351 = vmatpush1.msra.mxu0 0.0
      %1352 = vmatprep.subr.mxu0 0.0
      %1353 = vmatpush1.msra.mxu0 0.0
      %1354 = vmatprep.subr.mxu0 0.0
      %1355 = vmatpush1.msra.mxu0 0.0
      %1356 = vmatprep.subr.mxu0 0.0
      %1357 = vmatpush1.msra.mxu0 0.0
      %1358 = vmatprep.subr.mxu0 0.0
      %1359 = vmatpush1.msra.mxu0 0.0
      %1360 = vmatprep.subr.mxu0 0.0
      %1361 = vmatpush1.msra.mxu0 0.0
      %1362 = vmatprep.subr.mxu0 0.0
      %1363 = vmatpush1.msra.mxu0 0.0
      %1364 = vmatprep.subr.mxu0 0.0
      %1365 = vmatpush1.msra.mxu0 0.0
      %1366 = vmatprep.subr.mxu0 0.0
      %1367 = vmatpush1.msra.mxu0 0.0
      %1368 = vmatprep.subr.mxu0 0.0
      %1369 = vmatpush1.msra.mxu0 0.0
      %1370 = vmatprep.subr.mxu0 0.0
      %1371 = vmatpush1.msra.mxu0 0.0
      %1372 = vmatprep.subr.mxu0 0.0
      %1373 = vmatpush1.msra.mxu0 0.0
      %1374 = vmatprep.subr.mxu0 0.0
      %1375 = vmatpush1.msra.mxu0 0.0
      %1376 = vmatprep.subr.mxu0 0.0
      %1377 = vmatpush1.msra.mxu0 0.0
      %1378 = vmatprep.subr.mxu0 0.0
      %1379 = vmatpush1.msra.mxu0 0.0
      %1380 = vmatprep.subr.mxu0 0.0
      %1381 = vmatpush1.msra.mxu0 0.0
      %1382 = vmatprep.subr.mxu0 0.0
      %1383 = vmatpush1.msra.mxu0 0.0
      %1384 = vmatprep.subr.mxu0 0.0
      %1385 = vmatpush1.msra.mxu0 0.0
      %1386 = vmatprep.subr.mxu0 0.0
      %1387 = vmatpush1.msra.mxu0 0.0
      %1388 = vmatprep.mubr.f32.mxu0 0.0
      %1389 = vmatmul.mubr.f32.gmra.mrb[0].mxu0 %v1322
      %v1390 = vpop.f32.mrb[0].mxu0
      %v1391 = vadd.f32 0.0, %v1390
      %v1392 = vpop.f32.mrb[0].mxu0
      %1393 = vdwg.mxu0
      %v1395 = vsel %vm1173, %v1391, 0
      %1397 = vmatprep.subr.mxu0 0.0
      %1398 = vmatpush1.msra.mxu0 %v1395
      %1399 = vmatprep.subr.mxu0 0.0
      %1400 = vmatpush1.msra.mxu0 0.0
      %1401 = vmatprep.subr.mxu0 0.0
      %1402 = vmatpush1.msra.mxu0 0.0
      %1403 = vmatprep.subr.mxu0 0.0
      %1404 = vmatpush1.msra.mxu0 0.0
      %1405 = vmatprep.subr.mxu0 0.0
      %1406 = vmatpush1.msra.mxu0 0.0
      %1407 = vmatprep.subr.mxu0 0.0
      %1408 = vmatpush1.msra.mxu0 0.0
      %1409 = vmatprep.subr.mxu0 0.0
      %1410 = vmatpush1.msra.mxu0 0.0
      %1411 = vmatprep.subr.mxu0 0.0
      %1412 = vmatpush1.msra.mxu0 0.0
      %1413 = vmatprep.subr.mxu0 0.0
      %1414 = vmatpush1.msra.mxu0 0.0
      %1415 = vmatprep.subr.mxu0 0.0
      %1416 = vmatpush1.msra.mxu0 0.0
      %1417 = vmatprep.subr.mxu0 0.0
      %1418 = vmatpush1.msra.mxu0 0.0
      %1419 = vmatprep.subr.mxu0 0.0
      %1420 = vmatpush1.msra.mxu0 0.0
      %1421 = vmatprep.subr.mxu0 0.0
      %1422 = vmatpush1.msra.mxu0 0.0
      %1423 = vmatprep.subr.mxu0 0.0
      %1424 = vmatpush1.msra.mxu0 0.0
      %1425 = vmatprep.subr.mxu0 0.0
      %1426 = vmatpush1.msra.mxu0 0.0
      %1427 = vmatprep.subr.mxu0 0.0
      %1428 = vmatpush1.msra.mxu0 0.0
      %1429 = vmatprep.subr.mxu0 0.0
      %1430 = vmatpush1.msra.mxu0 0.0
      %1431 = vmatprep.subr.mxu0 0.0
      %1432 = vmatpush1.msra.mxu0 0.0
      %1433 = vmatprep.subr.mxu0 0.0
      %1434 = vmatpush1.msra.mxu0 0.0
      %1435 = vmatprep.subr.mxu0 0.0
      %1436 = vmatpush1.msra.mxu0 0.0
      %1437 = vmatprep.subr.mxu0 0.0
      %1438 = vmatpush1.msra.mxu0 0.0
      %1439 = vmatprep.subr.mxu0 0.0
      %1440 = vmatpush1.msra.mxu0 0.0
      %1441 = vmatprep.subr.mxu0 0.0
      %1442 = vmatpush1.msra.mxu0 0.0
      %1443 = vmatprep.subr.mxu0 0.0
      %1444 = vmatpush1.msra.mxu0 0.0
      %1445 = vmatprep.subr.mxu0 0.0
      %1446 = vmatpush1.msra.mxu0 0.0
      %1447 = vmatprep.subr.mxu0 0.0
      %1448 = vmatpush1.msra.mxu0 0.0
      %1449 = vmatprep.subr.mxu0 0.0
      %1450 = vmatpush1.msra.mxu0 0.0
      %1451 = vmatprep.subr.mxu0 0.0
      %1452 = vmatpush1.msra.mxu0 0.0
      %1453 = vmatprep.subr.mxu0 0.0
      %1454 = vmatpush1.msra.mxu0 0.0
      %1455 = vmatprep.subr.mxu0 0.0
      %1456 = vmatpush1.msra.mxu0 0.0
      %1457 = vmatprep.subr.mxu0 0.0
      %1458 = vmatpush1.msra.mxu0 0.0
      %1459 = vmatprep.subr.mxu0 0.0
      %1460 = vmatpush1.msra.mxu0 0.0
      %1461 = vmatprep.mubr.f32.mxu0 0.0
      %1462 = vmatmul.mubr.f32.gmra.mrb[0].mxu0 %v1247
      %v1463 = vpop.f32.mrb[0].mxu0
      %v1464 = vadd.f32 0.0, %v1463
      %v1465 = vpop.f32.mrb[0].mxu0
      %1466 = vdwg.mxu0
      %1468 = vrot.lane.b32.xlu0 %v1319, 1
      %v1469 = vpop.permute.xlu0 %1468
      %v1471 = vsub.f32 %v1319, %v1469
      %1473 = vrot.lane.b32.xlu0 %v1464, 1
      %v1474 = vpop.permute.xlu0 %1473
      %v1476 = vmul.f32 %v1464, %v1474
      %v1477 = vand.u32 2147483647, %v1471
      %v1478 = vmul.f32 %v1477, %v1476
      %1480 = vrot.lane.b32.xlu0 %v1478, 127
      %v1481 = vpop.permute.xlu0 %1480
      %vm1483 = vcmask 1024
      %v1484 = vsel %vm1483, %v1481, 0.0
      %1485 = vadd.xlane.f32.xlu0 %v1484
      %v1486 = vpop.xlane.xlu0 %1485
      %v1487 = vrot.slane %v1486, 4
      %v1488 = vadd.f32 %v1486, %v1487
      %v1489 = vrot.slane %v1488, 2
      %v1490 = vadd.f32 %v1488, %v1489
      %v1491 = vrot.slane %v1490, 1
      %v1492 = vadd.f32 %v1490, %v1491
      %s1493 = vtos %v1492
      %v1494 = vrot.slane %v1319, 7
      %v1496 = vsub.f32 %v1319, %v1494
      %v1497 = vrot.slane %v1464, 7
      %v1499 = vmul.f32 %v1464, %v1497
      %v1500 = vand.u32 2147483647, %v1496
      %v1501 = vmul.f32 %v1500, %v1499
      %v1503 = vrot.slane %v1501, 1
      %vm1505 = vcmask 8192
      %v1506 = vsel %vm1505, %v1503, 0.0
      %1507 = vadd.xlane.f32.xlu0 %v1506
      %v1508 = vpop.xlane.xlu0 %1507
      %v1509 = vrot.slane %v1508, 4
      %v1510 = vadd.f32 %v1508, %v1509
      %v1511 = vrot.slane %v1510, 2
      %v1512 = vadd.f32 %v1510, %v1511
      %v1513 = vrot.slane %v1512, 1
      %v1514 = vadd.f32 %v1512, %v1513
      %s1515 = vtos %v1514
      %s1516 = sadd.f32 %s1493, %s1515
      %vm1517 = vcmask 9216
      %v1518 = vsel %vm1517, %v1464, 0.0
      %1519 = vadd.xlane.f32.xlu0 %v1518
      %v1520 = vpop.xlane.xlu0 %1519
      %v1521 = vrot.slane %v1520, 4
      %v1522 = vadd.f32 %v1520, %v1521
      %v1523 = vrot.slane %v1522, 2
      %v1524 = vadd.f32 %v1522, %v1523
      %v1525 = vrot.slane %v1524, 1
      %v1526 = vadd.f32 %v1524, %v1525
      %s1527 = vtos %v1526
      %vm1528 = vcmp.eq.s32.totalorder %v323, 3
      %v1529 = vstv %s1516
      %v1530 = vsel %vm1528, %v1529, 0.0
      %v1531 = vadd.f32 %v1169, %v1530
      %vm1532 = vcmp.eq.s32.totalorder %v323, 7
      %v1533 = vstv %s1527
      %v1534 = vsel %vm1532, %v1533, 0.0
      %v1535 = vadd.f32 %v1531, %v1534
      %vm1536 = vcmask 57344
      %1537 = vst.msk [vmem:[%s233] sm:$0x1] %vm1536, %v1535
      %p1538 = scmp.lt.s32.totalorder %s15, 1
      %s1539 = scalar_select %p1538, %s15, 1
      %s1540 = scalar_lea.vmem %s4, %s1539
      // Predicated region
      $region37: #{trimmed_procrustes_loss.3} parent=35 // pred_check
        %p1541 = pneg %p132
      $region38: #{trimmed_procrustes_loss.3} parent=35 // pred_check_branch
        %1543 = sbr.rel (%p1541) target = $region40
      $region39: #{trimmed_procrustes_loss.3} parent=35 // pred_region
        _
      $region40: #{trimmed_procrustes_loss.3} parent=35 // pred_fallthru
        _
    $region36: #{trimmed_procrustes_loss.3} parent=5 // pred_fallthru
      _
    %p1544 = scmp.le.s32.totalorder 2, %s10
    // Predicated region
    $region41: #{trimmed_procrustes_loss.3} parent=5 // pred_check
      %p1545 = pneg %p1544
    $region42: #{trimmed_procrustes_loss.3} parent=5 // pred_check_branch
      %1547 = sbr.rel (%p1545) target = $region44
    $region43: #{trimmed_procrustes_loss.3} parent=5 // pred_region
      %s1548 = ssub.s32 %s10, 2
      // Predicated region
      $region45: #{trimmed_procrustes_loss.3} parent=43 // pred_check
        %p1549 = pneg %p138
      $region46: #{trimmed_procrustes_loss.3} parent=43 // pred_check_branch
        %1551 = sbr.rel (%p1549) target = $region48
      $region47: #{trimmed_procrustes_loss.3} parent=43 // pred_region
        %p1552 = scmp.lt.s32.totalorder %s16, 1
        %s1553 = scalar_select %p1552, %s16, 1
        %s1554 = scalar_lea.vmem %s4, %s1553
      $region48: #{trimmed_procrustes_loss.3} parent=43 // pred_fallthru
        _
    $region44: #{trimmed_procrustes_loss.3} parent=5 // pred_fallthru
      _
  $region6: #{trimmed_procrustes_loss.3} parent=0 // loop_footer
    %s14 = sadd.s32 1, %s10
  $region7: #{trimmed_procrustes_loss.3} parent=0 // loop_footer_branch
    %9 = sbr.rel target = $region3
  $region8: #{trimmed_procrustes_loss.3} parent=0 // loop_exit
    _

</llo_original>
